<compile_context>
chip_gen: v7x
topology: tpu7x:2x2x1
jax: 0.10.0
libtpu: 0.0.40
codegen_flags: <defaults>
</compile_context>

<pallas_src>
import jax
import jax.numpy as jnp
from jax import lax
from jax.experimental import pallas as pl
from jax.experimental.pallas import tpu as pltpu

# ---- problem sizes (Bottleneck(in_planes=16, planes=16, share_planes=8,
#      nsample=8); expansion = 1 so in_planes == planes) ----------------------
N_POINTS = 32
C = 16                   # in_planes == planes == mid_planes == out_planes
SHARE = 8                # share_planes
NSAMPLE = 8              # nsample
SOUT = C // SHARE        # out_planes // share_planes == 2
BIG = 1e30
LANES = 128
PTS_PER_ROW = LANES // C                 # 8 points per 128-lane output row
OUT_ROWS = (N_POINTS * C) // LANES       # 4

# ---- packed input-slab row offsets (single (R_TOT, 128) f32 slab) -----------
R_X = 0                     # rows [ 0,32) : x | p | bid              cols 0:20
R_PT = R_X + N_POINTS       # rows [32,36) : [p ; bid]^T              cols 0:32
R_WA = R_PT + 4             # rows [36,52) : Wq|Wk|Wv|W1'|W3'|Ww1'    cols 0:82
R_WB = R_WA + C             # rows [52,55) : Wp2|Wp1'|Ww2(pad)        cols 0:21
R_VEC = R_WB + 3            # rows [55,66) : 11 bias / affine rows    cols 0:48
R_TOT = 72                  # padded to a multiple of 8 sublanes


def _tree(op, xs):
    """Depth-log2 pairwise reduction of a python list of arrays."""
    xs = list(xs)
    while len(xs) > 1:
        nxt = [op(xs[i], xs[i + 1]) for i in range(0, len(xs) - 1, 2)]
        if len(xs) % 2:
            nxt.append(xs[-1])
        xs = nxt
    return xs[0]


# -----------------------------------------------------------------------------
# Fused kernel: whole Bottleneck forward in one invocation.
# -----------------------------------------------------------------------------
def bottleneck_kernel(slab_ref, out_ref):
    n = N_POINTS
    f32, bf16 = jnp.float32, jnp.bfloat16

    # ---- unpack the single packed input slab (static VMEM slices) -----------
    x     = slab_ref[R_X:R_X + n, 0:C]                    # (n, C) features / identity
    p     = slab_ref[R_X:R_X + n, C:C + 3]                # (n, 3) coordinates
    bid   = slab_ref[R_X:R_X + n, C + 3:C + 4]            # (n, 1) batch id (float)
    p_t   = slab_ref[R_PT:R_PT + 3, 0:n]                  # (3, n)
    bid_t = slab_ref[R_PT + 3:R_PT + 4, 0:n]              # (1, n)

    w_qkv = slab_ref[R_WA:R_WA + C, 0:3 * C]              # (C, 3C)  [Wq|Wk|Wv]
    w1    = slab_ref[R_WA:R_WA + C, 3 * C:4 * C]          # (C, C)   W1 * bn1_scale
    w3    = slab_ref[R_WA:R_WA + C, 4 * C:5 * C]          # (C, C)   W3 * bn3_scale
    ww1   = slab_ref[R_WA:R_WA + C, 5 * C:5 * C + SOUT]   # (C, SOUT) Ww1 * lnw2_scale
    wp2   = slab_ref[R_WB:R_WB + 3, 0:C]                  # (3, C)
    wp1   = slab_ref[R_WB:R_WB + 3, C:C + 3]              # (3, 3)   Wp1 * lnp_scale
    ww2   = slab_ref[R_WB:R_WB + 2, C + 3:C + 3 + SOUT]   # (SOUT, SOUT)

    bn1_b  = slab_ref[R_VEC + 0:R_VEC + 1, 0:C]
    bqkv   = slab_ref[R_VEC + 1:R_VEC + 2, 0:3 * C]
    bp1    = slab_ref[R_VEC + 2:R_VEC + 3, 0:3]
    bp2    = slab_ref[R_VEC + 3:R_VEC + 4, 0:C]
    lnw1_s = slab_ref[R_VEC + 4:R_VEC + 5, 0:C]
    lnw1_b = slab_ref[R_VEC + 5:R_VEC + 6, 0:C]
    bw1    = slab_ref[R_VEC + 6:R_VEC + 7, 0:SOUT]
    bw2    = slab_ref[R_VEC + 7:R_VEC + 8, 0:SOUT]
    bn2_s  = slab_ref[R_VEC + 8:R_VEC + 9, 0:C]
    bn2_b  = slab_ref[R_VEC + 9:R_VEC + 10, 0:C]
    bn3_b  = slab_ref[R_VEC + 10:R_VEC + 11, 0:C]

    # ---- linear1 (bn1 scale folded) -> relu ; fused (C,3C) q|k|v projection --
    h = jnp.maximum(jnp.dot(x, w1, preferred_element_type=f32) + bn1_b, 0.0)
    qkv = jnp.dot(h, w_qkv, preferred_element_type=f32) + bqkv        # (n, 3C)
    q = qkv[:, 0:C]

    # ---- batch-masked pairwise squared distances ------------------------------
    sq_q = jnp.sum(p * p, axis=1, keepdims=True)                      # (n, 1)
    sq_t = jnp.sum(p_t * p_t, axis=0, keepdims=True)                  # (1, n)
    cross = jnp.dot(p, p_t, preferred_element_type=f32)               # (n, n)
    # +1.0 keeps every key a normal float (no denormal flush hazards); it does
    # not change the ordering used for neighbour selection.
    dist = jnp.maximum(sq_q + sq_t - 2.0 * cross, 0.0) + 1.0
    dist = jnp.where(bid != bid_t, BIG, dist)

    # ---- KNN selection: ONE lane reduction per step ---------------------------
    # Pack the column index into the low log2(n) bits of the (monotone) int32
    # bit pattern of the non-negative distance.  A single min then yields a
    # unique argmin; `key == kmin` is an exact one-hot row.
    col = lax.broadcasted_iota(jnp.int32, (n, n), 1)
    keyb = jnp.bitwise_or(
        jnp.bitwise_and(pltpu.bitcast(dist, jnp.int32), jnp.int32(~(n - 1))), col)
    key = pltpu.bitcast(keyb, f32)
    oh_rows = []
    for _ in range(NSAMPLE):
        kmin = jnp.min(key, axis=1, keepdims=True)
        sel = key == kmin                       # exactly one True per row
        oh_rows.append(sel.astype(f32))
        key = jnp.where(sel, 3.0e38, key)

    # ---- fused gather + q/p subtraction on the MXU (bf16 operands) ------------
    #   [ oh | I_tiled ] @ [ k v p ; -q 0 -p ]  =  [ k_g - q | v_g | p_g - p ]
    oh = jnp.concatenate(oh_rows, axis=0)                             # (S*n, n)
    rr_i = lax.broadcasted_iota(jnp.int32, (NSAMPLE * n, n), 0)
    cc_i = lax.broadcasted_iota(jnp.int32, (NSAMPLE * n, n), 1)
    eye_t = (cc_i == (rr_i & (n - 1))).astype(f32)                    # tiled identity
    ohi = jnp.concatenate([oh, eye_t], axis=1).astype(bf16)           # (S*n, 2n) bf16

    kv = qkv[:, C:3 * C]                                              # contiguous [k|v]
    rhs = jnp.concatenate(
        [jnp.concatenate([kv, p], axis=1),
         jnp.concatenate([-q, jnp.zeros((n, C), f32), -p], axis=1)],
        axis=0).astype(bf16)                                          # (2n, 2C+3) bf16
    g = jnp.dot(ohi, rhs, preferred_element_type=f32)                 # (S*n, 2C+3) f32

    # ---- linear_p on relative coords (LN scale folded into Wp1 / bp1) ---------
    t = jnp.maximum(jnp.dot(g[:, 2 * C:2 * C + 3], wp1,
                            preferred_element_type=f32) + bp1, 0.0)
    p_r = jnp.dot(t, wp2, preferred_element_type=f32) + bp2           # (S*n, C)

    vp = g[:, C:2 * C] + p_r                                          # v_g + p_r
    r = g[:, 0:C] + p_r                                               # k_g - q + p_r
    # (g / p_r are dead here -> bounded live slab count in the (S*n, .) tail)

    # ---- linear_w (second LN folded into Ww1 / bw1) ---------------------------
    u = jnp.maximum(r * lnw1_s + lnw1_b, 0.0)
    u = jnp.maximum(jnp.dot(u, ww1, preferred_element_type=f32) + bw1, 0.0)
    logit = jnp.dot(u, ww2, preferred_element_type=f32) + bw2         # (S*n, SOUT)

    # ---- softmax over the neighbour axis (tree max / tree sum) ----------------
    ls = [logit[s * n:(s + 1) * n, :] for s in range(NSAMPLE)]
    m = _tree(jnp.maximum, ls)
    es = [jnp.exp(l - m) for l in ls]
    inv = pl.reciprocal(_tree(jnp.add, es), approx=True)

    # ---- grouped weighted sum: SHARE-fold broadcast as a 0/1 expansion matmul --
    er = lax.broadcasted_iota(jnp.int32, (SOUT, C), 0)
    ec = lax.broadcasted_iota(jnp.int32, (SOUT, C), 1)
    expand = ((ec & (SOUT - 1)) == er).astype(bf16)                   # (SOUT, C)
    terms = [vp[s * n:(s + 1) * n, :] *
             jnp.dot((es[s] * inv).astype(bf16), expand,
                     preferred_element_type=f32)
             for s in range(NSAMPLE)]
    attn = _tree(jnp.add, terms)                                      # (n, C)

    # ---- bn2 -> relu -> linear3 (bn3 folded) -> +identity -> relu --------------
    x2 = jnp.maximum(attn * bn2_s + bn2_b, 0.0)
    y = jnp.maximum(jnp.dot(x2, w3, preferred_element_type=f32) + bn3_b + x, 0.0)

    # ---- lane-dense store: pack 8 points per 128-lane output row ---------------
    out_rows = []
    for rrow in range(OUT_ROWS):
        out_rows.append(jnp.concatenate(
            [y[PTS_PER_ROW * rrow + j:PTS_PER_ROW * rrow + j + 1, :]
             for j in range(PTS_PER_ROW)], axis=1))
    out_ref[...] = jnp.concatenate(out_rows, axis=0)                  # (4, 128)


# -----------------------------------------------------------------------------
# wrapper (glue): pack everything into ONE lane-dense slab, one grid-less call
# -----------------------------------------------------------------------------
def pack_inputs(p, x, o, P):
    n = x.shape[0]
    bid = jnp.searchsorted(o, jnp.arange(n, dtype=o.dtype),
                           side="right").astype(jnp.float32)[:, None]     # (n, 1)
    slab = jnp.zeros((R_TOT, LANES), jnp.float32)
    slab = slab.at[R_X:R_X + n, 0:C].set(x)
    slab = slab.at[R_X:R_X + n, C:C + 3].set(p)
    slab = slab.at[R_X:R_X + n, C + 3:C + 4].set(bid)
    slab = slab.at[R_PT:R_PT + 4, 0:n].set(jnp.concatenate([p, bid], axis=1).T)

    wa = jnp.concatenate([P["Wq"], P["Wk"], P["Wv"],
                          P["W1"] * P["bn1_s"], P["W3"] * P["bn3_s"],
                          P["Ww1"] * P["lnw2_s"]], axis=1)                # (C, 82)
    slab = slab.at[R_WA:R_WA + C, 0:wa.shape[1]].set(wa)

    ww2p = jnp.concatenate([P["Ww2"], jnp.zeros((1, SOUT), jnp.float32)], axis=0)
    wb = jnp.concatenate([P["Wp2"], P["Wp1"] * P["lnp_s"], ww2p], axis=1)  # (3, 21)
    slab = slab.at[R_WB:R_WB + 3, 0:wb.shape[1]].set(wb)

    vec_rows = [
        P["bn1_b"],
        jnp.concatenate([P["bq"], P["bk"], P["bv"]], axis=1),
        P["bp1"] * P["lnp_s"] + P["lnp_b"],
        P["bp2"],
        P["lnw1_s"], P["lnw1_b"],
        P["bw1"] * P["lnw2_s"] + P["lnw2_b"],
        P["bw2"],
        P["bn2_s"], P["bn2_b"], P["bn3_b"],
    ]
    for i, v in enumerate(vec_rows):
        v = jnp.ravel(v)
        slab = slab.at[R_VEC + i, 0:v.shape[0]].set(v)
    return slab


def bottleneck_forward(p, x, o, P):
    """Bottleneck.forward([p, x, o]) -> [p, x_out, o]."""
    n, c = x.shape
    slab = pack_inputs(p, x, o, P)
    out_slab = pl.pallas_call(
        bottleneck_kernel,
        in_specs=[pl.BlockSpec((R_TOT, LANES), lambda: (0, 0))],
        out_specs=pl.BlockSpec((OUT_ROWS, LANES), lambda: (0, 0)),
        out_shape=jax.ShapeDtypeStruct((OUT_ROWS, LANES), jnp.float32),
    )(slab)
    return [p, out_slab.reshape(n, c), o]


# -----------------------------------------------------------------------------
# pure-JAX f32 reference (same eval-mode BN semantics) for validation
# -----------------------------------------------------------------------------
def reference_forward(p, x, o, P):
    n = x.shape[0]
    bid = jnp.searchsorted(o, jnp.arange(n, dtype=o.dtype), side="right")
    h = jnp.maximum((x @ P["W1"]) * P["bn1_s"] + P["bn1_b"], 0.0)
    q = h @ P["Wq"] + P["bq"]
    k = h @ P["Wk"] + P["bk"]
    v = h @ P["Wv"] + P["bv"]
    sq = jnp.sum(p * p, axis=1)
    d = sq[:, None] + sq[None, :] - 2.0 * (p @ p.T)
    d = jnp.where(bid[:, None] != bid[None, :], BIG, d)
    idx = lax.top_k(-d, NSAMPLE)[1]                     # (n, nsample)
    p_rel = p[idx] - p[:, None, :]
    k_g, v_g = k[idx], v[idx]
    t = jnp.maximum((p_rel @ P["Wp1"] + P["bp1"]) * P["lnp_s"] + P["lnp_b"], 0.0)
    p_r = t @ P["Wp2"] + P["bp2"]
    r = k_g - q[:, None, :] + p_r
    u = jnp.maximum(r * P["lnw1_s"] + P["lnw1_b"], 0.0)
    u = u @ P["Ww1"] + P["bw1"]
    u = jnp.maximum(u * P["lnw2_s"] + P["lnw2_b"], 0.0)
    w = jax.nn.softmax(u @ P["Ww2"] + P["bw2"], axis=1)
    vp = (v_g + p_r).reshape(n, NSAMPLE, SHARE, SOUT)
    attn = jnp.einsum("ntsi,nti->nsi", vp, w).reshape(n, C)
    x2 = jnp.maximum(attn * P["bn2_s"] + P["bn2_b"], 0.0)
    x3 = (x2 @ P["W3"]) * P["bn3_s"] + P["bn3_b"]
    return jnp.maximum(x3 + x, 0.0)


# -----------------------------------------------------------------------------
# deterministic parameter construction
# -----------------------------------------------------------------------------
def make_params(key):
    keys = iter(jax.random.split(key, 40))

    def lin(k, shape):
        return (jax.random.normal(k, shape) / jnp.sqrt(shape[0])).astype(jnp.float32)

    def vec(k, c):
        return (0.1 * jax.random.normal(k, (1, c))).astype(jnp.float32)

    def bn(k, c):
        k1, k2, k3, k4 = jax.random.split(k, 4)
        gamma = 1.0 + 0.1 * jax.random.normal(k1, (c,))
        beta = 0.1 * jax.random.normal(k2, (c,))
        mean = 0.1 * jax.random.normal(k3, (c,))
        var = jax.random.uniform(k4, (c,), minval=0.5, maxval=1.5)
        scale = gamma / jnp.sqrt(var + 1e-5)
        shift = beta - mean * scale
        return (scale.reshape(1, c).astype(jnp.float32),
                shift.reshape(1, c).astype(jnp.float32))

    P = {}
    P["W1"] = lin(next(keys), (C, C))                       # linear1 (no bias)
    P["bn1_s"], P["bn1_b"] = bn(next(keys), C)
    P["Wq"] = lin(next(keys), (C, C)); P["bq"] = vec(next(keys), C)
    P["Wk"] = lin(next(keys), (C, C)); P["bk"] = vec(next(keys), C)
    P["Wv"] = lin(next(keys), (C, C)); P["bv"] = vec(next(keys), C)
    P["Wp1"] = lin(next(keys), (3, 3)); P["bp1"] = vec(next(keys), 3)
    P["lnp_s"], P["lnp_b"] = bn(next(keys), 3)
    P["Wp2"] = lin(next(keys), (3, C)); P["bp2"] = vec(next(keys), C)
    P["lnw1_s"], P["lnw1_b"] = bn(next(keys), C)
    P["Ww1"] = lin(next(keys), (C, SOUT)); P["bw1"] = vec(next(keys), SOUT)
    P["lnw2_s"], P["lnw2_b"] = bn(next(keys), SOUT)
    P["Ww2"] = lin(next(keys), (SOUT, SOUT)); P["bw2"] = vec(next(keys), SOUT)
    P["bn2_s"], P["bn2_b"] = bn(next(keys), C)
    P["W3"] = lin(next(keys), (C, C))                       # linear3 (no bias)
    P["bn3_s"], P["bn3_b"] = bn(next(keys), C)
    return P


if __name__ == "__main__":
    key = jax.random.PRNGKey(0)
    kp, kx, kw = jax.random.split(key, 3)
    p = jax.random.uniform(kp, (N_POINTS, 3), jnp.float32)      # coordinates
    x = jax.random.normal(kx, (N_POINTS, C), jnp.float32)       # features
    o = jnp.array([N_POINTS // 2, N_POINTS], dtype=jnp.int32)   # batch offsets
    P = make_params(kw)

    p_out, x_out, o_out = bottleneck_forward(p, x, o, P)
    x_out = jax.block_until_ready(x_out)

    x_ref = reference_forward(p, x, o, P)
    max_err = float(jnp.max(jnp.abs(x_out - x_ref)))
    # Tolerance: bf16 operands in the gather / expansion matmuls (~0.2% single
    # rounding of k,v,p,q and of the softmax weights) plus the approx EUP
    # reciprocal, compared against a pure-f32 reference.
    assert jnp.allclose(x_out, x_ref, atol=3e-2, rtol=3e-2), max_err

    print("KERNEL_OK")
</pallas_src>

<mosaic_0001>
module attributes {stable_mosaic.version = 11 : i64} {
  func.func @bottleneck_kernel(%arg0: memref<72x128xf32, #tpu.memory_space<vmem>>, %arg1: memref<4x128xf32, #tpu.memory_space<vmem>>) attributes {dimension_semantics = [], scalar_prefetch = 0 : i64, scratch_operands = 0 : i64, tpu.core_type = #tpu.core_type<tc>} {
    %c0 = arith.constant 0 : index
    %c0_0 = arith.constant 0 : index
    %0 = vector.load %arg0[%c0, %c0_0] : memref<72x128xf32, #tpu.memory_space<vmem>>, vector<32x16xf32>
    %c0_1 = arith.constant 0 : index
    %c16 = arith.constant 16 : index
    %1 = vector.load %arg0[%c0_1, %c16] : memref<72x128xf32, #tpu.memory_space<vmem>>, vector<32x3xf32>
    %c0_2 = arith.constant 0 : index
    %c19 = arith.constant 19 : index
    %2 = vector.load %arg0[%c0_2, %c19] : memref<72x128xf32, #tpu.memory_space<vmem>>, vector<32x1xf32>
    %c32 = arith.constant 32 : index
    %c0_3 = arith.constant 0 : index
    %3 = vector.load %arg0[%c32, %c0_3] : memref<72x128xf32, #tpu.memory_space<vmem>>, vector<3x32xf32>
    %c35 = arith.constant 35 : index
    %c0_4 = arith.constant 0 : index
    %4 = vector.load %arg0[%c35, %c0_4] : memref<72x128xf32, #tpu.memory_space<vmem>>, vector<1x32xf32>
    %c36 = arith.constant 36 : index
    %c0_5 = arith.constant 0 : index
    %5 = vector.load %arg0[%c36, %c0_5] : memref<72x128xf32, #tpu.memory_space<vmem>>, vector<16x48xf32>
    %c36_6 = arith.constant 36 : index
    %c48 = arith.constant 48 : index
    %6 = vector.load %arg0[%c36_6, %c48] : memref<72x128xf32, #tpu.memory_space<vmem>>, vector<16x16xf32>
    %c36_7 = arith.constant 36 : index
    %c64 = arith.constant 64 : index
    %7 = vector.load %arg0[%c36_7, %c64] : memref<72x128xf32, #tpu.memory_space<vmem>>, vector<16x16xf32>
    %c36_8 = arith.constant 36 : index
    %c80 = arith.constant 80 : index
    %8 = vector.load %arg0[%c36_8, %c80] : memref<72x128xf32, #tpu.memory_space<vmem>>, vector<16x2xf32>
    %c52 = arith.constant 52 : index
    %c0_9 = arith.constant 0 : index
    %9 = vector.load %arg0[%c52, %c0_9] : memref<72x128xf32, #tpu.memory_space<vmem>>, vector<3x16xf32>
    %c52_10 = arith.constant 52 : index
    %c16_11 = arith.constant 16 : index
    %10 = vector.load %arg0[%c52_10, %c16_11] : memref<72x128xf32, #tpu.memory_space<vmem>>, vector<3x3xf32>
    %c52_12 = arith.constant 52 : index
    %c19_13 = arith.constant 19 : index
    %11 = vector.load %arg0[%c52_12, %c19_13] : memref<72x128xf32, #tpu.memory_space<vmem>>, vector<2x2xf32>
    %c55 = arith.constant 55 : index
    %c0_14 = arith.constant 0 : index
    %12 = vector.load %arg0[%c55, %c0_14] : memref<72x128xf32, #tpu.memory_space<vmem>>, vector<1x16xf32>
    %c56 = arith.constant 56 : index
    %c0_15 = arith.constant 0 : index
    %13 = vector.load %arg0[%c56, %c0_15] : memref<72x128xf32, #tpu.memory_space<vmem>>, vector<1x48xf32>
    %c57 = arith.constant 57 : index
    %c0_16 = arith.constant 0 : index
    %14 = vector.load %arg0[%c57, %c0_16] : memref<72x128xf32, #tpu.memory_space<vmem>>, vector<1x3xf32>
    %c58 = arith.constant 58 : index
    %c0_17 = arith.constant 0 : index
    %15 = vector.load %arg0[%c58, %c0_17] : memref<72x128xf32, #tpu.memory_space<vmem>>, vector<1x16xf32>
    %c59 = arith.constant 59 : index
    %c0_18 = arith.constant 0 : index
    %16 = vector.load %arg0[%c59, %c0_18] : memref<72x128xf32, #tpu.memory_space<vmem>>, vector<1x16xf32>
    %c60 = arith.constant 60 : index
    %c0_19 = arith.constant 0 : index
    %17 = vector.load %arg0[%c60, %c0_19] : memref<72x128xf32, #tpu.memory_space<vmem>>, vector<1x16xf32>
    %c61 = arith.constant 61 : index
    %c0_20 = arith.constant 0 : index
    %18 = vector.load %arg0[%c61, %c0_20] : memref<72x128xf32, #tpu.memory_space<vmem>>, vector<1x2xf32>
    %c62 = arith.constant 62 : index
    %c0_21 = arith.constant 0 : index
    %19 = vector.load %arg0[%c62, %c0_21] : memref<72x128xf32, #tpu.memory_space<vmem>>, vector<1x2xf32>
    %c63 = arith.constant 63 : index
    %c0_22 = arith.constant 0 : index
    %20 = vector.load %arg0[%c63, %c0_22] : memref<72x128xf32, #tpu.memory_space<vmem>>, vector<1x16xf32>
    %c64_23 = arith.constant 64 : index
    %c0_24 = arith.constant 0 : index
    %21 = vector.load %arg0[%c64_23, %c0_24] : memref<72x128xf32, #tpu.memory_space<vmem>>, vector<1x16xf32>
    %c65 = arith.constant 65 : index
    %c0_25 = arith.constant 0 : index
    %22 = vector.load %arg0[%c65, %c0_25] : memref<72x128xf32, #tpu.memory_space<vmem>>, vector<1x16xf32>
    %cst = arith.constant dense<0.000000e+00> : vector<32x16xf32>
    %23 = tpu.matmul %0, %6, %cst {dimension_numbers = #tpu.dot_dimension_numbers<[1], [0], [0], [1], [0, 0, 1, 1], [], []>} : vector<32x16xf32>, vector<16x16xf32>, vector<32x16xf32> -> vector<32x16xf32>
    %24 = vector.broadcast %12 : vector<1x16xf32> to vector<32x16xf32>
    %25 = arith.addf %23, %24 : vector<32x16xf32>
    %cst_26 = arith.constant 0.000000e+00 : f32
    %26 = vector.broadcast %cst_26 : f32 to vector<32x16xf32>
    %27 = arith.maximumf %25, %26 : vector<32x16xf32>
    %cst_27 = arith.constant dense<0.000000e+00> : vector<32x48xf32>
    %28 = tpu.matmul %27, %5, %cst_27 {dimension_numbers = #tpu.dot_dimension_numbers<[1], [0], [0], [1], [0, 0, 1, 1], [], []>} : vector<32x16xf32>, vector<16x48xf32>, vector<32x48xf32> -> vector<32x48xf32>
    %29 = vector.broadcast %13 : vector<1x48xf32> to vector<32x48xf32>
    %30 = arith.addf %28, %29 : vector<32x48xf32>
    %31 = vector.extract_strided_slice %30 {offsets = [0, 0], sizes = [32, 16], strides = [1, 1]} : vector<32x48xf32> to vector<32x16xf32>
    %32 = arith.mulf %1, %1 : vector<32x3xf32>
    %cst_28 = arith.constant dense<0.000000e+00> : vector<32xf32>
    %33 = vector.multi_reduction <add>, %32, %cst_28 [1] : vector<32x3xf32> to vector<32xf32>
    %34 = vector.shape_cast %33 : vector<32xf32> to vector<32x1xf32>
    %35 = arith.mulf %3, %3 : vector<3x32xf32>
    %cst_29 = arith.constant dense<0.000000e+00> : vector<32xf32>
    %36 = vector.multi_reduction <add>, %35, %cst_29 [0] : vector<3x32xf32> to vector<32xf32>
    %37 = vector.shape_cast %36 : vector<32xf32> to vector<1x32xf32>
    %cst_30 = arith.constant dense<0.000000e+00> : vector<32x32xf32>
    %38 = tpu.matmul %1, %3, %cst_30 {dimension_numbers = #tpu.dot_dimension_numbers<[1], [0], [0], [1], [0, 0, 1, 1], [], []>} : vector<32x3xf32>, vector<3x32xf32>, vector<32x32xf32> -> vector<32x32xf32>
    %39 = vector.broadcast %34 : vector<32x1xf32> to vector<32x32xf32>
    %40 = vector.broadcast %37 : vector<1x32xf32> to vector<32x32xf32>
    %41 = arith.addf %39, %40 : vector<32x32xf32>
    %cst_31 = arith.constant 2.000000e+00 : f32
    %42 = vector.broadcast %cst_31 : f32 to vector<32x32xf32>
    %43 = arith.mulf %42, %38 : vector<32x32xf32>
    %44 = arith.subf %41, %43 : vector<32x32xf32>
    %cst_32 = arith.constant 0.000000e+00 : f32
    %45 = vector.broadcast %cst_32 : f32 to vector<32x32xf32>
    %46 = arith.maximumf %44, %45 : vector<32x32xf32>
    %cst_33 = arith.constant 1.000000e+00 : f32
    %47 = vector.broadcast %cst_33 : f32 to vector<32x32xf32>
    %48 = arith.addf %46, %47 : vector<32x32xf32>
    %49 = vector.broadcast %2 : vector<32x1xf32> to vector<32x32xf32>
    %50 = vector.broadcast %4 : vector<1x32xf32> to vector<32x32xf32>
    %51 = arith.cmpf one, %49, %50 : vector<32x32xf32>
    %cst_34 = arith.constant 1.000000e+30 : f32
    %52 = vector.broadcast %cst_34 : f32 to vector<32x32xf32>
    %53 = arith.select %51, %52, %48 : vector<32x32xi1>, vector<32x32xf32>
    %54 = tpu.iota {dimensions = array<i32: 1>} : vector<32x32xi32>
    %55 = tpu.bitcast %53 : vector<32x32xf32> -> vector<32x32xi32>
    %c-32_i32 = arith.constant -32 : i32
    %56 = vector.broadcast %c-32_i32 : i32 to vector<32x32xi32>
    %57 = arith.andi %55, %56 : vector<32x32xi32>
    %58 = arith.ori %57, %54 : vector<32x32xi32>
    %59 = tpu.bitcast %58 : vector<32x32xi32> -> vector<32x32xf32>
    %cst_35 = arith.constant dense<0x7F800000> : vector<32xf32>
    %60 = vector.multi_reduction <minimumf>, %59, %cst_35 [1] : vector<32x32xf32> to vector<32xf32>
    %61 = vector.shape_cast %60 : vector<32xf32> to vector<32x1xf32>
    %62 = vector.broadcast %61 : vector<32x1xf32> to vector<32x32xf32>
    %63 = arith.cmpf oeq, %59, %62 : vector<32x32xf32>
    %64 = arith.extui %63 : vector<32x32xi1> to vector<32x32xi32>
    %65 = arith.sitofp %64 : vector<32x32xi32> to vector<32x32xf32>
    %cst_36 = arith.constant 3.000000e+38 : f32
    %66 = vector.broadcast %cst_36 : f32 to vector<32x32xf32>
    %67 = arith.select %63, %66, %59 : vector<32x32xi1>, vector<32x32xf32>
    %cst_37 = arith.constant dense<0x7F800000> : vector<32xf32>
    %68 = vector.multi_reduction <minimumf>, %67, %cst_37 [1] : vector<32x32xf32> to vector<32xf32>
    %69 = vector.shape_cast %68 : vector<32xf32> to vector<32x1xf32>
    %70 = vector.broadcast %69 : vector<32x1xf32> to vector<32x32xf32>
    %71 = arith.cmpf oeq, %67, %70 : vector<32x32xf32>
    %72 = arith.extui %71 : vector<32x32xi1> to vector<32x32xi32>
    %73 = arith.sitofp %72 : vector<32x32xi32> to vector<32x32xf32>
    %cst_38 = arith.constant 3.000000e+38 : f32
    %74 = vector.broadcast %cst_38 : f32 to vector<32x32xf32>
    %75 = arith.select %71, %74, %67 : vector<32x32xi1>, vector<32x32xf32>
    %cst_39 = arith.constant dense<0x7F800000> : vector<32xf32>
    %76 = vector.multi_reduction <minimumf>, %75, %cst_39 [1] : vector<32x32xf32> to vector<32xf32>
    %77 = vector.shape_cast %76 : vector<32xf32> to vector<32x1xf32>
    %78 = vector.broadcast %77 : vector<32x1xf32> to vector<32x32xf32>
    %79 = arith.cmpf oeq, %75, %78 : vector<32x32xf32>
    %80 = arith.extui %79 : vector<32x32xi1> to vector<32x32xi32>
    %81 = arith.sitofp %80 : vector<32x32xi32> to vector<32x32xf32>
    %cst_40 = arith.constant 3.000000e+38 : f32
    %82 = vector.broadcast %cst_40 : f32 to vector<32x32xf32>
    %83 = arith.select %79, %82, %75 : vector<32x32xi1>, vector<32x32xf32>
    %cst_41 = arith.constant dense<0x7F800000> : vector<32xf32>
    %84 = vector.multi_reduction <minimumf>, %83, %cst_41 [1] : vector<32x32xf32> to vector<32xf32>
    %85 = vector.shape_cast %84 : vector<32xf32> to vector<32x1xf32>
    %86 = vector.broadcast %85 : vector<32x1xf32> to vector<32x32xf32>
    %87 = arith.cmpf oeq, %83, %86 : vector<32x32xf32>
    %88 = arith.extui %87 : vector<32x32xi1> to vector<32x32xi32>
    %89 = arith.sitofp %88 : vector<32x32xi32> to vector<32x32xf32>
    %cst_42 = arith.constant 3.000000e+38 : f32
    %90 = vector.broadcast %cst_42 : f32 to vector<32x32xf32>
    %91 = arith.select %87, %90, %83 : vector<32x32xi1>, vector<32x32xf32>
    %cst_43 = arith.constant dense<0x7F800000> : vector<32xf32>
    %92 = vector.multi_reduction <minimumf>, %91, %cst_43 [1] : vector<32x32xf32> to vector<32xf32>
    %93 = vector.shape_cast %92 : vector<32xf32> to vector<32x1xf32>
    %94 = vector.broadcast %93 : vector<32x1xf32> to vector<32x32xf32>
    %95 = arith.cmpf oeq, %91, %94 : vector<32x32xf32>
    %96 = arith.extui %95 : vector<32x32xi1> to vector<32x32xi32>
    %97 = arith.sitofp %96 : vector<32x32xi32> to vector<32x32xf32>
    %cst_44 = arith.constant 3.000000e+38 : f32
    %98 = vector.broadcast %cst_44 : f32 to vector<32x32xf32>
    %99 = arith.select %95, %98, %91 : vector<32x32xi1>, vector<32x32xf32>
    %cst_45 = arith.constant dense<0x7F800000> : vector<32xf32>
    %100 = vector.multi_reduction <minimumf>, %99, %cst_45 [1] : vector<32x32xf32> to vector<32xf32>
    %101 = vector.shape_cast %100 : vector<32xf32> to vector<32x1xf32>
    %102 = vector.broadcast %101 : vector<32x1xf32> to vector<32x32xf32>
    %103 = arith.cmpf oeq, %99, %102 : vector<32x32xf32>
    %104 = arith.extui %103 : vector<32x32xi1> to vector<32x32xi32>
    %105 = arith.sitofp %104 : vector<32x32xi32> to vector<32x32xf32>
    %cst_46 = arith.constant 3.000000e+38 : f32
    %106 = vector.broadcast %cst_46 : f32 to vector<32x32xf32>
    %107 = arith.select %103, %106, %99 : vector<32x32xi1>, vector<32x32xf32>
    %cst_47 = arith.constant dense<0x7F800000> : vector<32xf32>
    %108 = vector.multi_reduction <minimumf>, %107, %cst_47 [1] : vector<32x32xf32> to vector<32xf32>
    %109 = vector.shape_cast %108 : vector<32xf32> to vector<32x1xf32>
    %110 = vector.broadcast %109 : vector<32x1xf32> to vector<32x32xf32>
    %111 = arith.cmpf oeq, %107, %110 : vector<32x32xf32>
    %112 = arith.extui %111 : vector<32x32xi1> to vector<32x32xi32>
    %113 = arith.sitofp %112 : vector<32x32xi32> to vector<32x32xf32>
    %cst_48 = arith.constant 3.000000e+38 : f32
    %114 = vector.broadcast %cst_48 : f32 to vector<32x32xf32>
    %115 = arith.select %111, %114, %107 : vector<32x32xi1>, vector<32x32xf32>
    %cst_49 = arith.constant dense<0x7F800000> : vector<32xf32>
    %116 = vector.multi_reduction <minimumf>, %115, %cst_49 [1] : vector<32x32xf32> to vector<32xf32>
    %117 = vector.shape_cast %116 : vector<32xf32> to vector<32x1xf32>
    %118 = vector.broadcast %117 : vector<32x1xf32> to vector<32x32xf32>
    %119 = arith.cmpf oeq, %115, %118 : vector<32x32xf32>
    %120 = arith.extui %119 : vector<32x32xi1> to vector<32x32xi32>
    %121 = arith.sitofp %120 : vector<32x32xi32> to vector<32x32xf32>
    %122 = tpu.concatenate %65, %73, %81, %89, %97, %105, %113, %121 in 0 : vector<32x32xf32>, vector<32x32xf32>, vector<32x32xf32>, vector<32x32xf32>, vector<32x32xf32>, vector<32x32xf32>, vector<32x32xf32>, vector<32x32xf32> -> vector<256x32xf32>
    %123 = tpu.iota {dimensions = array<i32: 0>} : vector<256x32xi32>
    %124 = tpu.iota {dimensions = array<i32: 1>} : vector<256x32xi32>
    %c31_i32 = arith.constant 31 : i32
    %125 = vector.broadcast %c31_i32 : i32 to vector<256x32xi32>
    %126 = arith.andi %123, %125 : vector<256x32xi32>
    %127 = arith.cmpi eq, %124, %126 : vector<256x32xi32>
    %128 = arith.extui %127 : vector<256x32xi1> to vector<256x32xi32>
    %129 = arith.sitofp %128 : vector<256x32xi32> to vector<256x32xf32>
    %130 = tpu.concatenate %122, %129 in 1 : vector<256x32xf32>, vector<256x32xf32> -> vector<256x64xf32>
    %131 = arith.truncf %130 : vector<256x64xf32> to vector<256x64xbf16>
    %132 = vector.extract_strided_slice %30 {offsets = [0, 16], sizes = [32, 32], strides = [1, 1]} : vector<32x48xf32> to vector<32x32xf32>
    %133 = tpu.concatenate %132, %1 in 1 : vector<32x32xf32>, vector<32x3xf32> -> vector<32x35xf32>
    %cst_50 = arith.constant 0.000000e+00 : f32
    %134 = vector.broadcast %cst_50 : f32 to vector<32x16xf32>
    %135 = arith.subf %134, %31 : vector<32x16xf32>
    %cst_51 = arith.constant 0.000000e+00 : f32
    %136 = vector.broadcast %cst_51 : f32 to vector<32x16xf32>
    %cst_52 = arith.constant 0.000000e+00 : f32
    %137 = vector.broadcast %cst_52 : f32 to vector<32x3xf32>
    %138 = arith.subf %137, %1 : vector<32x3xf32>
    %139 = tpu.concatenate %135, %136, %138 in 1 : vector<32x16xf32>, vector<32x16xf32>, vector<32x3xf32> -> vector<32x35xf32>
    %140 = tpu.concatenate %133, %139 in 0 : vector<32x35xf32>, vector<32x35xf32> -> vector<64x35xf32>
    %141 = arith.truncf %140 : vector<64x35xf32> to vector<64x35xbf16>
    %cst_53 = arith.constant dense<0.000000e+00> : vector<256x35xf32>
    %142 = tpu.matmul %131, %141, %cst_53 {dimension_numbers = #tpu.dot_dimension_numbers<[1], [0], [0], [1], [0, 0, 1, 1], [], []>} : vector<256x64xbf16>, vector<64x35xbf16>, vector<256x35xf32> -> vector<256x35xf32>
    %143 = vector.extract_strided_slice %142 {offsets = [0, 32], sizes = [256, 3], strides = [1, 1]} : vector<256x35xf32> to vector<256x3xf32>
    %cst_54 = arith.constant dense<0.000000e+00> : vector<256x3xf32>
    %144 = tpu.matmul %143, %10, %cst_54 {dimension_numbers = #tpu.dot_dimension_numbers<[1], [0], [0], [1], [0, 0, 1, 1], [], []>} : vector<256x3xf32>, vector<3x3xf32>, vector<256x3xf32> -> vector<256x3xf32>
    %145 = vector.broadcast %14 : vector<1x3xf32> to vector<256x3xf32>
    %146 = arith.addf %144, %145 : vector<256x3xf32>
    %cst_55 = arith.constant 0.000000e+00 : f32
    %147 = vector.broadcast %cst_55 : f32 to vector<256x3xf32>
    %148 = arith.maximumf %146, %147 : vector<256x3xf32>
    %cst_56 = arith.constant dense<0.000000e+00> : vector<256x16xf32>
    %149 = tpu.matmul %148, %9, %cst_56 {dimension_numbers = #tpu.dot_dimension_numbers<[1], [0], [0], [1], [0, 0, 1, 1], [], []>} : vector<256x3xf32>, vector<3x16xf32>, vector<256x16xf32> -> vector<256x16xf32>
    %150 = vector.broadcast %15 : vector<1x16xf32> to vector<256x16xf32>
    %151 = arith.addf %149, %150 : vector<256x16xf32>
    %152 = vector.extract_strided_slice %142 {offsets = [0, 16], sizes = [256, 16], strides = [1, 1]} : vector<256x35xf32> to vector<256x16xf32>
    %153 = arith.addf %152, %151 : vector<256x16xf32>
    %154 = vector.extract_strided_slice %142 {offsets = [0, 0], sizes = [256, 16], strides = [1, 1]} : vector<256x35xf32> to vector<256x16xf32>
    %155 = arith.addf %154, %151 : vector<256x16xf32>
    %156 = vector.broadcast %16 : vector<1x16xf32> to vector<256x16xf32>
    %157 = arith.mulf %155, %156 : vector<256x16xf32>
    %158 = vector.broadcast %17 : vector<1x16xf32> to vector<256x16xf32>
    %159 = arith.addf %157, %158 : vector<256x16xf32>
    %cst_57 = arith.constant 0.000000e+00 : f32
    %160 = vector.broadcast %cst_57 : f32 to vector<256x16xf32>
    %161 = arith.maximumf %159, %160 : vector<256x16xf32>
    %cst_58 = arith.constant dense<0.000000e+00> : vector<256x2xf32>
    %162 = tpu.matmul %161, %8, %cst_58 {dimension_numbers = #tpu.dot_dimension_numbers<[1], [0], [0], [1], [0, 0, 1, 1], [], []>} : vector<256x16xf32>, vector<16x2xf32>, vector<256x2xf32> -> vector<256x2xf32>
    %163 = vector.broadcast %18 : vector<1x2xf32> to vector<256x2xf32>
    %164 = arith.addf %162, %163 : vector<256x2xf32>
    %cst_59 = arith.constant 0.000000e+00 : f32
    %165 = vector.broadcast %cst_59 : f32 to vector<256x2xf32>
    %166 = arith.maximumf %164, %165 : vector<256x2xf32>
    %cst_60 = arith.constant dense<0.000000e+00> : vector<256x2xf32>
    %167 = tpu.matmul %166, %11, %cst_60 {dimension_numbers = #tpu.dot_dimension_numbers<[1], [0], [0], [1], [0, 0, 1, 1], [], []>} : vector<256x2xf32>, vector<2x2xf32>, vector<256x2xf32> -> vector<256x2xf32>
    %168 = vector.broadcast %19 : vector<1x2xf32> to vector<256x2xf32>
    %169 = arith.addf %167, %168 : vector<256x2xf32>
    %170 = vector.extract_strided_slice %169 {offsets = [0, 0], sizes = [32, 2], strides = [1, 1]} : vector<256x2xf32> to vector<32x2xf32>
    %171 = vector.extract_strided_slice %169 {offsets = [32, 0], sizes = [32, 2], strides = [1, 1]} : vector<256x2xf32> to vector<32x2xf32>
    %172 = vector.extract_strided_slice %169 {offsets = [64, 0], sizes = [32, 2], strides = [1, 1]} : vector<256x2xf32> to vector<32x2xf32>
    %173 = vector.extract_strided_slice %169 {offsets = [96, 0], sizes = [32, 2], strides = [1, 1]} : vector<256x2xf32> to vector<32x2xf32>
    %174 = vector.extract_strided_slice %169 {offsets = [128, 0], sizes = [32, 2], strides = [1, 1]} : vector<256x2xf32> to vector<32x2xf32>
    %175 = vector.extract_strided_slice %169 {offsets = [160, 0], sizes = [32, 2], strides = [1, 1]} : vector<256x2xf32> to vector<32x2xf32>
    %176 = vector.extract_strided_slice %169 {offsets = [192, 0], sizes = [32, 2], strides = [1, 1]} : vector<256x2xf32> to vector<32x2xf32>
    %177 = vector.extract_strided_slice %169 {offsets = [224, 0], sizes = [32, 2], strides = [1, 1]} : vector<256x2xf32> to vector<32x2xf32>
    %178 = arith.maximumf %170, %171 : vector<32x2xf32>
    %179 = arith.maximumf %172, %173 : vector<32x2xf32>
    %180 = arith.maximumf %174, %175 : vector<32x2xf32>
    %181 = arith.maximumf %176, %177 : vector<32x2xf32>
    %182 = arith.maximumf %178, %179 : vector<32x2xf32>
    %183 = arith.maximumf %180, %181 : vector<32x2xf32>
    %184 = arith.maximumf %182, %183 : vector<32x2xf32>
    %185 = arith.subf %170, %184 : vector<32x2xf32>
    %186 = math.exp %185 : vector<32x2xf32>
    %187 = arith.subf %171, %184 : vector<32x2xf32>
    %188 = math.exp %187 : vector<32x2xf32>
    %189 = arith.subf %172, %184 : vector<32x2xf32>
    %190 = math.exp %189 : vector<32x2xf32>
    %191 = arith.subf %173, %184 : vector<32x2xf32>
    %192 = math.exp %191 : vector<32x2xf32>
    %193 = arith.subf %174, %184 : vector<32x2xf32>
    %194 = math.exp %193 : vector<32x2xf32>
    %195 = arith.subf %175, %184 : vector<32x2xf32>
    %196 = math.exp %195 : vector<32x2xf32>
    %197 = arith.subf %176, %184 : vector<32x2xf32>
    %198 = math.exp %197 : vector<32x2xf32>
    %199 = arith.subf %177, %184 : vector<32x2xf32>
    %200 = math.exp %199 : vector<32x2xf32>
    %201 = arith.addf %186, %188 : vector<32x2xf32>
    %202 = arith.addf %190, %192 : vector<32x2xf32>
    %203 = arith.addf %194, %196 : vector<32x2xf32>
    %204 = arith.addf %198, %200 : vector<32x2xf32>
    %205 = arith.addf %201, %202 : vector<32x2xf32>
    %206 = arith.addf %203, %204 : vector<32x2xf32>
    %207 = arith.addf %205, %206 : vector<32x2xf32>
    %208 = tpu.reciprocal %207 {approx = true} : vector<32x2xf32> -> vector<32x2xf32>
    %209 = tpu.iota {dimensions = array<i32: 0>} : vector<2x16xi32>
    %210 = tpu.iota {dimensions = array<i32: 1>} : vector<2x16xi32>
    %c1_i32 = arith.constant 1 : i32
    %211 = vector.broadcast %c1_i32 : i32 to vector<2x16xi32>
    %212 = arith.andi %210, %211 : vector<2x16xi32>
    %213 = arith.cmpi eq, %212, %209 : vector<2x16xi32>
    %214 = arith.extui %213 : vector<2x16xi1> to vector<2x16xi32>
    %215 = arith.sitofp %214 : vector<2x16xi32> to vector<2x16xf32>
    %216 = arith.truncf %215 : vector<2x16xf32> to vector<2x16xbf16>
    %217 = vector.extract_strided_slice %153 {offsets = [0, 0], sizes = [32, 16], strides = [1, 1]} : vector<256x16xf32> to vector<32x16xf32>
    %218 = arith.mulf %186, %208 : vector<32x2xf32>
    %219 = arith.truncf %218 : vector<32x2xf32> to vector<32x2xbf16>
    %cst_61 = arith.constant dense<0.000000e+00> : vector<32x16xf32>
    %220 = tpu.matmul %219, %216, %cst_61 {dimension_numbers = #tpu.dot_dimension_numbers<[1], [0], [0], [1], [0, 0, 1, 1], [], []>} : vector<32x2xbf16>, vector<2x16xbf16>, vector<32x16xf32> -> vector<32x16xf32>
    %221 = arith.mulf %217, %220 : vector<32x16xf32>
    %222 = vector.extract_strided_slice %153 {offsets = [32, 0], sizes = [32, 16], strides = [1, 1]} : vector<256x16xf32> to vector<32x16xf32>
    %223 = arith.mulf %188, %208 : vector<32x2xf32>
    %224 = arith.truncf %223 : vector<32x2xf32> to vector<32x2xbf16>
    %cst_62 = arith.constant dense<0.000000e+00> : vector<32x16xf32>
    %225 = tpu.matmul %224, %216, %cst_62 {dimension_numbers = #tpu.dot_dimension_numbers<[1], [0], [0], [1], [0, 0, 1, 1], [], []>} : vector<32x2xbf16>, vector<2x16xbf16>, vector<32x16xf32> -> vector<32x16xf32>
    %226 = arith.mulf %222, %225 : vector<32x16xf32>
    %227 = vector.extract_strided_slice %153 {offsets = [64, 0], sizes = [32, 16], strides = [1, 1]} : vector<256x16xf32> to vector<32x16xf32>
    %228 = arith.mulf %190, %208 : vector<32x2xf32>
    %229 = arith.truncf %228 : vector<32x2xf32> to vector<32x2xbf16>
    %cst_63 = arith.constant dense<0.000000e+00> : vector<32x16xf32>
    %230 = tpu.matmul %229, %216, %cst_63 {dimension_numbers = #tpu.dot_dimension_numbers<[1], [0], [0], [1], [0, 0, 1, 1], [], []>} : vector<32x2xbf16>, vector<2x16xbf16>, vector<32x16xf32> -> vector<32x16xf32>
    %231 = arith.mulf %227, %230 : vector<32x16xf32>
    %232 = vector.extract_strided_slice %153 {offsets = [96, 0], sizes = [32, 16], strides = [1, 1]} : vector<256x16xf32> to vector<32x16xf32>
    %233 = arith.mulf %192, %208 : vector<32x2xf32>
    %234 = arith.truncf %233 : vector<32x2xf32> to vector<32x2xbf16>
    %cst_64 = arith.constant dense<0.000000e+00> : vector<32x16xf32>
    %235 = tpu.matmul %234, %216, %cst_64 {dimension_numbers = #tpu.dot_dimension_numbers<[1], [0], [0], [1], [0, 0, 1, 1], [], []>} : vector<32x2xbf16>, vector<2x16xbf16>, vector<32x16xf32> -> vector<32x16xf32>
    %236 = arith.mulf %232, %235 : vector<32x16xf32>
    %237 = vector.extract_strided_slice %153 {offsets = [128, 0], sizes = [32, 16], strides = [1, 1]} : vector<256x16xf32> to vector<32x16xf32>
    %238 = arith.mulf %194, %208 : vector<32x2xf32>
    %239 = arith.truncf %238 : vector<32x2xf32> to vector<32x2xbf16>
    %cst_65 = arith.constant dense<0.000000e+00> : vector<32x16xf32>
    %240 = tpu.matmul %239, %216, %cst_65 {dimension_numbers = #tpu.dot_dimension_numbers<[1], [0], [0], [1], [0, 0, 1, 1], [], []>} : vector<32x2xbf16>, vector<2x16xbf16>, vector<32x16xf32> -> vector<32x16xf32>
    %241 = arith.mulf %237, %240 : vector<32x16xf32>
    %242 = vector.extract_strided_slice %153 {offsets = [160, 0], sizes = [32, 16], strides = [1, 1]} : vector<256x16xf32> to vector<32x16xf32>
    %243 = arith.mulf %196, %208 : vector<32x2xf32>
    %244 = arith.truncf %243 : vector<32x2xf32> to vector<32x2xbf16>
    %cst_66 = arith.constant dense<0.000000e+00> : vector<32x16xf32>
    %245 = tpu.matmul %244, %216, %cst_66 {dimension_numbers = #tpu.dot_dimension_numbers<[1], [0], [0], [1], [0, 0, 1, 1], [], []>} : vector<32x2xbf16>, vector<2x16xbf16>, vector<32x16xf32> -> vector<32x16xf32>
    %246 = arith.mulf %242, %245 : vector<32x16xf32>
    %247 = vector.extract_strided_slice %153 {offsets = [192, 0], sizes = [32, 16], strides = [1, 1]} : vector<256x16xf32> to vector<32x16xf32>
    %248 = arith.mulf %198, %208 : vector<32x2xf32>
    %249 = arith.truncf %248 : vector<32x2xf32> to vector<32x2xbf16>
    %cst_67 = arith.constant dense<0.000000e+00> : vector<32x16xf32>
    %250 = tpu.matmul %249, %216, %cst_67 {dimension_numbers = #tpu.dot_dimension_numbers<[1], [0], [0], [1], [0, 0, 1, 1], [], []>} : vector<32x2xbf16>, vector<2x16xbf16>, vector<32x16xf32> -> vector<32x16xf32>
    %251 = arith.mulf %247, %250 : vector<32x16xf32>
    %252 = vector.extract_strided_slice %153 {offsets = [224, 0], sizes = [32, 16], strides = [1, 1]} : vector<256x16xf32> to vector<32x16xf32>
    %253 = arith.mulf %200, %208 : vector<32x2xf32>
    %254 = arith.truncf %253 : vector<32x2xf32> to vector<32x2xbf16>
    %cst_68 = arith.constant dense<0.000000e+00> : vector<32x16xf32>
    %255 = tpu.matmul %254, %216, %cst_68 {dimension_numbers = #tpu.dot_dimension_numbers<[1], [0], [0], [1], [0, 0, 1, 1], [], []>} : vector<32x2xbf16>, vector<2x16xbf16>, vector<32x16xf32> -> vector<32x16xf32>
    %256 = arith.mulf %252, %255 : vector<32x16xf32>
    %257 = arith.addf %221, %226 : vector<32x16xf32>
    %258 = arith.addf %231, %236 : vector<32x16xf32>
    %259 = arith.addf %241, %246 : vector<32x16xf32>
    %260 = arith.addf %251, %256 : vector<32x16xf32>
    %261 = arith.addf %257, %258 : vector<32x16xf32>
    %262 = arith.addf %259, %260 : vector<32x16xf32>
    %263 = arith.addf %261, %262 : vector<32x16xf32>
    %264 = vector.broadcast %20 : vector<1x16xf32> to vector<32x16xf32>
    %265 = arith.mulf %263, %264 : vector<32x16xf32>
    %266 = vector.broadcast %21 : vector<1x16xf32> to vector<32x16xf32>
    %267 = arith.addf %265, %266 : vector<32x16xf32>
    %cst_69 = arith.constant 0.000000e+00 : f32
    %268 = vector.broadcast %cst_69 : f32 to vector<32x16xf32>
    %269 = arith.maximumf %267, %268 : vector<32x16xf32>
    %cst_70 = arith.constant dense<0.000000e+00> : vector<32x16xf32>
    %270 = tpu.matmul %269, %7, %cst_70 {dimension_numbers = #tpu.dot_dimension_numbers<[1], [0], [0], [1], [0, 0, 1, 1], [], []>} : vector<32x16xf32>, vector<16x16xf32>, vector<32x16xf32> -> vector<32x16xf32>
    %271 = vector.broadcast %22 : vector<1x16xf32> to vector<32x16xf32>
    %272 = arith.addf %270, %271 : vector<32x16xf32>
    %273 = arith.addf %272, %0 : vector<32x16xf32>
    %cst_71 = arith.constant 0.000000e+00 : f32
    %274 = vector.broadcast %cst_71 : f32 to vector<32x16xf32>
    %275 = arith.maximumf %273, %274 : vector<32x16xf32>
    %276 = vector.extract_strided_slice %275 {offsets = [0, 0], sizes = [1, 16], strides = [1, 1]} : vector<32x16xf32> to vector<1x16xf32>
    %277 = vector.extract_strided_slice %275 {offsets = [1, 0], sizes = [1, 16], strides = [1, 1]} : vector<32x16xf32> to vector<1x16xf32>
    %278 = vector.extract_strided_slice %275 {offsets = [2, 0], sizes = [1, 16], strides = [1, 1]} : vector<32x16xf32> to vector<1x16xf32>
    %279 = vector.extract_strided_slice %275 {offsets = [3, 0], sizes = [1, 16], strides = [1, 1]} : vector<32x16xf32> to vector<1x16xf32>
    %280 = vector.extract_strided_slice %275 {offsets = [4, 0], sizes = [1, 16], strides = [1, 1]} : vector<32x16xf32> to vector<1x16xf32>
    %281 = vector.extract_strided_slice %275 {offsets = [5, 0], sizes = [1, 16], strides = [1, 1]} : vector<32x16xf32> to vector<1x16xf32>
    %282 = vector.extract_strided_slice %275 {offsets = [6, 0], sizes = [1, 16], strides = [1, 1]} : vector<32x16xf32> to vector<1x16xf32>
    %283 = vector.extract_strided_slice %275 {offsets = [7, 0], sizes = [1, 16], strides = [1, 1]} : vector<32x16xf32> to vector<1x16xf32>
    %284 = tpu.concatenate %276, %277, %278, %279, %280, %281, %282, %283 in 1 : vector<1x16xf32>, vector<1x16xf32>, vector<1x16xf32>, vector<1x16xf32>, vector<1x16xf32>, vector<1x16xf32>, vector<1x16xf32>, vector<1x16xf32> -> vector<1x128xf32>
    %285 = vector.extract_strided_slice %275 {offsets = [8, 0], sizes = [1, 16], strides = [1, 1]} : vector<32x16xf32> to vector<1x16xf32>
    %286 = vector.extract_strided_slice %275 {offsets = [9, 0], sizes = [1, 16], strides = [1, 1]} : vector<32x16xf32> to vector<1x16xf32>
    %287 = vector.extract_strided_slice %275 {offsets = [10, 0], sizes = [1, 16], strides = [1, 1]} : vector<32x16xf32> to vector<1x16xf32>
    %288 = vector.extract_strided_slice %275 {offsets = [11, 0], sizes = [1, 16], strides = [1, 1]} : vector<32x16xf32> to vector<1x16xf32>
    %289 = vector.extract_strided_slice %275 {offsets = [12, 0], sizes = [1, 16], strides = [1, 1]} : vector<32x16xf32> to vector<1x16xf32>
    %290 = vector.extract_strided_slice %275 {offsets = [13, 0], sizes = [1, 16], strides = [1, 1]} : vector<32x16xf32> to vector<1x16xf32>
    %291 = vector.extract_strided_slice %275 {offsets = [14, 0], sizes = [1, 16], strides = [1, 1]} : vector<32x16xf32> to vector<1x16xf32>
    %292 = vector.extract_strided_slice %275 {offsets = [15, 0], sizes = [1, 16], strides = [1, 1]} : vector<32x16xf32> to vector<1x16xf32>
    %293 = tpu.concatenate %285, %286, %287, %288, %289, %290, %291, %292 in 1 : vector<1x16xf32>, vector<1x16xf32>, vector<1x16xf32>, vector<1x16xf32>, vector<1x16xf32>, vector<1x16xf32>, vector<1x16xf32>, vector<1x16xf32> -> vector<1x128xf32>
    %294 = vector.extract_strided_slice %275 {offsets = [16, 0], sizes = [1, 16], strides = [1, 1]} : vector<32x16xf32> to vector<1x16xf32>
    %295 = vector.extract_strided_slice %275 {offsets = [17, 0], sizes = [1, 16], strides = [1, 1]} : vector<32x16xf32> to vector<1x16xf32>
    %296 = vector.extract_strided_slice %275 {offsets = [18, 0], sizes = [1, 16], strides = [1, 1]} : vector<32x16xf32> to vector<1x16xf32>
    %297 = vector.extract_strided_slice %275 {offsets = [19, 0], sizes = [1, 16], strides = [1, 1]} : vector<32x16xf32> to vector<1x16xf32>
    %298 = vector.extract_strided_slice %275 {offsets = [20, 0], sizes = [1, 16], strides = [1, 1]} : vector<32x16xf32> to vector<1x16xf32>
    %299 = vector.extract_strided_slice %275 {offsets = [21, 0], sizes = [1, 16], strides = [1, 1]} : vector<32x16xf32> to vector<1x16xf32>
    %300 = vector.extract_strided_slice %275 {offsets = [22, 0], sizes = [1, 16], strides = [1, 1]} : vector<32x16xf32> to vector<1x16xf32>
    %301 = vector.extract_strided_slice %275 {offsets = [23, 0], sizes = [1, 16], strides = [1, 1]} : vector<32x16xf32> to vector<1x16xf32>
    %302 = tpu.concatenate %294, %295, %296, %297, %298, %299, %300, %301 in 1 : vector<1x16xf32>, vector<1x16xf32>, vector<1x16xf32>, vector<1x16xf32>, vector<1x16xf32>, vector<1x16xf32>, vector<1x16xf32>, vector<1x16xf32> -> vector<1x128xf32>
    %303 = vector.extract_strided_slice %275 {offsets = [24, 0], sizes = [1, 16], strides = [1, 1]} : vector<32x16xf32> to vector<1x16xf32>
    %304 = vector.extract_strided_slice %275 {offsets = [25, 0], sizes = [1, 16], strides = [1, 1]} : vector<32x16xf32> to vector<1x16xf32>
    %305 = vector.extract_strided_slice %275 {offsets = [26, 0], sizes = [1, 16], strides = [1, 1]} : vector<32x16xf32> to vector<1x16xf32>
    %306 = vector.extract_strided_slice %275 {offsets = [27, 0], sizes = [1, 16], strides = [1, 1]} : vector<32x16xf32> to vector<1x16xf32>
    %307 = vector.extract_strided_slice %275 {offsets = [28, 0], sizes = [1, 16], strides = [1, 1]} : vector<32x16xf32> to vector<1x16xf32>
    %308 = vector.extract_strided_slice %275 {offsets = [29, 0], sizes = [1, 16], strides = [1, 1]} : vector<32x16xf32> to vector<1x16xf32>
    %309 = vector.extract_strided_slice %275 {offsets = [30, 0], sizes = [1, 16], strides = [1, 1]} : vector<32x16xf32> to vector<1x16xf32>
    %310 = vector.extract_strided_slice %275 {offsets = [31, 0], sizes = [1, 16], strides = [1, 1]} : vector<32x16xf32> to vector<1x16xf32>
    %311 = tpu.concatenate %303, %304, %305, %306, %307, %308, %309, %310 in 1 : vector<1x16xf32>, vector<1x16xf32>, vector<1x16xf32>, vector<1x16xf32>, vector<1x16xf32>, vector<1x16xf32>, vector<1x16xf32>, vector<1x16xf32> -> vector<1x128xf32>
    %312 = tpu.concatenate %284, %293, %302, %311 in 0 : vector<1x128xf32>, vector<1x128xf32>, vector<1x128xf32>, vector<1x128xf32> -> vector<4x128xf32>
    %c0_72 = arith.constant 0 : index
    %c0_73 = arith.constant 0 : index
    %313 = vector.load %arg1[%c0_72, %c0_73] : memref<4x128xf32, #tpu.memory_space<vmem>>, vector<4x128xf32>
    tpu.vector_store %arg1[%c0_72, %c0_73], %312 {strides = array<i32>} : memref<4x128xf32, #tpu.memory_space<vmem>>, vector<4x128xf32>,
    return
  }
}

</mosaic_0001>

<llo_original>
// kernel: tpu_custom_call.1
$region0: #{tpu_custom_call.1}
  #allocation0 [shape = 'u32[]', space=smem, size = 0x4, offset = 0x4, fixed_abs, tag = 'smem constant byte address 0x4 - core index']
  #allocation1 [shape = 'u32[144,128]{1,0:T(1,128)}', space=vmem, size = 0x12000, scoped, tag = 'internal scratch']
  %s0 = inlined_call_operand.hbm [shape: f32[72,128], index: 0, kind: input, shape index: {}]
  %s1 = inlined_call_operand.hbm [shape: f32[4,128], index: 1, kind: output, shape index: {}]
  %s2 = sld [smem:[#allocation0]]
  $region18: #{tpu_custom_call.1} parent=0
    _
  %s4 = ssub.s32 1, %s2
  %s5 = scalar_select 0, %s4, %s2
  $region1: #{tpu_custom_call.1} parent=0
    #allocation2 [shape = 'u8[36864]{0}', space=vmem, size = 0x9000, scoped, tag = 'input window, operand 0, single buffered']
    #allocation3 [shape = 's32[1]{0}', space=sflag, size = 0x4, scoped, tag = 'scoped memory for tpu_custom_call.1']
    #allocation4 [shape = 's32[1]{0}', space=sflag, size = 0x4, scoped, tag = 'scoped memory for tpu_custom_call.1']
    #allocation5 [shape = 'u8[2048]{0}', space=vmem, size = 0x800, scoped, tag = 'output window, operand 0, single buffered']
    %6 = vsyncpa [#allocation3], 0
    %7 = vsyncpa [#allocation4], 0
    // Predicated region
    $region2: #{tpu_custom_call.1} parent=1 // pred_check
      _
    $region3: #{tpu_custom_call.1} parent=1 // pred_check_branch
      %9 = sbr.rel (0) target = $region5
    $region4: #{tpu_custom_call.1} parent=1 // pred_region
      %s11 = ssub.s32 1152, 1152
      %12 = vsyncadd [#allocation3], %s11
      %s13 = sshll.u32 [#allocation2], 4
      %s14 = int_to_ptr.vmem [resolvable:$true] %s13
      %19 = dma.hbm_to_vmem [thread:$0]  %s0, 1152, %s14, [#allocation3], 128, 128, 8
    $region5: #{tpu_custom_call.1} parent=1 // pred_fallthru
      _
    // Predicated region
    $region6: #{tpu_custom_call.1} parent=1 // pred_check
      _
    $region7: #{tpu_custom_call.1} parent=1 // pred_check_branch
      %21 = sbr.rel (0) target = $region9
    $region8: #{tpu_custom_call.1} parent=1 // pred_region
      %22 = dma.done [#allocation3], 1152
    $region9: #{tpu_custom_call.1} parent=1 // pred_fallthru
      _
    %v24 = vld [vmem:[#allocation2] sm:$0xff]
    %v25 = vld [vmem:[#allocation2 + $0x8] sm:$0xff]
    %v26 = vld [vmem:[#allocation2 + $0x10] sm:$0xff]
    %v27 = vld [vmem:[#allocation2 + $0x18] sm:$0xff]
    %v28 = vld [vmem:[#allocation2 + $0x20] sm:$0x7]
    %v29 = vld [vmem:[#allocation2 + $0x23] sm:$0x1]
    %v30 = vld [vmem:[#allocation2 + $0x24] sm:$0xff]
    %v31 = vld [vmem:[#allocation2 + $0x2c] sm:$0xff]
    %v32 = vld [vmem:[#allocation2 + $0x34] sm:$0x7]
    %v33 = vld [vmem:[#allocation2 + $0x34] sm:$0x3]
    %v34 = vld [vmem:[#allocation2 + $0x37] sm:$0x1]
    %v35 = vld [vmem:[#allocation2 + $0x38] sm:$0x1]
    %v36 = vld [vmem:[#allocation2 + $0x39] sm:$0x1]
    %v37 = vld [vmem:[#allocation2 + $0x3a] sm:$0x1]
    %v38 = vld [vmem:[#allocation2 + $0x3b] sm:$0x1]
    %v39 = vld [vmem:[#allocation2 + $0x3c] sm:$0x1]
    %v40 = vld [vmem:[#allocation2 + $0x3d] sm:$0x1]
    %v41 = vld [vmem:[#allocation2 + $0x3e] sm:$0x1]
    %v42 = vld [vmem:[#allocation2 + $0x3f] sm:$0x1]
    %v43 = vld [vmem:[#allocation2 + $0x40] sm:$0x1]
    %v44 = vld [vmem:[#allocation2 + $0x41] sm:$0x1]
    %v45 = vlaneseq
    %v46 = vshrl.u32 %v45, 7
    %v47 = vsub.s32 0, %v46
    %v48 = vrot.slane %v34, %v47
    %51 = vrot.lane.b32.xlu0 %v30, 80
    %v52 = vpop.permute.xlu0 %51
    %53 = vrot.lane.b32.xlu0 %v31, 80
    %v54 = vpop.permute.xlu0 %53
    %vm57 = vcmask 130048
    %v59 = vsel %vm57, %v24, 0
    %v62 = vsel %vm57, %v25, 0
    %v65 = vsel %vm57, %v26, 0
    %v68 = vsel %vm57, %v27, 0
    %70 = vmatprep.subr.mxu0 0.0
    %71 = vmatpush1.msra.mxu0 %v52
    %72 = vmatprep.subr.mxu0 0.0
    %73 = vmatpush1.msra.mxu0 %v54
    %74 = vmatprep.subr.mxu0 0.0
    %75 = vmatpush1.msra.mxu0 0.0
    %76 = vmatprep.subr.mxu0 0.0
    %77 = vmatpush1.msra.mxu0 0.0
    %78 = vmatprep.subr.mxu0 0.0
    %79 = vmatpush1.msra.mxu0 0.0
    %80 = vmatprep.subr.mxu0 0.0
    %81 = vmatpush1.msra.mxu0 0.0
    %82 = vmatprep.subr.mxu0 0.0
    %83 = vmatpush1.msra.mxu0 0.0
    %84 = vmatprep.subr.mxu0 0.0
    %85 = vmatpush1.msra.mxu0 0.0
    %86 = vmatprep.subr.mxu0 0.0
    %87 = vmatpush1.msra.mxu0 0.0
    %88 = vmatprep.subr.mxu0 0.0
    %89 = vmatpush1.msra.mxu0 0.0
    %90 = vmatprep.subr.mxu0 0.0
    %91 = vmatpush1.msra.mxu0 0.0
    %92 = vmatprep.subr.mxu0 0.0
    %93 = vmatpush1.msra.mxu0 0.0
    %94 = vmatprep.subr.mxu0 0.0
    %95 = vmatpush1.msra.mxu0 0.0
    %96 = vmatprep.subr.mxu0 0.0
    %97 = vmatpush1.msra.mxu0 0.0
    %98 = vmatprep.subr.mxu0 0.0
    %99 = vmatpush1.msra.mxu0 0.0
    %100 = vmatprep.subr.mxu0 0.0
    %101 = vmatpush1.msra.mxu0 0.0
    %102 = vmatprep.subr.mxu0 0.0
    %103 = vmatpush1.msra.mxu0 0.0
    %104 = vmatprep.subr.mxu0 0.0
    %105 = vmatpush1.msra.mxu0 0.0
    %106 = vmatprep.subr.mxu0 0.0
    %107 = vmatpush1.msra.mxu0 0.0
    %108 = vmatprep.subr.mxu0 0.0
    %109 = vmatpush1.msra.mxu0 0.0
    %110 = vmatprep.subr.mxu0 0.0
    %111 = vmatpush1.msra.mxu0 0.0
    %112 = vmatprep.subr.mxu0 0.0
    %113 = vmatpush1.msra.mxu0 0.0
    %114 = vmatprep.subr.mxu0 0.0
    %115 = vmatpush1.msra.mxu0 0.0
    %116 = vmatprep.subr.mxu0 0.0
    %117 = vmatpush1.msra.mxu0 0.0
    %118 = vmatprep.subr.mxu0 0.0
    %119 = vmatpush1.msra.mxu0 0.0
    %120 = vmatprep.subr.mxu0 0.0
    %121 = vmatpush1.msra.mxu0 0.0
    %122 = vmatprep.subr.mxu0 0.0
    %123 = vmatpush1.msra.mxu0 0.0
    %124 = vmatprep.subr.mxu0 0.0
    %125 = vmatpush1.msra.mxu0 0.0
    %126 = vmatprep.subr.mxu0 0.0
    %127 = vmatpush1.msra.mxu0 0.0
    %128 = vmatprep.subr.mxu0 0.0
    %129 = vmatpush1.msra.mxu0 0.0
    %130 = vmatprep.subr.mxu0 0.0
    %131 = vmatpush1.msra.mxu0 0.0
    %132 = vmatprep.subr.mxu0 0.0
    %133 = vmatpush1.msra.mxu0 0.0
    %134 = vmatprep.mubr.f32.mxu0 0.0
    %135 = vmatmul.mubr.f32.gmra.mrb[0].mxu0 %v59
    %v136 = vpop.f32.mrb[0].mxu0
    %v137 = vadd.f32 %v48, %v136
    %v138 = vpop.f32.mrb[0].mxu0
    %139 = vmatprep.mubr.f32.mxu0 0.0
    %140 = vmatmul.mubr.f32.gmra.mrb[0].mxu0 %v62
    %v141 = vpop.f32.mrb[0].mxu0
    %v142 = vadd.f32 %v48, %v141
    %v143 = vpop.f32.mrb[0].mxu0
    %144 = vmatprep.mubr.f32.mxu0 0.0
    %145 = vmatmul.mubr.f32.gmra.mrb[0].mxu0 %v65
    %v146 = vpop.f32.mrb[0].mxu0
    %v147 = vadd.f32 %v48, %v146
    %v148 = vpop.f32.mrb[0].mxu0
    %149 = vmatprep.mubr.f32.mxu0 0.0
    %150 = vmatmul.mubr.f32.gmra.mrb[0].mxu0 %v68
    %v151 = vpop.f32.mrb[0].mxu0
    %v152 = vadd.f32 %v48, %v151
    %v153 = vpop.f32.mrb[0].mxu0
    %154 = vdwg.mxu0
    %v155 = vmax.f32 %v137, 0.0
    %v156 = vmax.f32 %v142, 0.0
    %v157 = vmax.f32 %v147, 0.0
    %v158 = vmax.f32 %v152, 0.0
    %v159 = vlaneseq
    %v160 = vshrl.u32 %v159, 7
    %v161 = vsub.s32 0, %v160
    %v162 = vrot.slane %v35, %v161
    %v164 = vsel %vm57, %v155, 0
    %v167 = vsel %vm57, %v156, 0
    %v170 = vsel %vm57, %v157, 0
    %v173 = vsel %vm57, %v158, 0
    %175 = vmatprep.subr.mxu0 0.0
    %176 = vmatpush1.msra.mxu0 %v30
    %177 = vmatprep.subr.mxu0 0.0
    %178 = vmatpush1.msra.mxu0 %v31
    %179 = vmatprep.subr.mxu0 0.0
    %180 = vmatpush1.msra.mxu0 0.0
    %181 = vmatprep.subr.mxu0 0.0
    %182 = vmatpush1.msra.mxu0 0.0
    %183 = vmatprep.subr.mxu0 0.0
    %184 = vmatpush1.msra.mxu0 0.0
    %185 = vmatprep.subr.mxu0 0.0
    %186 = vmatpush1.msra.mxu0 0.0
    %187 = vmatprep.subr.mxu0 0.0
    %188 = vmatpush1.msra.mxu0 0.0
    %189 = vmatprep.subr.mxu0 0.0
    %190 = vmatpush1.msra.mxu0 0.0
    %191 = vmatprep.subr.mxu0 0.0
    %192 = vmatpush1.msra.mxu0 0.0
    %193 = vmatprep.subr.mxu0 0.0
    %194 = vmatpush1.msra.mxu0 0.0
    %195 = vmatprep.subr.mxu0 0.0
    %196 = vmatpush1.msra.mxu0 0.0
    %197 = vmatprep.subr.mxu0 0.0
    %198 = vmatpush1.msra.mxu0 0.0
    %199 = vmatprep.subr.mxu0 0.0
    %200 = vmatpush1.msra.mxu0 0.0
    %201 = vmatprep.subr.mxu0 0.0
    %202 = vmatpush1.msra.mxu0 0.0
    %203 = vmatprep.subr.mxu0 0.0
    %204 = vmatpush1.msra.mxu0 0.0
    %205 = vmatprep.subr.mxu0 0.0
    %206 = vmatpush1.msra.mxu0 0.0
    %207 = vmatprep.subr.mxu0 0.0
    %208 = vmatpush1.msra.mxu0 0.0
    %209 = vmatprep.subr.mxu0 0.0
    %210 = vmatpush1.msra.mxu0 0.0
    %211 = vmatprep.subr.mxu0 0.0
    %212 = vmatpush1.msra.mxu0 0.0
    %213 = vmatprep.subr.mxu0 0.0
    %214 = vmatpush1.msra.mxu0 0.0
    %215 = vmatprep.subr.mxu0 0.0
    %216 = vmatpush1.msra.mxu0 0.0
    %217 = vmatprep.subr.mxu0 0.0
    %218 = vmatpush1.msra.mxu0 0.0
    %219 = vmatprep.subr.mxu0 0.0
    %220 = vmatpush1.msra.mxu0 0.0
    %221 = vmatprep.subr.mxu0 0.0
    %222 = vmatpush1.msra.mxu0 0.0
    %223 = vmatprep.subr.mxu0 0.0
    %224 = vmatpush1.msra.mxu0 0.0
    %225 = vmatprep.subr.mxu0 0.0
    %226 = vmatpush1.msra.mxu0 0.0
    %227 = vmatprep.subr.mxu0 0.0
    %228 = vmatpush1.msra.mxu0 0.0
    %229 = vmatprep.subr.mxu0 0.0
    %230 = vmatpush1.msra.mxu0 0.0
    %231 = vmatprep.subr.mxu0 0.0
    %232 = vmatpush1.msra.mxu0 0.0
    %233 = vmatprep.subr.mxu0 0.0
    %234 = vmatpush1.msra.mxu0 0.0
    %235 = vmatprep.subr.mxu0 0.0
    %236 = vmatpush1.msra.mxu0 0.0
    %237 = vmatprep.subr.mxu0 0.0
    %238 = vmatpush1.msra.mxu0 0.0
    %239 = vmatprep.mubr.f32.mxu0 0.0
    %240 = vmatmul.mubr.f32.gmra.mrb[0].mxu0 %v164
    %v241 = vpop.f32.mrb[0].mxu0
    %v242 = vadd.f32 %v162, %v241
    %v243 = vpop.f32.mrb[0].mxu0
    %244 = vmatprep.mubr.f32.mxu0 0.0
    %245 = vmatmul.mubr.f32.gmra.mrb[0].mxu0 %v167
    %v246 = vpop.f32.mrb[0].mxu0
    %v247 = vadd.f32 %v162, %v246
    %v248 = vpop.f32.mrb[0].mxu0
    %249 = vmatprep.mubr.f32.mxu0 0.0
    %250 = vmatmul.mubr.f32.gmra.mrb[0].mxu0 %v170
    %v251 = vpop.f32.mrb[0].mxu0
    %v252 = vadd.f32 %v162, %v251
    %v253 = vpop.f32.mrb[0].mxu0
    %254 = vmatprep.mubr.f32.mxu0 0.0
    %255 = vmatmul.mubr.f32.gmra.mrb[0].mxu0 %v173
    %v256 = vpop.f32.mrb[0].mxu0
    %v257 = vadd.f32 %v162, %v256
    %v258 = vpop.f32.mrb[0].mxu0
    %259 = vdwg.mxu0
    %v260 = vmul.f32 %v24, %v24
    %v261 = vmul.f32 %v25, %v25
    %v262 = vmul.f32 %v26, %v26
    %v263 = vmul.f32 %v27, %v27
    %268 = vrot.lane.b32.xlu0 %v260, 112
    %v269 = vpop.permute.xlu0 %268
    %270 = vrot.lane.b32.xlu0 %v261, 112
    %v271 = vpop.permute.xlu0 %270
    %272 = vrot.lane.b32.xlu0 %v262, 112
    %v273 = vpop.permute.xlu0 %272
    %274 = vrot.lane.b32.xlu0 %v263, 112
    %v275 = vpop.permute.xlu0 %274
    %vm280 = vcmask 23552
    %v281 = vsel %vm280, %v269, 0.0
    %282 = vadd.xlane.f32.xlu0 %v281
    %v283 = vpop.xlane.xlu0 %282
    %v284 = vsel %vm280, %v271, 0.0
    %285 = vadd.xlane.f32.xlu0 %v284
    %v286 = vpop.xlane.xlu0 %285
    %v287 = vsel %vm280, %v273, 0.0
    %288 = vadd.xlane.f32.xlu0 %v287
    %v289 = vpop.xlane.xlu0 %288
    %v290 = vsel %vm280, %v275, 0.0
    %291 = vadd.xlane.f32.xlu0 %v290
    %v292 = vpop.xlane.xlu0 %291
    %v293 = vmul.f32 %v28, %v28
    %vm294 = vcmask 256000
    %v295 = vsel %vm294, %v293, 0.0
    %v296 = vrot.slane %v295, 4
    %v297 = vadd.f32 %v295, %v296
    %v298 = vrot.slane %v297, 2
    %v299 = vadd.f32 %v297, %v298
    %v300 = vrot.slane %v299, 1
    %v301 = vadd.f32 %v299, %v300
    %302 = vrot.lane.b32.xlu0 %v24, 112
    %v303 = vpop.permute.xlu0 %302
    %304 = vrot.lane.b32.xlu0 %v25, 112
    %v305 = vpop.permute.xlu0 %304
    %306 = vrot.lane.b32.xlu0 %v26, 112
    %v307 = vpop.permute.xlu0 %306
    %308 = vrot.lane.b32.xlu0 %v27, 112
    %v309 = vpop.permute.xlu0 %308
    %v310 = vsel %vm280, %v303, 0
    %v312 = vsel %vm280, %v305, 0
    %v314 = vsel %vm280, %v307, 0
    %v316 = vsel %vm280, %v309, 0
    %vm318 = vcmask 1042432
    %v320 = vsel %vm318, %v28, 0
    %322 = vmatprep.subr.mxu0 0.0
    %323 = vmatpush1.msra.mxu0 %v320
    %324 = vmatprep.subr.mxu0 0.0
    %325 = vmatpush1.msra.mxu0 0.0
    %326 = vmatprep.subr.mxu0 0.0
    %327 = vmatpush1.msra.mxu0 0.0
    %328 = vmatprep.subr.mxu0 0.0
    %329 = vmatpush1.msra.mxu0 0.0
    %330 = vmatprep.subr.mxu0 0.0
    %331 = vmatpush1.msra.mxu0 0.0
    %332 = vmatprep.subr.mxu0 0.0
    %333 = vmatpush1.msra.mxu0 0.0
    %334 = vmatprep.subr.mxu0 0.0
    %335 = vmatpush1.msra.mxu0 0.0
    %336 = vmatprep.subr.mxu0 0.0
    %337 = vmatpush1.msra.mxu0 0.0
    %338 = vmatprep.subr.mxu0 0.0
    %339 = vmatpush1.msra.mxu0 0.0
    %340 = vmatprep.subr.mxu0 0.0
    %341 = vmatpush1.msra.mxu0 0.0
    %342 = vmatprep.subr.mxu0 0.0
    %343 = vmatpush1.msra.mxu0 0.0
    %344 = vmatprep.subr.mxu0 0.0
    %345 = vmatpush1.msra.mxu0 0.0
    %346 = vmatprep.subr.mxu0 0.0
    %347 = vmatpush1.msra.mxu0 0.0
    %348 = vmatprep.subr.mxu0 0.0
    %349 = vmatpush1.msra.mxu0 0.0
    %350 = vmatprep.subr.mxu0 0.0
    %351 = vmatpush1.msra.mxu0 0.0
    %352 = vmatprep.subr.mxu0 0.0
    %353 = vmatpush1.msra.mxu0 0.0
    %354 = vmatprep.subr.mxu0 0.0
    %355 = vmatpush1.msra.mxu0 0.0
    %356 = vmatprep.subr.mxu0 0.0
    %357 = vmatpush1.msra.mxu0 0.0
    %358 = vmatprep.subr.mxu0 0.0
    %359 = vmatpush1.msra.mxu0 0.0
    %360 = vmatprep.subr.mxu0 0.0
    %361 = vmatpush1.msra.mxu0 0.0
    %362 = vmatprep.subr.mxu0 0.0
    %363 = vmatpush1.msra.mxu0 0.0
    %364 = vmatprep.subr.mxu0 0.0
    %365 = vmatpush1.msra.mxu0 0.0
    %366 = vmatprep.subr.mxu0 0.0
    %367 = vmatpush1.msra.mxu0 0.0
    %368 = vmatprep.subr.mxu0 0.0
    %369 = vmatpush1.msra.mxu0 0.0
    %370 = vmatprep.subr.mxu0 0.0
    %371 = vmatpush1.msra.mxu0 0.0
    %372 = vmatprep.subr.mxu0 0.0
    %373 = vmatpush1.msra.mxu0 0.0
    %374 = vmatprep.subr.mxu0 0.0
    %375 = vmatpush1.msra.mxu0 0.0
    %376 = vmatprep.subr.mxu0 0.0
    %377 = vmatpush1.msra.mxu0 0.0
    %378 = vmatprep.subr.mxu0 0.0
    %379 = vmatpush1.msra.mxu0 0.0
    %380 = vmatprep.subr.mxu0 0.0
    %381 = vmatpush1.msra.mxu0 0.0
    %382 = vmatprep.subr.mxu0 0.0
    %383 = vmatpush1.msra.mxu0 0.0
    %384 = vmatprep.subr.mxu0 0.0
    %385 = vmatpush1.msra.mxu0 0.0
    %386 = vmatprep.mubr.f32.mxu0 0.0
    %387 = vmatmul.mubr.f32.gmra.mrb[0].mxu0 %v310
    %v388 = vpop.f32.mrb[0].mxu0
    %v389 = vadd.f32 0.0, %v388
    %v390 = vpop.f32.mrb[0].mxu0
    %391 = vmatprep.mubr.f32.mxu0 0.0
    %392 = vmatmul.mubr.f32.gmra.mrb[0].mxu0 %v312
    %v393 = vpop.f32.mrb[0].mxu0
    %v394 = vadd.f32 0.0, %v393
    %v395 = vpop.f32.mrb[0].mxu0
    %396 = vmatprep.mubr.f32.mxu0 0.0
    %397 = vmatmul.mubr.f32.gmra.mrb[0].mxu0 %v314
    %v398 = vpop.f32.mrb[0].mxu0
    %v399 = vadd.f32 0.0, %v398
    %v400 = vpop.f32.mrb[0].mxu0
    %401 = vmatprep.mubr.f32.mxu0 0.0
    %402 = vmatmul.mubr.f32.gmra.mrb[0].mxu0 %v316
    %v403 = vpop.f32.mrb[0].mxu0
    %v404 = vadd.f32 0.0, %v403
    %v405 = vpop.f32.mrb[0].mxu0
    %406 = vdwg.mxu0
    %v407 = vadd.f32 %v283, %v301
    %v408 = vadd.f32 %v286, %v301
    %v409 = vadd.f32 %v289, %v301
    %v410 = vadd.f32 %v292, %v301
    %v411 = vmul.f32 %v389, 2.0
    %v412 = vmul.f32 %v394, 2.0
    %v413 = vmul.f32 %v399, 2.0
    %v414 = vmul.f32 %v404, 2.0
    %v415 = vsub.f32 %v407, %v411
    %v416 = vsub.f32 %v408, %v412
    %v417 = vsub.f32 %v409, %v413
    %v418 = vsub.f32 %v410, %v414
    %v419 = vmax.f32 %v415, 0.0
    %v420 = vmax.f32 %v416, 0.0
    %v421 = vmax.f32 %v417, 0.0
    %v422 = vmax.f32 %v418, 0.0
    %v423 = vadd.f32 %v419, 1.0
    %v424 = vadd.f32 %v420, 1.0
    %v425 = vadd.f32 %v421, 1.0
    %v426 = vadd.f32 %v422, 1.0
    %427 = vset.pattern.permute.xlu0 19
    %428 = vperm.xlu0 %427, %v24
    %v429 = vpop.permute.xlu0 %428
    %431 = vset.pattern.permute.xlu0 19
    %432 = vperm.xlu0 %431, %v25
    %v433 = vpop.permute.xlu0 %432
    %435 = vset.pattern.permute.xlu0 19
    %436 = vperm.xlu0 %435, %v26
    %v437 = vpop.permute.xlu0 %436
    %439 = vset.pattern.permute.xlu0 19
    %440 = vperm.xlu0 %439, %v27
    %v441 = vpop.permute.xlu0 %440
    %v443 = vlaneseq
    %v444 = vshrl.u32 %v443, 7
    %v445 = vsub.s32 0, %v444
    %v446 = vrot.slane %v29, %v445
    %vm447 = vcmp.ne.f32.partialorder %v429, %v446
    %vm448 = vcmp.ne.f32.partialorder %v433, %v446
    %vm449 = vcmp.ne.f32.partialorder %v437, %v446
    %vm450 = vcmp.ne.f32.partialorder %v441, %v446
    %v451 = vsel %vm447, 1e+30, %v423
    %v452 = vsel %vm448, 1e+30, %v424
    %v453 = vsel %vm449, 1e+30, %v425
    %v454 = vsel %vm450, 1e+30, %v426
    %v455 = vlaneseq
    %v456 = vand.u32 %v455, 127
    %v461 = vand.u32 %v451, 4294967264
    %v462 = vand.u32 %v452, 4294967264
    %v463 = vand.u32 %v453, 4294967264
    %v464 = vand.u32 %v454, 4294967264
    %v465 = vor.u32 %v461, %v456
    %v466 = vor.u32 %v462, %v456
    %v467 = vor.u32 %v463, %v456
    %v468 = vor.u32 %v464, %v456
    %vm473 = vcmask 261120
    %v474 = vsel %vm473, %v465, inf
    %475 = vmin.xlane.f32.xlu0 %v474
    %v476 = vpop.xlane.xlu0 %475
    %v477 = vsel %vm473, %v466, inf
    %478 = vmin.xlane.f32.xlu0 %v477
    %v479 = vpop.xlane.xlu0 %478
    %v480 = vsel %vm473, %v467, inf
    %481 = vmin.xlane.f32.xlu0 %v480
    %v482 = vpop.xlane.xlu0 %481
    %v483 = vsel %vm473, %v468, inf
    %484 = vmin.xlane.f32.xlu0 %v483
    %v485 = vpop.xlane.xlu0 %484
    %vm486 = vcmp.eq.f32.partialorder %v465, %v476
    %vm487 = vcmp.eq.f32.partialorder %v466, %v479
    %vm488 = vcmp.eq.f32.partialorder %v467, %v482
    %vm489 = vcmp.eq.f32.partialorder %v468, %v485
    %v490 = vsel %vm486, 1, 0
    %v491 = vsel %vm487, 1, 0
    %v492 = vsel %vm488, 1, 0
    %v493 = vsel %vm489, 1, 0
    %v494 = vcvt.s32.f32 %v490
    %v495 = vcvt.s32.f32 %v491
    %v496 = vcvt.s32.f32 %v492
    %v497 = vcvt.s32.f32 %v493
    %v498 = vsel %vm486, 3e+38, %v465
    %v499 = vsel %vm487, 3e+38, %v466
    %v500 = vsel %vm488, 3e+38, %v467
    %v501 = vsel %vm489, 3e+38, %v468
    %v502 = vsel %vm473, %v498, inf
    %503 = vmin.xlane.f32.xlu0 %v502
    %v504 = vpop.xlane.xlu0 %503
    %v505 = vsel %vm473, %v499, inf
    %506 = vmin.xlane.f32.xlu0 %v505
    %v507 = vpop.xlane.xlu0 %506
    %v508 = vsel %vm473, %v500, inf
    %509 = vmin.xlane.f32.xlu0 %v508
    %v510 = vpop.xlane.xlu0 %509
    %v511 = vsel %vm473, %v501, inf
    %512 = vmin.xlane.f32.xlu0 %v511
    %v513 = vpop.xlane.xlu0 %512
    %vm514 = vcmp.eq.f32.partialorder %v498, %v504
    %vm515 = vcmp.eq.f32.partialorder %v499, %v507
    %vm516 = vcmp.eq.f32.partialorder %v500, %v510
    %vm517 = vcmp.eq.f32.partialorder %v501, %v513
    %v518 = vsel %vm514, 1, 0
    %v519 = vsel %vm515, 1, 0
    %v520 = vsel %vm516, 1, 0
    %v521 = vsel %vm517, 1, 0
    %v522 = vcvt.s32.f32 %v518
    %v523 = vcvt.s32.f32 %v519
    %v524 = vcvt.s32.f32 %v520
    %v525 = vcvt.s32.f32 %v521
    %v526 = vsel %vm514, 3e+38, %v498
    %v527 = vsel %vm515, 3e+38, %v499
    %v528 = vsel %vm516, 3e+38, %v500
    %v529 = vsel %vm517, 3e+38, %v501
    %v530 = vsel %vm473, %v526, inf
    %531 = vmin.xlane.f32.xlu0 %v530
    %v532 = vpop.xlane.xlu0 %531
    %v533 = vsel %vm473, %v527, inf
    %534 = vmin.xlane.f32.xlu0 %v533
    %v535 = vpop.xlane.xlu0 %534
    %v536 = vsel %vm473, %v528, inf
    %537 = vmin.xlane.f32.xlu0 %v536
    %v538 = vpop.xlane.xlu0 %537
    %v539 = vsel %vm473, %v529, inf
    %540 = vmin.xlane.f32.xlu0 %v539
    %v541 = vpop.xlane.xlu0 %540
    %vm542 = vcmp.eq.f32.partialorder %v526, %v532
    %vm543 = vcmp.eq.f32.partialorder %v527, %v535
    %vm544 = vcmp.eq.f32.partialorder %v528, %v538
    %vm545 = vcmp.eq.f32.partialorder %v529, %v541
    %v546 = vsel %vm542, 1, 0
    %v547 = vsel %vm543, 1, 0
    %v548 = vsel %vm544, 1, 0
    %v549 = vsel %vm545, 1, 0
    %v550 = vcvt.s32.f32 %v546
    %v551 = vcvt.s32.f32 %v547
    %v552 = vcvt.s32.f32 %v548
    %v553 = vcvt.s32.f32 %v549
    %v554 = vsel %vm542, 3e+38, %v526
    %v555 = vsel %vm543, 3e+38, %v527
    %v556 = vsel %vm544, 3e+38, %v528
    %v557 = vsel %vm545, 3e+38, %v529
    %v558 = vsel %vm473, %v554, inf
    %559 = vmin.xlane.f32.xlu0 %v558
    %v560 = vpop.xlane.xlu0 %559
    %v561 = vsel %vm473, %v555, inf
    %562 = vmin.xlane.f32.xlu0 %v561
    %v563 = vpop.xlane.xlu0 %562
    %v564 = vsel %vm473, %v556, inf
    %565 = vmin.xlane.f32.xlu0 %v564
    %v566 = vpop.xlane.xlu0 %565
    %v567 = vsel %vm473, %v557, inf
    %568 = vmin.xlane.f32.xlu0 %v567
    %v569 = vpop.xlane.xlu0 %568
    %vm570 = vcmp.eq.f32.partialorder %v554, %v560
    %vm571 = vcmp.eq.f32.partialorder %v555, %v563
    %vm572 = vcmp.eq.f32.partialorder %v556, %v566
    %vm573 = vcmp.eq.f32.partialorder %v557, %v569
    %v574 = vsel %vm570, 1, 0
    %v575 = vsel %vm571, 1, 0
    %v576 = vsel %vm572, 1, 0
    %v577 = vsel %vm573, 1, 0
    %v578 = vcvt.s32.f32 %v574
    %v579 = vcvt.s32.f32 %v575
    %v580 = vcvt.s32.f32 %v576
    %v581 = vcvt.s32.f32 %v577
    %v582 = vsel %vm570, 3e+38, %v554
    %v583 = vsel %vm571, 3e+38, %v555
    %v584 = vsel %vm572, 3e+38, %v556
    %v585 = vsel %vm573, 3e+38, %v557
    %v586 = vsel %vm473, %v582, inf
    %587 = vmin.xlane.f32.xlu0 %v586
    %v588 = vpop.xlane.xlu0 %587
    %v589 = vsel %vm473, %v583, inf
    %590 = vmin.xlane.f32.xlu0 %v589
    %v591 = vpop.xlane.xlu0 %590
    %v592 = vsel %vm473, %v584, inf
    %593 = vmin.xlane.f32.xlu0 %v592
    %v594 = vpop.xlane.xlu0 %593
    %v595 = vsel %vm473, %v585, inf
    %596 = vmin.xlane.f32.xlu0 %v595
    %v597 = vpop.xlane.xlu0 %596
    %vm598 = vcmp.eq.f32.partialorder %v582, %v588
    %vm599 = vcmp.eq.f32.partialorder %v583, %v591
    %vm600 = vcmp.eq.f32.partialorder %v584, %v594
    %vm601 = vcmp.eq.f32.partialorder %v585, %v597
    %v602 = vsel %vm598, 1, 0
    %v603 = vsel %vm599, 1, 0
    %v604 = vsel %vm600, 1, 0
    %v605 = vsel %vm601, 1, 0
    %v606 = vcvt.s32.f32 %v602
    %v607 = vcvt.s32.f32 %v603
    %v608 = vcvt.s32.f32 %v604
    %v609 = vcvt.s32.f32 %v605
    %v610 = vsel %vm598, 3e+38, %v582
    %v611 = vsel %vm599, 3e+38, %v583
    %v612 = vsel %vm600, 3e+38, %v584
    %v613 = vsel %vm601, 3e+38, %v585
    %v614 = vsel %vm473, %v610, inf
    %615 = vmin.xlane.f32.xlu0 %v614
    %v616 = vpop.xlane.xlu0 %615
    %v617 = vsel %vm473, %v611, inf
    %618 = vmin.xlane.f32.xlu0 %v617
    %v619 = vpop.xlane.xlu0 %618
    %v620 = vsel %vm473, %v612, inf
    %621 = vmin.xlane.f32.xlu0 %v620
    %v622 = vpop.xlane.xlu0 %621
    %v623 = vsel %vm473, %v613, inf
    %624 = vmin.xlane.f32.xlu0 %v623
    %v625 = vpop.xlane.xlu0 %624
    %vm626 = vcmp.eq.f32.partialorder %v610, %v616
    %vm627 = vcmp.eq.f32.partialorder %v611, %v619
    %vm628 = vcmp.eq.f32.partialorder %v612, %v622
    %vm629 = vcmp.eq.f32.partialorder %v613, %v625
    %v630 = vsel %vm626, 1, 0
    %v631 = vsel %vm627, 1, 0
    %v632 = vsel %vm628, 1, 0
    %v633 = vsel %vm629, 1, 0
    %v634 = vcvt.s32.f32 %v630
    %v635 = vcvt.s32.f32 %v631
    %v636 = vcvt.s32.f32 %v632
    %v637 = vcvt.s32.f32 %v633
    %v638 = vsel %vm626, 3e+38, %v610
    %v639 = vsel %vm627, 3e+38, %v611
    %v640 = vsel %vm628, 3e+38, %v612
    %v641 = vsel %vm629, 3e+38, %v613
    %v642 = vsel %vm473, %v638, inf
    %643 = vmin.xlane.f32.xlu0 %v642
    %v644 = vpop.xlane.xlu0 %643
    %v645 = vsel %vm473, %v639, inf
    %646 = vmin.xlane.f32.xlu0 %v645
    %v647 = vpop.xlane.xlu0 %646
    %v648 = vsel %vm473, %v640, inf
    %649 = vmin.xlane.f32.xlu0 %v648
    %v650 = vpop.xlane.xlu0 %649
    %v651 = vsel %vm473, %v641, inf
    %652 = vmin.xlane.f32.xlu0 %v651
    %v653 = vpop.xlane.xlu0 %652
    %vm654 = vcmp.eq.f32.partialorder %v638, %v644
    %vm655 = vcmp.eq.f32.partialorder %v639, %v647
    %vm656 = vcmp.eq.f32.partialorder %v640, %v650
    %vm657 = vcmp.eq.f32.partialorder %v641, %v653
    %v658 = vsel %vm654, 1, 0
    %v659 = vsel %vm655, 1, 0
    %v660 = vsel %vm656, 1, 0
    %v661 = vsel %vm657, 1, 0
    %v662 = vcvt.s32.f32 %v658
    %v663 = vcvt.s32.f32 %v659
    %v664 = vcvt.s32.f32 %v660
    %v665 = vcvt.s32.f32 %v661
    %v666 = vsel %vm654, 3e+38, %v638
    %v667 = vsel %vm655, 3e+38, %v639
    %v668 = vsel %vm656, 3e+38, %v640
    %v669 = vsel %vm657, 3e+38, %v641
    %v670 = vsel %vm473, %v666, inf
    %671 = vmin.xlane.f32.xlu0 %v670
    %v672 = vpop.xlane.xlu0 %671
    %v673 = vsel %vm473, %v667, inf
    %674 = vmin.xlane.f32.xlu0 %v673
    %v675 = vpop.xlane.xlu0 %674
    %v676 = vsel %vm473, %v668, inf
    %677 = vmin.xlane.f32.xlu0 %v676
    %v678 = vpop.xlane.xlu0 %677
    %v679 = vsel %vm473, %v669, inf
    %680 = vmin.xlane.f32.xlu0 %v679
    %v681 = vpop.xlane.xlu0 %680
    %vm682 = vcmp.eq.f32.partialorder %v666, %v672
    %vm683 = vcmp.eq.f32.partialorder %v667, %v675
    %vm684 = vcmp.eq.f32.partialorder %v668, %v678
    %vm685 = vcmp.eq.f32.partialorder %v669, %v681
    %v686 = vsel %vm682, 1, 0
    %v687 = vsel %vm683, 1, 0
    %v688 = vsel %vm684, 1, 0
    %v689 = vsel %vm685, 1, 0
    %v690 = vcvt.s32.f32 %v686
    %v691 = vcvt.s32.f32 %v687
    %v692 = vcvt.s32.f32 %v688
    %v693 = vcvt.s32.f32 %v689
    %v694 = vlaneseq
    %v695 = vshrl.u32 %v694, 7
    %v696 = vadd.s32 %v695, 8
    %v697 = vadd.s32 %v695, 16
    %v698 = vadd.s32 %v695, 24
    %v699 = vadd.s32 %v695, 32
    %v700 = vadd.s32 %v695, 40
    %v701 = vadd.s32 %v695, 48
    %v702 = vadd.s32 %v695, 56
    %v703 = vadd.s32 %v695, 64
    %v704 = vadd.s32 %v695, 72
    %v705 = vadd.s32 %v695, 80
    %v706 = vadd.s32 %v695, 88
    %v707 = vadd.s32 %v695, 96
    %v708 = vadd.s32 %v695, 104
    %v709 = vadd.s32 %v695, 112
    %v710 = vadd.s32 %v695, 120
    %v711 = vadd.s32 %v695, 128
    %v712 = vadd.s32 %v695, 136
    %v713 = vadd.s32 %v695, 144
    %v714 = vadd.s32 %v695, 152
    %v715 = vadd.s32 %v695, 160
    %v716 = vadd.s32 %v695, 168
    %v717 = vadd.s32 %v695, 176
    %v718 = vadd.s32 %v695, 184
    %v719 = vadd.s32 %v695, 192
    %v720 = vadd.s32 %v695, 200
    %v721 = vadd.s32 %v695, 208
    %v722 = vadd.s32 %v695, 216
    %v723 = vadd.s32 %v695, 224
    %v724 = vadd.s32 %v695, 232
    %v725 = vadd.s32 %v695, 240
    %v726 = vadd.s32 %v695, 248
    %v727 = vand.u32 %v695, 31
    %v728 = vand.u32 %v696, 31
    %v729 = vand.u32 %v697, 31
    %v730 = vand.u32 %v698, 31
    %v731 = vand.u32 %v699, 31
    %v732 = vand.u32 %v700, 31
    %v733 = vand.u32 %v701, 31
    %v734 = vand.u32 %v702, 31
    %v735 = vand.u32 %v703, 31
    %v736 = vand.u32 %v704, 31
    %v737 = vand.u32 %v705, 31
    %v738 = vand.u32 %v706, 31
    %v739 = vand.u32 %v707, 31
    %v740 = vand.u32 %v708, 31
    %v741 = vand.u32 %v709, 31
    %v742 = vand.u32 %v710, 31
    %v743 = vand.u32 %v711, 31
    %v744 = vand.u32 %v712, 31
    %v745 = vand.u32 %v713, 31
    %v746 = vand.u32 %v714, 31
    %v747 = vand.u32 %v715, 31
    %v748 = vand.u32 %v716, 31
    %v749 = vand.u32 %v717, 31
    %v750 = vand.u32 %v718, 31
    %v751 = vand.u32 %v719, 31
    %v752 = vand.u32 %v720, 31
    %v753 = vand.u32 %v721, 31
    %v754 = vand.u32 %v722, 31
    %v755 = vand.u32 %v723, 31
    %v756 = vand.u32 %v724, 31
    %v757 = vand.u32 %v725, 31
    %v758 = vand.u32 %v726, 31
    %vm759 = vcmp.eq.s32.totalorder %v456, %v727
    %vm760 = vcmp.eq.s32.totalorder %v456, %v728
    %vm761 = vcmp.eq.s32.totalorder %v456, %v729
    %vm762 = vcmp.eq.s32.totalorder %v456, %v730
    %vm763 = vcmp.eq.s32.totalorder %v456, %v731
    %vm764 = vcmp.eq.s32.totalorder %v456, %v732
    %vm765 = vcmp.eq.s32.totalorder %v456, %v733
    %vm766 = vcmp.eq.s32.totalorder %v456, %v734
    %vm767 = vcmp.eq.s32.totalorder %v456, %v735
    %vm768 = vcmp.eq.s32.totalorder %v456, %v736
    %vm769 = vcmp.eq.s32.totalorder %v456, %v737
    %vm770 = vcmp.eq.s32.totalorder %v456, %v738
    %vm771 = vcmp.eq.s32.totalorder %v456, %v739
    %vm772 = vcmp.eq.s32.totalorder %v456, %v740
    %vm773 = vcmp.eq.s32.totalorder %v456, %v741
    %vm774 = vcmp.eq.s32.totalorder %v456, %v742
    %vm775 = vcmp.eq.s32.totalorder %v456, %v743
    %vm776 = vcmp.eq.s32.totalorder %v456, %v744
    %vm777 = vcmp.eq.s32.totalorder %v456, %v745
    %vm778 = vcmp.eq.s32.totalorder %v456, %v746
    %vm779 = vcmp.eq.s32.totalorder %v456, %v747
    %vm780 = vcmp.eq.s32.totalorder %v456, %v748
    %vm781 = vcmp.eq.s32.totalorder %v456, %v749
    %vm782 = vcmp.eq.s32.totalorder %v456, %v750
    %vm783 = vcmp.eq.s32.totalorder %v456, %v751
    %vm784 = vcmp.eq.s32.totalorder %v456, %v752
    %vm785 = vcmp.eq.s32.totalorder %v456, %v753
    %vm786 = vcmp.eq.s32.totalorder %v456, %v754
    %vm787 = vcmp.eq.s32.totalorder %v456, %v755
    %vm788 = vcmp.eq.s32.totalorder %v456, %v756
    %vm789 = vcmp.eq.s32.totalorder %v456, %v757
    %vm790 = vcmp.eq.s32.totalorder %v456, %v758
    %v791 = vsel %vm759, 1, 0
    %v792 = vsel %vm760, 1, 0
    %v793 = vsel %vm761, 1, 0
    %v794 = vsel %vm762, 1, 0
    %v795 = vsel %vm763, 1, 0
    %v796 = vsel %vm764, 1, 0
    %v797 = vsel %vm765, 1, 0
    %v798 = vsel %vm766, 1, 0
    %v799 = vsel %vm767, 1, 0
    %v800 = vsel %vm768, 1, 0
    %v801 = vsel %vm769, 1, 0
    %v802 = vsel %vm770, 1, 0
    %v803 = vsel %vm771, 1, 0
    %v804 = vsel %vm772, 1, 0
    %v805 = vsel %vm773, 1, 0
    %v806 = vsel %vm774, 1, 0
    %v807 = vsel %vm775, 1, 0
    %v808 = vsel %vm776, 1, 0
    %v809 = vsel %vm777, 1, 0
    %v810 = vsel %vm778, 1, 0
    %v811 = vsel %vm779, 1, 0
    %v812 = vsel %vm780, 1, 0
    %v813 = vsel %vm781, 1, 0
    %v814 = vsel %vm782, 1, 0
    %v815 = vsel %vm783, 1, 0
    %v816 = vsel %vm784, 1, 0
    %v817 = vsel %vm785, 1, 0
    %v818 = vsel %vm786, 1, 0
    %v819 = vsel %vm787, 1, 0
    %v820 = vsel %vm788, 1, 0
    %v821 = vsel %vm789, 1, 0
    %v822 = vsel %vm790, 1, 0
    %v823 = vcvt.s32.f32 %v791
    %v824 = vcvt.s32.f32 %v792
    %v825 = vcvt.s32.f32 %v793
    %v826 = vcvt.s32.f32 %v794
    %v827 = vcvt.s32.f32 %v795
    %v828 = vcvt.s32.f32 %v796
    %v829 = vcvt.s32.f32 %v797
    %v830 = vcvt.s32.f32 %v798
    %v831 = vcvt.s32.f32 %v799
    %v832 = vcvt.s32.f32 %v800
    %v833 = vcvt.s32.f32 %v801
    %v834 = vcvt.s32.f32 %v802
    %v835 = vcvt.s32.f32 %v803
    %v836 = vcvt.s32.f32 %v804
    %v837 = vcvt.s32.f32 %v805
    %v838 = vcvt.s32.f32 %v806
    %v839 = vcvt.s32.f32 %v807
    %v840 = vcvt.s32.f32 %v808
    %v841 = vcvt.s32.f32 %v809
    %v842 = vcvt.s32.f32 %v810
    %v843 = vcvt.s32.f32 %v811
    %v844 = vcvt.s32.f32 %v812
    %v845 = vcvt.s32.f32 %v813
    %v846 = vcvt.s32.f32 %v814
    %v847 = vcvt.s32.f32 %v815
    %v848 = vcvt.s32.f32 %v816
    %v849 = vcvt.s32.f32 %v817
    %v850 = vcvt.s32.f32 %v818
    %v851 = vcvt.s32.f32 %v819
    %v852 = vcvt.s32.f32 %v820
    %v853 = vcvt.s32.f32 %v821
    %v854 = vcvt.s32.f32 %v822
    %887 = vrot.lane.b32.xlu0 %v823, 32
    %v888 = vpop.permute.xlu0 %887
    %889 = vrot.lane.b32.xlu0 %v824, 32
    %v890 = vpop.permute.xlu0 %889
    %891 = vrot.lane.b32.xlu0 %v825, 32
    %v892 = vpop.permute.xlu0 %891
    %893 = vrot.lane.b32.xlu0 %v826, 32
    %v894 = vpop.permute.xlu0 %893
    %895 = vrot.lane.b32.xlu0 %v827, 32
    %v896 = vpop.permute.xlu0 %895
    %897 = vrot.lane.b32.xlu0 %v828, 32
    %v898 = vpop.permute.xlu0 %897
    %899 = vrot.lane.b32.xlu0 %v829, 32
    %v900 = vpop.permute.xlu0 %899
    %901 = vrot.lane.b32.xlu0 %v830, 32
    %v902 = vpop.permute.xlu0 %901
    %903 = vrot.lane.b32.xlu0 %v831, 32
    %v904 = vpop.permute.xlu0 %903
    %905 = vrot.lane.b32.xlu0 %v832, 32
    %v906 = vpop.permute.xlu0 %905
    %907 = vrot.lane.b32.xlu0 %v833, 32
    %v908 = vpop.permute.xlu0 %907
    %909 = vrot.lane.b32.xlu0 %v834, 32
    %v910 = vpop.permute.xlu0 %909
    %911 = vrot.lane.b32.xlu0 %v835, 32
    %v912 = vpop.permute.xlu0 %911
    %913 = vrot.lane.b32.xlu0 %v836, 32
    %v914 = vpop.permute.xlu0 %913
    %915 = vrot.lane.b32.xlu0 %v837, 32
    %v916 = vpop.permute.xlu0 %915
    %917 = vrot.lane.b32.xlu0 %v838, 32
    %v918 = vpop.permute.xlu0 %917
    %919 = vrot.lane.b32.xlu0 %v839, 32
    %v920 = vpop.permute.xlu0 %919
    %921 = vrot.lane.b32.xlu0 %v840, 32
    %v922 = vpop.permute.xlu0 %921
    %923 = vrot.lane.b32.xlu0 %v841, 32
    %v924 = vpop.permute.xlu0 %923
    %925 = vrot.lane.b32.xlu0 %v842, 32
    %v926 = vpop.permute.xlu0 %925
    %927 = vrot.lane.b32.xlu0 %v843, 32
    %v928 = vpop.permute.xlu0 %927
    %929 = vrot.lane.b32.xlu0 %v844, 32
    %v930 = vpop.permute.xlu0 %929
    %931 = vrot.lane.b32.xlu0 %v845, 32
    %v932 = vpop.permute.xlu0 %931
    %933 = vrot.lane.b32.xlu0 %v846, 32
    %v934 = vpop.permute.xlu0 %933
    %935 = vrot.lane.b32.xlu0 %v847, 32
    %v936 = vpop.permute.xlu0 %935
    %937 = vrot.lane.b32.xlu0 %v848, 32
    %v938 = vpop.permute.xlu0 %937
    %939 = vrot.lane.b32.xlu0 %v849, 32
    %v940 = vpop.permute.xlu0 %939
    %941 = vrot.lane.b32.xlu0 %v850, 32
    %v942 = vpop.permute.xlu0 %941
    %943 = vrot.lane.b32.xlu0 %v851, 32
    %v944 = vpop.permute.xlu0 %943
    %945 = vrot.lane.b32.xlu0 %v852, 32
    %v946 = vpop.permute.xlu0 %945
    %947 = vrot.lane.b32.xlu0 %v853, 32
    %v948 = vpop.permute.xlu0 %947
    %949 = vrot.lane.b32.xlu0 %v854, 32
    %v950 = vpop.permute.xlu0 %949
    %v983 = vsel %vm473, %v494, %v888
    %v984 = vsel %vm473, %v495, %v890
    %v985 = vsel %vm473, %v496, %v892
    %v986 = vsel %vm473, %v497, %v894
    %v987 = vsel %vm473, %v522, %v896
    %v988 = vsel %vm473, %v523, %v898
    %v989 = vsel %vm473, %v524, %v900
    %v990 = vsel %vm473, %v525, %v902
    %v991 = vsel %vm473, %v550, %v904
    %v992 = vsel %vm473, %v551, %v906
    %v993 = vsel %vm473, %v552, %v908
    %v994 = vsel %vm473, %v553, %v910
    %v995 = vsel %vm473, %v578, %v912
    %v996 = vsel %vm473, %v579, %v914
    %v997 = vsel %vm473, %v580, %v916
    %v998 = vsel %vm473, %v581, %v918
    %v999 = vsel %vm473, %v606, %v920
    %v1000 = vsel %vm473, %v607, %v922
    %v1001 = vsel %vm473, %v608, %v924
    %v1002 = vsel %vm473, %v609, %v926
    %v1003 = vsel %vm473, %v634, %v928
    %v1004 = vsel %vm473, %v635, %v930
    %v1005 = vsel %vm473, %v636, %v932
    %v1006 = vsel %vm473, %v637, %v934
    %v1007 = vsel %vm473, %v662, %v936
    %v1008 = vsel %vm473, %v663, %v938
    %v1009 = vsel %vm473, %v664, %v940
    %v1010 = vsel %vm473, %v665, %v942
    %v1011 = vsel %vm473, %v690, %v944
    %v1012 = vsel %vm473, %v691, %v946
    %v1013 = vsel %vm473, %v692, %v948
    %v1014 = vsel %vm473, %v693, %v950
    %v1015 = vpack.c.bf16 %v984, %v983
    %v1016 = vpack.c.bf16 %v986, %v985
    %v1017 = vpack.c.bf16 %v988, %v987
    %v1018 = vpack.c.bf16 %v990, %v989
    %v1019 = vpack.c.bf16 %v992, %v991
    %v1020 = vpack.c.bf16 %v994, %v993
    %v1021 = vpack.c.bf16 %v996, %v995
    %v1022 = vpack.c.bf16 %v998, %v997
    %v1023 = vpack.c.bf16 %v1000, %v999
    %v1024 = vpack.c.bf16 %v1002, %v1001
    %v1025 = vpack.c.bf16 %v1004, %v1003
    %v1026 = vpack.c.bf16 %v1006, %v1005
    %v1027 = vpack.c.bf16 %v1008, %v1007
    %v1028 = vpack.c.bf16 %v1010, %v1009
    %v1029 = vpack.c.bf16 %v1012, %v1011
    %v1030 = vpack.c.bf16 %v1014, %v1013
    %1035 = vrot.lane.b32.xlu0 %v242, 112
    %v1036 = vpop.permute.xlu0 %1035
    %1037 = vrot.lane.b32.xlu0 %v247, 112
    %v1038 = vpop.permute.xlu0 %1037
    %1039 = vrot.lane.b32.xlu0 %v252, 112
    %v1040 = vpop.permute.xlu0 %1039
    %1041 = vrot.lane.b32.xlu0 %v257, 112
    %v1042 = vpop.permute.xlu0 %1041
    %1047 = vrot.lane.b32.xlu0 %v24, 16
    %v1048 = vpop.permute.xlu0 %1047
    %1049 = vrot.lane.b32.xlu0 %v25, 16
    %v1050 = vpop.permute.xlu0 %1049
    %1051 = vrot.lane.b32.xlu0 %v26, 16
    %v1052 = vpop.permute.xlu0 %1051
    %1053 = vrot.lane.b32.xlu0 %v27, 16
    %v1054 = vpop.permute.xlu0 %1053
    %v1059 = vsel %vm473, %v1036, %v1048
    %v1060 = vsel %vm473, %v1038, %v1050
    %v1061 = vsel %vm473, %v1040, %v1052
    %v1062 = vsel %vm473, %v1042, %v1054
    %v1063 = vsub.f32 0.0, %v242
    %v1064 = vsub.f32 0.0, %v247
    %v1065 = vsub.f32 0.0, %v252
    %v1066 = vsub.f32 0.0, %v257
    %v1067 = vsub.f32 0.0, %v24
    %v1068 = vsub.f32 0.0, %v25
    %v1069 = vsub.f32 0.0, %v26
    %v1070 = vsub.f32 0.0, %v27
    %1075 = vrot.lane.b32.xlu0 %v1067, 16
    %v1076 = vpop.permute.xlu0 %1075
    %1077 = vrot.lane.b32.xlu0 %v1068, 16
    %v1078 = vpop.permute.xlu0 %1077
    %1079 = vrot.lane.b32.xlu0 %v1069, 16
    %v1080 = vpop.permute.xlu0 %1079
    %1081 = vrot.lane.b32.xlu0 %v1070, 16
    %v1082 = vpop.permute.xlu0 %1081
    %v1087 = vsel %vm57, %v1063, 0.0
    %v1088 = vsel %vm57, %v1064, 0.0
    %v1089 = vsel %vm57, %v1065, 0.0
    %v1090 = vsel %vm57, %v1066, 0.0
    %v1091 = vsel %vm473, %v1087, %v1076
    %v1092 = vsel %vm473, %v1088, %v1078
    %v1093 = vsel %vm473, %v1089, %v1080
    %v1094 = vsel %vm473, %v1090, %v1082
    %v1095 = vpack.c.bf16 %v1060, %v1059
    %v1096 = vpack.c.bf16 %v1062, %v1061
    %v1097 = vpack.c.bf16 %v1092, %v1091
    %v1098 = vpack.c.bf16 %v1094, %v1093
    %vm1099 = vcmask 523264
    %v1101 = vsel %vm1099, %v1015, 0
    %v1104 = vsel %vm1099, %v1016, 0
    %v1107 = vsel %vm1099, %v1017, 0
    %v1110 = vsel %vm1099, %v1018, 0
    %v1113 = vsel %vm1099, %v1019, 0
    %v1116 = vsel %vm1099, %v1020, 0
    %v1119 = vsel %vm1099, %v1021, 0
    %v1122 = vsel %vm1099, %v1022, 0
    %v1125 = vsel %vm1099, %v1023, 0
    %v1128 = vsel %vm1099, %v1024, 0
    %v1131 = vsel %vm1099, %v1025, 0
    %v1134 = vsel %vm1099, %v1026, 0
    %v1137 = vsel %vm1099, %v1027, 0
    %v1140 = vsel %vm1099, %v1028, 0
    %v1143 = vsel %vm1099, %v1029, 0
    %v1146 = vsel %vm1099, %v1030, 0
    %1148 = vmatprep.subr.bf16.mxu0 0
    %1149 = vmatpush1.bf16.msra.mxu0 %v1095
    %1150 = vmatprep.subr.bf16.mxu0 0
    %1151 = vmatpush1.bf16.msra.mxu0 %v1096
    %1152 = vmatprep.subr.bf16.mxu0 0
    %1153 = vmatpush1.bf16.msra.mxu0 %v1097
    %1154 = vmatprep.subr.bf16.mxu0 0
    %1155 = vmatpush1.bf16.msra.mxu0 %v1098
    %1156 = vmatprep.subr.bf16.mxu0 0
    %1157 = vmatpush1.bf16.msra.mxu0 0
    %1158 = vmatprep.subr.bf16.mxu0 0
    %1159 = vmatpush1.bf16.msra.mxu0 0
    %1160 = vmatprep.subr.bf16.mxu0 0
    %1161 = vmatpush1.bf16.msra.mxu0 0
    %1162 = vmatprep.subr.bf16.mxu0 0
    %1163 = vmatpush1.bf16.msra.mxu0 0
    %1164 = vmatprep.subr.bf16.mxu0 0
    %1165 = vmatpush1.bf16.msra.mxu0 0
    %1166 = vmatprep.subr.bf16.mxu0 0
    %1167 = vmatpush1.bf16.msra.mxu0 0
    %1168 = vmatprep.subr.bf16.mxu0 0
    %1169 = vmatpush1.bf16.msra.mxu0 0
    %1170 = vmatprep.subr.bf16.mxu0 0
    %1171 = vmatpush1.bf16.msra.mxu0 0
    %1172 = vmatprep.subr.bf16.mxu0 0
    %1173 = vmatpush1.bf16.msra.mxu0 0
    %1174 = vmatprep.subr.bf16.mxu0 0
    %1175 = vmatpush1.bf16.msra.mxu0 0
    %1176 = vmatprep.subr.bf16.mxu0 0
    %1177 = vmatpush1.bf16.msra.mxu0 0
    %1178 = vmatprep.subr.bf16.mxu0 0
    %1179 = vmatpush1.bf16.msra.mxu0 0
    %1180 = vmatprep.mubr.bf16.mxu0 0
    %1181 = vmatmul.mubr.bf16.gmra.mrb[0].mxu0 %v1101
    %v1182 = vpop.f32.mrb[0].mxu0
    %v1183 = vadd.f32 0.0, %v1182
    %v1184 = vpop.f32.mrb[0].mxu0
    %v1185 = vpop.f32.mrb[0].mxu0
    %v1186 = vadd.f32 0.0, %v1185
    %v1187 = vpop.f32.mrb[0].mxu0
    %1188 = vmatprep.mubr.bf16.mxu0 0
    %1189 = vmatmul.mubr.bf16.gmra.mrb[0].mxu0 %v1104
    %v1190 = vpop.f32.mrb[0].mxu0
    %v1191 = vadd.f32 0.0, %v1190
    %v1192 = vpop.f32.mrb[0].mxu0
    %v1193 = vpop.f32.mrb[0].mxu0
    %v1194 = vadd.f32 0.0, %v1193
    %v1195 = vpop.f32.mrb[0].mxu0
    %1196 = vmatprep.mubr.bf16.mxu0 0
    %1197 = vmatmul.mubr.bf16.gmra.mrb[0].mxu0 %v1107
    %v1198 = vpop.f32.mrb[0].mxu0
    %v1199 = vadd.f32 0.0, %v1198
    %v1200 = vpop.f32.mrb[0].mxu0
    %v1201 = vpop.f32.mrb[0].mxu0
    %v1202 = vadd.f32 0.0, %v1201
    %v1203 = vpop.f32.mrb[0].mxu0
    %1204 = vmatprep.mubr.bf16.mxu0 0
    %1205 = vmatmul.mubr.bf16.gmra.mrb[0].mxu0 %v1110
    %v1206 = vpop.f32.mrb[0].mxu0
    %v1207 = vadd.f32 0.0, %v1206
    %v1208 = vpop.f32.mrb[0].mxu0
    %v1209 = vpop.f32.mrb[0].mxu0
    %v1210 = vadd.f32 0.0, %v1209
    %v1211 = vpop.f32.mrb[0].mxu0
    %1212 = vmatprep.mubr.bf16.mxu0 0
    %1213 = vmatmul.mubr.bf16.gmra.mrb[0].mxu0 %v1113
    %v1214 = vpop.f32.mrb[0].mxu0
    %v1215 = vadd.f32 0.0, %v1214
    %v1216 = vpop.f32.mrb[0].mxu0
    %v1217 = vpop.f32.mrb[0].mxu0
    %v1218 = vadd.f32 0.0, %v1217
    %v1219 = vpop.f32.mrb[0].mxu0
    %1220 = vmatprep.mubr.bf16.mxu0 0
    %1221 = vmatmul.mubr.bf16.gmra.mrb[0].mxu0 %v1116
    %v1222 = vpop.f32.mrb[0].mxu0
    %v1223 = vadd.f32 0.0, %v1222
    %v1224 = vpop.f32.mrb[0].mxu0
    %v1225 = vpop.f32.mrb[0].mxu0
    %v1226 = vadd.f32 0.0, %v1225
    %v1227 = vpop.f32.mrb[0].mxu0
    %1228 = vmatprep.mubr.bf16.mxu0 0
    %1229 = vmatmul.mubr.bf16.gmra.mrb[0].mxu0 %v1119
    %v1230 = vpop.f32.mrb[0].mxu0
    %v1231 = vadd.f32 0.0, %v1230
    %v1232 = vpop.f32.mrb[0].mxu0
    %v1233 = vpop.f32.mrb[0].mxu0
    %v1234 = vadd.f32 0.0, %v1233
    %v1235 = vpop.f32.mrb[0].mxu0
    %1236 = vmatprep.mubr.bf16.mxu0 0
    %1237 = vmatmul.mubr.bf16.gmra.mrb[0].mxu0 %v1122
    %v1238 = vpop.f32.mrb[0].mxu0
    %v1239 = vadd.f32 0.0, %v1238
    %v1240 = vpop.f32.mrb[0].mxu0
    %v1241 = vpop.f32.mrb[0].mxu0
    %v1242 = vadd.f32 0.0, %v1241
    %v1243 = vpop.f32.mrb[0].mxu0
    %1244 = vmatprep.mubr.bf16.mxu0 0
    %1245 = vmatmul.mubr.bf16.gmra.mrb[0].mxu0 %v1125
    %v1246 = vpop.f32.mrb[0].mxu0
    %v1247 = vadd.f32 0.0, %v1246
    %v1248 = vpop.f32.mrb[0].mxu0
    %v1249 = vpop.f32.mrb[0].mxu0
    %v1250 = vadd.f32 0.0, %v1249
    %v1251 = vpop.f32.mrb[0].mxu0
    %1252 = vmatprep.mubr.bf16.mxu0 0
    %1253 = vmatmul.mubr.bf16.gmra.mrb[0].mxu0 %v1128
    %v1254 = vpop.f32.mrb[0].mxu0
    %v1255 = vadd.f32 0.0, %v1254
    %v1256 = vpop.f32.mrb[0].mxu0
    %v1257 = vpop.f32.mrb[0].mxu0
    %v1258 = vadd.f32 0.0, %v1257
    %v1259 = vpop.f32.mrb[0].mxu0
    %1260 = vmatprep.mubr.bf16.mxu0 0
    %1261 = vmatmul.mubr.bf16.gmra.mrb[0].mxu0 %v1131
    %v1262 = vpop.f32.mrb[0].mxu0
    %v1263 = vadd.f32 0.0, %v1262
    %v1264 = vpop.f32.mrb[0].mxu0
    %v1265 = vpop.f32.mrb[0].mxu0
    %v1266 = vadd.f32 0.0, %v1265
    %v1267 = vpop.f32.mrb[0].mxu0
    %1268 = vmatprep.mubr.bf16.mxu0 0
    %1269 = vmatmul.mubr.bf16.gmra.mrb[0].mxu0 %v1134
    %v1270 = vpop.f32.mrb[0].mxu0
    %v1271 = vadd.f32 0.0, %v1270
    %v1272 = vpop.f32.mrb[0].mxu0
    %v1273 = vpop.f32.mrb[0].mxu0
    %v1274 = vadd.f32 0.0, %v1273
    %v1275 = vpop.f32.mrb[0].mxu0
    %1276 = vmatprep.mubr.bf16.mxu0 0
    %1277 = vmatmul.mubr.bf16.gmra.mrb[0].mxu0 %v1137
    %v1278 = vpop.f32.mrb[0].mxu0
    %v1279 = vadd.f32 0.0, %v1278
    %v1280 = vpop.f32.mrb[0].mxu0
    %v1281 = vpop.f32.mrb[0].mxu0
    %v1282 = vadd.f32 0.0, %v1281
    %v1283 = vpop.f32.mrb[0].mxu0
    %1284 = vmatprep.mubr.bf16.mxu0 0
    %1285 = vmatmul.mubr.bf16.gmra.mrb[0].mxu0 %v1140
    %v1286 = vpop.f32.mrb[0].mxu0
    %v1287 = vadd.f32 0.0, %v1286
    %v1288 = vpop.f32.mrb[0].mxu0
    %v1289 = vpop.f32.mrb[0].mxu0
    %v1290 = vadd.f32 0.0, %v1289
    %v1291 = vpop.f32.mrb[0].mxu0
    %1292 = vmatprep.mubr.bf16.mxu0 0
    %1293 = vmatmul.mubr.bf16.gmra.mrb[0].mxu0 %v1143
    %v1294 = vpop.f32.mrb[0].mxu0
    %v1295 = vadd.f32 0.0, %v1294
    %v1296 = vpop.f32.mrb[0].mxu0
    %v1297 = vpop.f32.mrb[0].mxu0
    %v1298 = vadd.f32 0.0, %v1297
    %v1299 = vpop.f32.mrb[0].mxu0
    %1300 = vmatprep.mubr.bf16.mxu0 0
    %1301 = vmatmul.mubr.bf16.gmra.mrb[0].mxu0 %v1146
    %v1302 = vpop.f32.mrb[0].mxu0
    %v1303 = vadd.f32 0.0, %v1302
    %v1304 = vpop.f32.mrb[0].mxu0
    %v1305 = vpop.f32.mrb[0].mxu0
    %v1306 = vadd.f32 0.0, %v1305
    %v1307 = vpop.f32.mrb[0].mxu0
    %1308 = vdwg.mxu0
    %v1309 = vlaneseq
    %v1310 = vshrl.u32 %v1309, 7
    %v1311 = vsub.s32 0, %v1310
    %v1312 = vrot.slane %v36, %v1311
    %1345 = vrot.lane.b32.xlu0 %v1183, 96
    %v1346 = vpop.permute.xlu0 %1345
    %1347 = vrot.lane.b32.xlu0 %v1186, 96
    %v1348 = vpop.permute.xlu0 %1347
    %1349 = vrot.lane.b32.xlu0 %v1191, 96
    %v1350 = vpop.permute.xlu0 %1349
    %1351 = vrot.lane.b32.xlu0 %v1194, 96
    %v1352 = vpop.permute.xlu0 %1351
    %1353 = vrot.lane.b32.xlu0 %v1199, 96
    %v1354 = vpop.permute.xlu0 %1353
    %1355 = vrot.lane.b32.xlu0 %v1202, 96
    %v1356 = vpop.permute.xlu0 %1355
    %1357 = vrot.lane.b32.xlu0 %v1207, 96
    %v1358 = vpop.permute.xlu0 %1357
    %1359 = vrot.lane.b32.xlu0 %v1210, 96
    %v1360 = vpop.permute.xlu0 %1359
    %1361 = vrot.lane.b32.xlu0 %v1215, 96
    %v1362 = vpop.permute.xlu0 %1361
    %1363 = vrot.lane.b32.xlu0 %v1218, 96
    %v1364 = vpop.permute.xlu0 %1363
    %1365 = vrot.lane.b32.xlu0 %v1223, 96
    %v1366 = vpop.permute.xlu0 %1365
    %1367 = vrot.lane.b32.xlu0 %v1226, 96
    %v1368 = vpop.permute.xlu0 %1367
    %1369 = vrot.lane.b32.xlu0 %v1231, 96
    %v1370 = vpop.permute.xlu0 %1369
    %1371 = vrot.lane.b32.xlu0 %v1234, 96
    %v1372 = vpop.permute.xlu0 %1371
    %1373 = vrot.lane.b32.xlu0 %v1239, 96
    %v1374 = vpop.permute.xlu0 %1373
    %1375 = vrot.lane.b32.xlu0 %v1242, 96
    %v1376 = vpop.permute.xlu0 %1375
    %1377 = vrot.lane.b32.xlu0 %v1247, 96
    %v1378 = vpop.permute.xlu0 %1377
    %1379 = vrot.lane.b32.xlu0 %v1250, 96
    %v1380 = vpop.permute.xlu0 %1379
    %1381 = vrot.lane.b32.xlu0 %v1255, 96
    %v1382 = vpop.permute.xlu0 %1381
    %1383 = vrot.lane.b32.xlu0 %v1258, 96
    %v1384 = vpop.permute.xlu0 %1383
    %1385 = vrot.lane.b32.xlu0 %v1263, 96
    %v1386 = vpop.permute.xlu0 %1385
    %1387 = vrot.lane.b32.xlu0 %v1266, 96
    %v1388 = vpop.permute.xlu0 %1387
    %1389 = vrot.lane.b32.xlu0 %v1271, 96
    %v1390 = vpop.permute.xlu0 %1389
    %1391 = vrot.lane.b32.xlu0 %v1274, 96
    %v1392 = vpop.permute.xlu0 %1391
    %1393 = vrot.lane.b32.xlu0 %v1279, 96
    %v1394 = vpop.permute.xlu0 %1393
    %1395 = vrot.lane.b32.xlu0 %v1282, 96
    %v1396 = vpop.permute.xlu0 %1395
    %1397 = vrot.lane.b32.xlu0 %v1287, 96
    %v1398 = vpop.permute.xlu0 %1397
    %1399 = vrot.lane.b32.xlu0 %v1290, 96
    %v1400 = vpop.permute.xlu0 %1399
    %1401 = vrot.lane.b32.xlu0 %v1295, 96
    %v1402 = vpop.permute.xlu0 %1401
    %1403 = vrot.lane.b32.xlu0 %v1298, 96
    %v1404 = vpop.permute.xlu0 %1403
    %1405 = vrot.lane.b32.xlu0 %v1303, 96
    %v1406 = vpop.permute.xlu0 %1405
    %1407 = vrot.lane.b32.xlu0 %v1306, 96
    %v1408 = vpop.permute.xlu0 %1407
    %1410 = vrot.lane.b32.xlu0 %v32, 112
    %v1411 = vpop.permute.xlu0 %1410
    %v1412 = vsel %vm280, %v1346, 0
    %v1414 = vsel %vm280, %v1348, 0
    %v1416 = vsel %vm280, %v1350, 0
    %v1418 = vsel %vm280, %v1352, 0
    %v1420 = vsel %vm280, %v1354, 0
    %v1422 = vsel %vm280, %v1356, 0
    %v1424 = vsel %vm280, %v1358, 0
    %v1426 = vsel %vm280, %v1360, 0
    %v1428 = vsel %vm280, %v1362, 0
    %v1430 = vsel %vm280, %v1364, 0
    %v1432 = vsel %vm280, %v1366, 0
    %v1434 = vsel %vm280, %v1368, 0
    %v1436 = vsel %vm280, %v1370, 0
    %v1438 = vsel %vm280, %v1372, 0
    %v1440 = vsel %vm280, %v1374, 0
    %v1442 = vsel %vm280, %v1376, 0
    %v1444 = vsel %vm280, %v1378, 0
    %v1446 = vsel %vm280, %v1380, 0
    %v1448 = vsel %vm280, %v1382, 0
    %v1450 = vsel %vm280, %v1384, 0
    %v1452 = vsel %vm280, %v1386, 0
    %v1454 = vsel %vm280, %v1388, 0
    %v1456 = vsel %vm280, %v1390, 0
    %v1458 = vsel %vm280, %v1392, 0
    %v1460 = vsel %vm280, %v1394, 0
    %v1462 = vsel %vm280, %v1396, 0
    %v1464 = vsel %vm280, %v1398, 0
    %v1466 = vsel %vm280, %v1400, 0
    %v1468 = vsel %vm280, %v1402, 0
    %v1470 = vsel %vm280, %v1404, 0
    %v1472 = vsel %vm280, %v1406, 0
    %v1474 = vsel %vm280, %v1408, 0
    %v1476 = vsel %vm318, %v1411, 0
    %1478 = vmatprep.subr.mxu0 0.0
    %1479 = vmatpush1.msra.mxu0 %v1476
    %1480 = vmatprep.subr.mxu0 0.0
    %1481 = vmatpush1.msra.mxu0 0.0
    %1482 = vmatprep.subr.mxu0 0.0
    %1483 = vmatpush1.msra.mxu0 0.0
    %1484 = vmatprep.subr.mxu0 0.0
    %1485 = vmatpush1.msra.mxu0 0.0
    %1486 = vmatprep.subr.mxu0 0.0
    %1487 = vmatpush1.msra.mxu0 0.0
    %1488 = vmatprep.subr.mxu0 0.0
    %1489 = vmatpush1.msra.mxu0 0.0
    %1490 = vmatprep.subr.mxu0 0.0
    %1491 = vmatpush1.msra.mxu0 0.0
    %1492 = vmatprep.subr.mxu0 0.0
    %1493 = vmatpush1.msra.mxu0 0.0
    %1494 = vmatprep.subr.mxu0 0.0
    %1495 = vmatpush1.msra.mxu0 0.0
    %1496 = vmatprep.subr.mxu0 0.0
    %1497 = vmatpush1.msra.mxu0 0.0
    %1498 = vmatprep.subr.mxu0 0.0
    %1499 = vmatpush1.msra.mxu0 0.0
    %1500 = vmatprep.subr.mxu0 0.0
    %1501 = vmatpush1.msra.mxu0 0.0
    %1502 = vmatprep.subr.mxu0 0.0
    %1503 = vmatpush1.msra.mxu0 0.0
    %1504 = vmatprep.subr.mxu0 0.0
    %1505 = vmatpush1.msra.mxu0 0.0
    %1506 = vmatprep.subr.mxu0 0.0
    %1507 = vmatpush1.msra.mxu0 0.0
    %1508 = vmatprep.subr.mxu0 0.0
    %1509 = vmatpush1.msra.mxu0 0.0
    %1510 = vmatprep.subr.mxu0 0.0
    %1511 = vmatpush1.msra.mxu0 0.0
    %1512 = vmatprep.subr.mxu0 0.0
    %1513 = vmatpush1.msra.mxu0 0.0
    %1514 = vmatprep.subr.mxu0 0.0
    %1515 = vmatpush1.msra.mxu0 0.0
    %1516 = vmatprep.subr.mxu0 0.0
    %1517 = vmatpush1.msra.mxu0 0.0
    %1518 = vmatprep.subr.mxu0 0.0
    %1519 = vmatpush1.msra.mxu0 0.0
    %1520 = vmatprep.subr.mxu0 0.0
    %1521 = vmatpush1.msra.mxu0 0.0
    %1522 = vmatprep.subr.mxu0 0.0
    %1523 = vmatpush1.msra.mxu0 0.0
    %1524 = vmatprep.subr.mxu0 0.0
    %1525 = vmatpush1.msra.mxu0 0.0
    %1526 = vmatprep.subr.mxu0 0.0
    %1527 = vmatpush1.msra.mxu0 0.0
    %1528 = vmatprep.subr.mxu0 0.0
    %1529 = vmatpush1.msra.mxu0 0.0
    %1530 = vmatprep.subr.mxu0 0.0
    %1531 = vmatpush1.msra.mxu0 0.0
    %1532 = vmatprep.subr.mxu0 0.0
    %1533 = vmatpush1.msra.mxu0 0.0
    %1534 = vmatprep.subr.mxu0 0.0
    %1535 = vmatpush1.msra.mxu0 0.0
    %1536 = vmatprep.subr.mxu0 0.0
    %1537 = vmatpush1.msra.mxu0 0.0
    %1538 = vmatprep.subr.mxu0 0.0
    %1539 = vmatpush1.msra.mxu0 0.0
    %1540 = vmatprep.subr.mxu0 0.0
    %1541 = vmatpush1.msra.mxu0 0.0
    %1542 = vmatprep.mubr.f32.mxu0 0.0
    %1543 = vmatmul.mubr.f32.gmra.mrb[0].mxu0 %v1412
    %v1544 = vpop.f32.mrb[0].mxu0
    %v1545 = vadd.f32 %v1312, %v1544
    %v1546 = vpop.f32.mrb[0].mxu0
    %1547 = vmatprep.mubr.f32.mxu0 0.0
    %1548 = vmatmul.mubr.f32.gmra.mrb[0].mxu0 %v1414
    %v1549 = vpop.f32.mrb[0].mxu0
    %v1550 = vadd.f32 %v1312, %v1549
    %v1551 = vpop.f32.mrb[0].mxu0
    %1552 = vmatprep.mubr.f32.mxu0 0.0
    %1553 = vmatmul.mubr.f32.gmra.mrb[0].mxu0 %v1416
    %v1554 = vpop.f32.mrb[0].mxu0
    %v1555 = vadd.f32 %v1312, %v1554
    %v1556 = vpop.f32.mrb[0].mxu0
    %1557 = vmatprep.mubr.f32.mxu0 0.0
    %1558 = vmatmul.mubr.f32.gmra.mrb[0].mxu0 %v1418
    %v1559 = vpop.f32.mrb[0].mxu0
    %v1560 = vadd.f32 %v1312, %v1559
    %v1561 = vpop.f32.mrb[0].mxu0
    %1562 = vmatprep.mubr.f32.mxu0 0.0
    %1563 = vmatmul.mubr.f32.gmra.mrb[0].mxu0 %v1420
    %v1564 = vpop.f32.mrb[0].mxu0
    %v1565 = vadd.f32 %v1312, %v1564
    %v1566 = vpop.f32.mrb[0].mxu0
    %1567 = vmatprep.mubr.f32.mxu0 0.0
    %1568 = vmatmul.mubr.f32.gmra.mrb[0].mxu0 %v1422
    %v1569 = vpop.f32.mrb[0].mxu0
    %v1570 = vadd.f32 %v1312, %v1569
    %v1571 = vpop.f32.mrb[0].mxu0
    %1572 = vmatprep.mubr.f32.mxu0 0.0
    %1573 = vmatmul.mubr.f32.gmra.mrb[0].mxu0 %v1424
    %v1574 = vpop.f32.mrb[0].mxu0
    %v1575 = vadd.f32 %v1312, %v1574
    %v1576 = vpop.f32.mrb[0].mxu0
    %1577 = vmatprep.mubr.f32.mxu0 0.0
    %1578 = vmatmul.mubr.f32.gmra.mrb[0].mxu0 %v1426
    %v1579 = vpop.f32.mrb[0].mxu0
    %v1580 = vadd.f32 %v1312, %v1579
    %v1581 = vpop.f32.mrb[0].mxu0
    %1582 = vmatprep.mubr.f32.mxu0 0.0
    %1583 = vmatmul.mubr.f32.gmra.mrb[0].mxu0 %v1428
    %v1584 = vpop.f32.mrb[0].mxu0
    %v1585 = vadd.f32 %v1312, %v1584
    %v1586 = vpop.f32.mrb[0].mxu0
    %1587 = vmatprep.mubr.f32.mxu0 0.0
    %1588 = vmatmul.mubr.f32.gmra.mrb[0].mxu0 %v1430
    %v1589 = vpop.f32.mrb[0].mxu0
    %v1590 = vadd.f32 %v1312, %v1589
    %v1591 = vpop.f32.mrb[0].mxu0
    %1592 = vmatprep.mubr.f32.mxu0 0.0
    %1593 = vmatmul.mubr.f32.gmra.mrb[0].mxu0 %v1432
    %v1594 = vpop.f32.mrb[0].mxu0
    %v1595 = vadd.f32 %v1312, %v1594
    %v1596 = vpop.f32.mrb[0].mxu0
    %1597 = vmatprep.mubr.f32.mxu0 0.0
    %1598 = vmatmul.mubr.f32.gmra.mrb[0].mxu0 %v1434
    %v1599 = vpop.f32.mrb[0].mxu0
    %v1600 = vadd.f32 %v1312, %v1599
    %v1601 = vpop.f32.mrb[0].mxu0
    %1602 = vmatprep.mubr.f32.mxu0 0.0
    %1603 = vmatmul.mubr.f32.gmra.mrb[0].mxu0 %v1436
    %v1604 = vpop.f32.mrb[0].mxu0
    %v1605 = vadd.f32 %v1312, %v1604
    %v1606 = vpop.f32.mrb[0].mxu0
    %1607 = vmatprep.mubr.f32.mxu0 0.0
    %1608 = vmatmul.mubr.f32.gmra.mrb[0].mxu0 %v1438
    %v1609 = vpop.f32.mrb[0].mxu0
    %v1610 = vadd.f32 %v1312, %v1609
    %v1611 = vpop.f32.mrb[0].mxu0
    %1612 = vmatprep.mubr.f32.mxu0 0.0
    %1613 = vmatmul.mubr.f32.gmra.mrb[0].mxu0 %v1440
    %v1614 = vpop.f32.mrb[0].mxu0
    %v1615 = vadd.f32 %v1312, %v1614
    %v1616 = vpop.f32.mrb[0].mxu0
    %1617 = vmatprep.mubr.f32.mxu0 0.0
    %1618 = vmatmul.mubr.f32.gmra.mrb[0].mxu0 %v1442
    %v1619 = vpop.f32.mrb[0].mxu0
    %v1620 = vadd.f32 %v1312, %v1619
    %v1621 = vpop.f32.mrb[0].mxu0
    %1622 = vmatprep.mubr.f32.mxu0 0.0
    %1623 = vmatmul.mubr.f32.gmra.mrb[0].mxu0 %v1444
    %v1624 = vpop.f32.mrb[0].mxu0
    %v1625 = vadd.f32 %v1312, %v1624
    %v1626 = vpop.f32.mrb[0].mxu0
    %1627 = vmatprep.mubr.f32.mxu0 0.0
    %1628 = vmatmul.mubr.f32.gmra.mrb[0].mxu0 %v1446
    %v1629 = vpop.f32.mrb[0].mxu0
    %v1630 = vadd.f32 %v1312, %v1629
    %v1631 = vpop.f32.mrb[0].mxu0
    %1632 = vmatprep.mubr.f32.mxu0 0.0
    %1633 = vmatmul.mubr.f32.gmra.mrb[0].mxu0 %v1448
    %v1634 = vpop.f32.mrb[0].mxu0
    %v1635 = vadd.f32 %v1312, %v1634
    %v1636 = vpop.f32.mrb[0].mxu0
    %1637 = vmatprep.mubr.f32.mxu0 0.0
    %1638 = vmatmul.mubr.f32.gmra.mrb[0].mxu0 %v1450
    %v1639 = vpop.f32.mrb[0].mxu0
    %v1640 = vadd.f32 %v1312, %v1639
    %v1641 = vpop.f32.mrb[0].mxu0
    %1642 = vmatprep.mubr.f32.mxu0 0.0
    %1643 = vmatmul.mubr.f32.gmra.mrb[0].mxu0 %v1452
    %v1644 = vpop.f32.mrb[0].mxu0
    %v1645 = vadd.f32 %v1312, %v1644
    %v1646 = vpop.f32.mrb[0].mxu0
    %1647 = vmatprep.mubr.f32.mxu0 0.0
    %1648 = vmatmul.mubr.f32.gmra.mrb[0].mxu0 %v1454
    %v1649 = vpop.f32.mrb[0].mxu0
    %v1650 = vadd.f32 %v1312, %v1649
    %v1651 = vpop.f32.mrb[0].mxu0
    %1652 = vmatprep.mubr.f32.mxu0 0.0
    %1653 = vmatmul.mubr.f32.gmra.mrb[0].mxu0 %v1456
    %v1654 = vpop.f32.mrb[0].mxu0
    %v1655 = vadd.f32 %v1312, %v1654
    %v1656 = vpop.f32.mrb[0].mxu0
    %1657 = vmatprep.mubr.f32.mxu0 0.0
    %1658 = vmatmul.mubr.f32.gmra.mrb[0].mxu0 %v1458
    %v1659 = vpop.f32.mrb[0].mxu0
    %v1660 = vadd.f32 %v1312, %v1659
    %v1661 = vpop.f32.mrb[0].mxu0
    %1662 = vmatprep.mubr.f32.mxu0 0.0
    %1663 = vmatmul.mubr.f32.gmra.mrb[0].mxu0 %v1460
    %v1664 = vpop.f32.mrb[0].mxu0
    %v1665 = vadd.f32 %v1312, %v1664
    %v1666 = vpop.f32.mrb[0].mxu0
    %1667 = vmatprep.mubr.f32.mxu0 0.0
    %1668 = vmatmul.mubr.f32.gmra.mrb[0].mxu0 %v1462
    %v1669 = vpop.f32.mrb[0].mxu0
    %v1670 = vadd.f32 %v1312, %v1669
    %v1671 = vpop.f32.mrb[0].mxu0
    %1672 = vmatprep.mubr.f32.mxu0 0.0
    %1673 = vmatmul.mubr.f32.gmra.mrb[0].mxu0 %v1464
    %v1674 = vpop.f32.mrb[0].mxu0
    %v1675 = vadd.f32 %v1312, %v1674
    %v1676 = vpop.f32.mrb[0].mxu0
    %1677 = vmatprep.mubr.f32.mxu0 0.0
    %1678 = vmatmul.mubr.f32.gmra.mrb[0].mxu0 %v1466
    %v1679 = vpop.f32.mrb[0].mxu0
    %v1680 = vadd.f32 %v1312, %v1679
    %v1681 = vpop.f32.mrb[0].mxu0
    %1682 = vmatprep.mubr.f32.mxu0 0.0
    %1683 = vmatmul.mubr.f32.gmra.mrb[0].mxu0 %v1468
    %v1684 = vpop.f32.mrb[0].mxu0
    %v1685 = vadd.f32 %v1312, %v1684
    %v1686 = vpop.f32.mrb[0].mxu0
    %1687 = vmatprep.mubr.f32.mxu0 0.0
    %1688 = vmatmul.mubr.f32.gmra.mrb[0].mxu0 %v1470
    %v1689 = vpop.f32.mrb[0].mxu0
    %v1690 = vadd.f32 %v1312, %v1689
    %v1691 = vpop.f32.mrb[0].mxu0
    %1692 = vmatprep.mubr.f32.mxu0 0.0
    %1693 = vmatmul.mubr.f32.gmra.mrb[0].mxu0 %v1472
    %v1694 = vpop.f32.mrb[0].mxu0
    %v1695 = vadd.f32 %v1312, %v1694
    %v1696 = vpop.f32.mrb[0].mxu0
    %1697 = vmatprep.mubr.f32.mxu0 0.0
    %1698 = vmatmul.mubr.f32.gmra.mrb[0].mxu0 %v1474
    %v1699 = vpop.f32.mrb[0].mxu0
    %v1700 = vadd.f32 %v1312, %v1699
    %v1701 = vpop.f32.mrb[0].mxu0
    %1702 = vdwg.mxu0
    %v1703 = vmax.f32 %v1545, 0.0
    %v1704 = vmax.f32 %v1550, 0.0
    %v1705 = vmax.f32 %v1555, 0.0
    %v1706 = vmax.f32 %v1560, 0.0
    %v1707 = vmax.f32 %v1565, 0.0
    %v1708 = vmax.f32 %v1570, 0.0
    %v1709 = vmax.f32 %v1575, 0.0
    %v1710 = vmax.f32 %v1580, 0.0
    %v1711 = vmax.f32 %v1585, 0.0
    %v1712 = vmax.f32 %v1590, 0.0
    %v1713 = vmax.f32 %v1595, 0.0
    %v1714 = vmax.f32 %v1600, 0.0
    %v1715 = vmax.f32 %v1605, 0.0
    %v1716 = vmax.f32 %v1610, 0.0
    %v1717 = vmax.f32 %v1615, 0.0
    %v1718 = vmax.f32 %v1620, 0.0
    %v1719 = vmax.f32 %v1625, 0.0
    %v1720 = vmax.f32 %v1630, 0.0
    %v1721 = vmax.f32 %v1635, 0.0
    %v1722 = vmax.f32 %v1640, 0.0
    %v1723 = vmax.f32 %v1645, 0.0
    %v1724 = vmax.f32 %v1650, 0.0
    %v1725 = vmax.f32 %v1655, 0.0
    %v1726 = vmax.f32 %v1660, 0.0
    %v1727 = vmax.f32 %v1665, 0.0
    %v1728 = vmax.f32 %v1670, 0.0
    %v1729 = vmax.f32 %v1675, 0.0
    %v1730 = vmax.f32 %v1680, 0.0
    %v1731 = vmax.f32 %v1685, 0.0
    %v1732 = vmax.f32 %v1690, 0.0
    %v1733 = vmax.f32 %v1695, 0.0
    %v1734 = vmax.f32 %v1700, 0.0
    %v1735 = vlaneseq
    %v1736 = vshrl.u32 %v1735, 7
    %v1737 = vsub.s32 0, %v1736
    %v1738 = vrot.slane %v37, %v1737
    %v1740 = vsel %vm280, %v1703, 0
    %v1743 = vsel %vm280, %v1704, 0
    %v1746 = vsel %vm280, %v1705, 0
    %v1749 = vsel %vm280, %v1706, 0
    %v1752 = vsel %vm280, %v1707, 0
    %v1755 = vsel %vm280, %v1708, 0
    %v1758 = vsel %vm280, %v1709, 0
    %v1761 = vsel %vm280, %v1710, 0
    %v1764 = vsel %vm280, %v1711, 0
    %v1767 = vsel %vm280, %v1712, 0
    %v1770 = vsel %vm280, %v1713, 0
    %v1773 = vsel %vm280, %v1714, 0
    %v1776 = vsel %vm280, %v1715, 0
    %v1779 = vsel %vm280, %v1716, 0
    %v1782 = vsel %vm280, %v1717, 0
    %v1785 = vsel %vm280, %v1718, 0
    %v1788 = vsel %vm280, %v1719, 0
    %v1791 = vsel %vm280, %v1720, 0
    %v1794 = vsel %vm280, %v1721, 0
    %v1797 = vsel %vm280, %v1722, 0
    %v1800 = vsel %vm280, %v1723, 0
    %v1803 = vsel %vm280, %v1724, 0
    %v1806 = vsel %vm280, %v1725, 0
    %v1809 = vsel %vm280, %v1726, 0
    %v1812 = vsel %vm280, %v1727, 0
    %v1815 = vsel %vm280, %v1728, 0
    %v1818 = vsel %vm280, %v1729, 0
    %v1821 = vsel %vm280, %v1730, 0
    %v1824 = vsel %vm280, %v1731, 0
    %v1827 = vsel %vm280, %v1732, 0
    %v1830 = vsel %vm280, %v1733, 0
    %v1833 = vsel %vm280, %v1734, 0
    %v1835 = vsel %vm318, %v32, 0
    %1837 = vmatprep.subr.mxu0 0.0
    %1838 = vmatpush1.msra.mxu0 %v1835
    %1839 = vmatprep.subr.mxu0 0.0
    %1840 = vmatpush1.msra.mxu0 0.0
    %1841 = vmatprep.subr.mxu0 0.0
    %1842 = vmatpush1.msra.mxu0 0.0
    %1843 = vmatprep.subr.mxu0 0.0
    %1844 = vmatpush1.msra.mxu0 0.0
    %1845 = vmatprep.subr.mxu0 0.0
    %1846 = vmatpush1.msra.mxu0 0.0
    %1847 = vmatprep.subr.mxu0 0.0
    %1848 = vmatpush1.msra.mxu0 0.0
    %1849 = vmatprep.subr.mxu0 0.0
    %1850 = vmatpush1.msra.mxu0 0.0
    %1851 = vmatprep.subr.mxu0 0.0
    %1852 = vmatpush1.msra.mxu0 0.0
    %1853 = vmatprep.subr.mxu0 0.0
    %1854 = vmatpush1.msra.mxu0 0.0
    %1855 = vmatprep.subr.mxu0 0.0
    %1856 = vmatpush1.msra.mxu0 0.0
    %1857 = vmatprep.subr.mxu0 0.0
    %1858 = vmatpush1.msra.mxu0 0.0
    %1859 = vmatprep.subr.mxu0 0.0
    %1860 = vmatpush1.msra.mxu0 0.0
    %1861 = vmatprep.subr.mxu0 0.0
    %1862 = vmatpush1.msra.mxu0 0.0
    %1863 = vmatprep.subr.mxu0 0.0
    %1864 = vmatpush1.msra.mxu0 0.0
    %1865 = vmatprep.subr.mxu0 0.0
    %1866 = vmatpush1.msra.mxu0 0.0
    %1867 = vmatprep.subr.mxu0 0.0
    %1868 = vmatpush1.msra.mxu0 0.0
    %1869 = vmatprep.subr.mxu0 0.0
    %1870 = vmatpush1.msra.mxu0 0.0
    %1871 = vmatprep.subr.mxu0 0.0
    %1872 = vmatpush1.msra.mxu0 0.0
    %1873 = vmatprep.subr.mxu0 0.0
    %1874 = vmatpush1.msra.mxu0 0.0
    %1875 = vmatprep.subr.mxu0 0.0
    %1876 = vmatpush1.msra.mxu0 0.0
    %1877 = vmatprep.subr.mxu0 0.0
    %1878 = vmatpush1.msra.mxu0 0.0
    %1879 = vmatprep.subr.mxu0 0.0
    %1880 = vmatpush1.msra.mxu0 0.0
    %1881 = vmatprep.subr.mxu0 0.0
    %1882 = vmatpush1.msra.mxu0 0.0
    %1883 = vmatprep.subr.mxu0 0.0
    %1884 = vmatpush1.msra.mxu0 0.0
    %1885 = vmatprep.subr.mxu0 0.0
    %1886 = vmatpush1.msra.mxu0 0.0
    %1887 = vmatprep.subr.mxu0 0.0
    %1888 = vmatpush1.msra.mxu0 0.0
    %1889 = vmatprep.subr.mxu0 0.0
    %1890 = vmatpush1.msra.mxu0 0.0
    %1891 = vmatprep.subr.mxu0 0.0
    %1892 = vmatpush1.msra.mxu0 0.0
    %1893 = vmatprep.subr.mxu0 0.0
    %1894 = vmatpush1.msra.mxu0 0.0
    %1895 = vmatprep.subr.mxu0 0.0
    %1896 = vmatpush1.msra.mxu0 0.0
    %1897 = vmatprep.subr.mxu0 0.0
    %1898 = vmatpush1.msra.mxu0 0.0
    %1899 = vmatprep.subr.mxu0 0.0
    %1900 = vmatpush1.msra.mxu0 0.0
    %1901 = vmatprep.mubr.f32.mxu0 0.0
    %1902 = vmatmul.mubr.f32.gmra.mrb[0].mxu0 %v1740
    %v1903 = vpop.f32.mrb[0].mxu0
    %v1904 = vadd.f32 %v1738, %v1903
    %v1905 = vpop.f32.mrb[0].mxu0
    %1906 = vmatprep.mubr.f32.mxu0 0.0
    %1907 = vmatmul.mubr.f32.gmra.mrb[0].mxu0 %v1743
    %v1908 = vpop.f32.mrb[0].mxu0
    %v1909 = vadd.f32 %v1738, %v1908
    %v1910 = vpop.f32.mrb[0].mxu0
    %1911 = vmatprep.mubr.f32.mxu0 0.0
    %1912 = vmatmul.mubr.f32.gmra.mrb[0].mxu0 %v1746
    %v1913 = vpop.f32.mrb[0].mxu0
    %v1914 = vadd.f32 %v1738, %v1913
    %v1915 = vpop.f32.mrb[0].mxu0
    %1916 = vmatprep.mubr.f32.mxu0 0.0
    %1917 = vmatmul.mubr.f32.gmra.mrb[0].mxu0 %v1749
    %v1918 = vpop.f32.mrb[0].mxu0
    %v1919 = vadd.f32 %v1738, %v1918
    %v1920 = vpop.f32.mrb[0].mxu0
    %1921 = vmatprep.mubr.f32.mxu0 0.0
    %1922 = vmatmul.mubr.f32.gmra.mrb[0].mxu0 %v1752
    %v1923 = vpop.f32.mrb[0].mxu0
    %v1924 = vadd.f32 %v1738, %v1923
    %v1925 = vpop.f32.mrb[0].mxu0
    %1926 = vmatprep.mubr.f32.mxu0 0.0
    %1927 = vmatmul.mubr.f32.gmra.mrb[0].mxu0 %v1755
    %v1928 = vpop.f32.mrb[0].mxu0
    %v1929 = vadd.f32 %v1738, %v1928
    %v1930 = vpop.f32.mrb[0].mxu0
    %1931 = vmatprep.mubr.f32.mxu0 0.0
    %1932 = vmatmul.mubr.f32.gmra.mrb[0].mxu0 %v1758
    %v1933 = vpop.f32.mrb[0].mxu0
    %v1934 = vadd.f32 %v1738, %v1933
    %v1935 = vpop.f32.mrb[0].mxu0
    %1936 = vmatprep.mubr.f32.mxu0 0.0
    %1937 = vmatmul.mubr.f32.gmra.mrb[0].mxu0 %v1761
    %v1938 = vpop.f32.mrb[0].mxu0
    %v1939 = vadd.f32 %v1738, %v1938
    %v1940 = vpop.f32.mrb[0].mxu0
    %1941 = vmatprep.mubr.f32.mxu0 0.0
    %1942 = vmatmul.mubr.f32.gmra.mrb[0].mxu0 %v1764
    %v1943 = vpop.f32.mrb[0].mxu0
    %v1944 = vadd.f32 %v1738, %v1943
    %v1945 = vpop.f32.mrb[0].mxu0
    %1946 = vmatprep.mubr.f32.mxu0 0.0
    %1947 = vmatmul.mubr.f32.gmra.mrb[0].mxu0 %v1767
    %v1948 = vpop.f32.mrb[0].mxu0
    %v1949 = vadd.f32 %v1738, %v1948
    %v1950 = vpop.f32.mrb[0].mxu0
    %1951 = vmatprep.mubr.f32.mxu0 0.0
    %1952 = vmatmul.mubr.f32.gmra.mrb[0].mxu0 %v1770
    %v1953 = vpop.f32.mrb[0].mxu0
    %v1954 = vadd.f32 %v1738, %v1953
    %v1955 = vpop.f32.mrb[0].mxu0
    %1956 = vmatprep.mubr.f32.mxu0 0.0
    %1957 = vmatmul.mubr.f32.gmra.mrb[0].mxu0 %v1773
    %v1958 = vpop.f32.mrb[0].mxu0
    %v1959 = vadd.f32 %v1738, %v1958
    %v1960 = vpop.f32.mrb[0].mxu0
    %1961 = vmatprep.mubr.f32.mxu0 0.0
    %1962 = vmatmul.mubr.f32.gmra.mrb[0].mxu0 %v1776
    %v1963 = vpop.f32.mrb[0].mxu0
    %v1964 = vadd.f32 %v1738, %v1963
    %v1965 = vpop.f32.mrb[0].mxu0
    %1966 = vmatprep.mubr.f32.mxu0 0.0
    %1967 = vmatmul.mubr.f32.gmra.mrb[0].mxu0 %v1779
    %v1968 = vpop.f32.mrb[0].mxu0
    %v1969 = vadd.f32 %v1738, %v1968
    %v1970 = vpop.f32.mrb[0].mxu0
    %1971 = vmatprep.mubr.f32.mxu0 0.0
    %1972 = vmatmul.mubr.f32.gmra.mrb[0].mxu0 %v1782
    %v1973 = vpop.f32.mrb[0].mxu0
    %v1974 = vadd.f32 %v1738, %v1973
    %v1975 = vpop.f32.mrb[0].mxu0
    %1976 = vmatprep.mubr.f32.mxu0 0.0
    %1977 = vmatmul.mubr.f32.gmra.mrb[0].mxu0 %v1785
    %v1978 = vpop.f32.mrb[0].mxu0
    %v1979 = vadd.f32 %v1738, %v1978
    %v1980 = vpop.f32.mrb[0].mxu0
    %1981 = vmatprep.mubr.f32.mxu0 0.0
    %1982 = vmatmul.mubr.f32.gmra.mrb[0].mxu0 %v1788
    %v1983 = vpop.f32.mrb[0].mxu0
    %v1984 = vadd.f32 %v1738, %v1983
    %v1985 = vpop.f32.mrb[0].mxu0
    %1986 = vmatprep.mubr.f32.mxu0 0.0
    %1987 = vmatmul.mubr.f32.gmra.mrb[0].mxu0 %v1791
    %v1988 = vpop.f32.mrb[0].mxu0
    %v1989 = vadd.f32 %v1738, %v1988
    %v1990 = vpop.f32.mrb[0].mxu0
    %1991 = vmatprep.mubr.f32.mxu0 0.0
    %1992 = vmatmul.mubr.f32.gmra.mrb[0].mxu0 %v1794
    %v1993 = vpop.f32.mrb[0].mxu0
    %v1994 = vadd.f32 %v1738, %v1993
    %v1995 = vpop.f32.mrb[0].mxu0
    %1996 = vmatprep.mubr.f32.mxu0 0.0
    %1997 = vmatmul.mubr.f32.gmra.mrb[0].mxu0 %v1797
    %v1998 = vpop.f32.mrb[0].mxu0
    %v1999 = vadd.f32 %v1738, %v1998
    %v2000 = vpop.f32.mrb[0].mxu0
    %2001 = vmatprep.mubr.f32.mxu0 0.0
    %2002 = vmatmul.mubr.f32.gmra.mrb[0].mxu0 %v1800
    %v2003 = vpop.f32.mrb[0].mxu0
    %v2004 = vadd.f32 %v1738, %v2003
    %v2005 = vpop.f32.mrb[0].mxu0
    %2006 = vmatprep.mubr.f32.mxu0 0.0
    %2007 = vmatmul.mubr.f32.gmra.mrb[0].mxu0 %v1803
    %v2008 = vpop.f32.mrb[0].mxu0
    %v2009 = vadd.f32 %v1738, %v2008
    %v2010 = vpop.f32.mrb[0].mxu0
    %2011 = vmatprep.mubr.f32.mxu0 0.0
    %2012 = vmatmul.mubr.f32.gmra.mrb[0].mxu0 %v1806
    %v2013 = vpop.f32.mrb[0].mxu0
    %v2014 = vadd.f32 %v1738, %v2013
    %v2015 = vpop.f32.mrb[0].mxu0
    %2016 = vmatprep.mubr.f32.mxu0 0.0
    %2017 = vmatmul.mubr.f32.gmra.mrb[0].mxu0 %v1809
    %v2018 = vpop.f32.mrb[0].mxu0
    %v2019 = vadd.f32 %v1738, %v2018
    %v2020 = vpop.f32.mrb[0].mxu0
    %2021 = vmatprep.mubr.f32.mxu0 0.0
    %2022 = vmatmul.mubr.f32.gmra.mrb[0].mxu0 %v1812
    %v2023 = vpop.f32.mrb[0].mxu0
    %v2024 = vadd.f32 %v1738, %v2023
    %v2025 = vpop.f32.mrb[0].mxu0
    %2026 = vmatprep.mubr.f32.mxu0 0.0
    %2027 = vmatmul.mubr.f32.gmra.mrb[0].mxu0 %v1815
    %v2028 = vpop.f32.mrb[0].mxu0
    %v2029 = vadd.f32 %v1738, %v2028
    %v2030 = vpop.f32.mrb[0].mxu0
    %2031 = vmatprep.mubr.f32.mxu0 0.0
    %2032 = vmatmul.mubr.f32.gmra.mrb[0].mxu0 %v1818
    %v2033 = vpop.f32.mrb[0].mxu0
    %v2034 = vadd.f32 %v1738, %v2033
    %v2035 = vpop.f32.mrb[0].mxu0
    %2036 = vmatprep.mubr.f32.mxu0 0.0
    %2037 = vmatmul.mubr.f32.gmra.mrb[0].mxu0 %v1821
    %v2038 = vpop.f32.mrb[0].mxu0
    %v2039 = vadd.f32 %v1738, %v2038
    %v2040 = vpop.f32.mrb[0].mxu0
    %2041 = vmatprep.mubr.f32.mxu0 0.0
    %2042 = vmatmul.mubr.f32.gmra.mrb[0].mxu0 %v1824
    %v2043 = vpop.f32.mrb[0].mxu0
    %v2044 = vadd.f32 %v1738, %v2043
    %v2045 = vpop.f32.mrb[0].mxu0
    %2046 = vmatprep.mubr.f32.mxu0 0.0
    %2047 = vmatmul.mubr.f32.gmra.mrb[0].mxu0 %v1827
    %v2048 = vpop.f32.mrb[0].mxu0
    %v2049 = vadd.f32 %v1738, %v2048
    %v2050 = vpop.f32.mrb[0].mxu0
    %2051 = vmatprep.mubr.f32.mxu0 0.0
    %2052 = vmatmul.mubr.f32.gmra.mrb[0].mxu0 %v1830
    %v2053 = vpop.f32.mrb[0].mxu0
    %v2054 = vadd.f32 %v1738, %v2053
    %v2055 = vpop.f32.mrb[0].mxu0
    %2056 = vmatprep.mubr.f32.mxu0 0.0
    %2057 = vmatmul.mubr.f32.gmra.mrb[0].mxu0 %v1833
    %v2058 = vpop.f32.mrb[0].mxu0
    %v2059 = vadd.f32 %v1738, %v2058
    %v2060 = vpop.f32.mrb[0].mxu0
    %2061 = vdwg.mxu0
    %2094 = vrot.lane.b32.xlu0 %v1904, 16
    %v2095 = vpop.permute.xlu0 %2094
    %2096 = vrot.lane.b32.xlu0 %v1909, 16
    %v2097 = vpop.permute.xlu0 %2096
    %2098 = vrot.lane.b32.xlu0 %v1914, 16
    %v2099 = vpop.permute.xlu0 %2098
    %2100 = vrot.lane.b32.xlu0 %v1919, 16
    %v2101 = vpop.permute.xlu0 %2100
    %2102 = vrot.lane.b32.xlu0 %v1924, 16
    %v2103 = vpop.permute.xlu0 %2102
    %2104 = vrot.lane.b32.xlu0 %v1929, 16
    %v2105 = vpop.permute.xlu0 %2104
    %2106 = vrot.lane.b32.xlu0 %v1934, 16
    %v2107 = vpop.permute.xlu0 %2106
    %2108 = vrot.lane.b32.xlu0 %v1939, 16
    %v2109 = vpop.permute.xlu0 %2108
    %2110 = vrot.lane.b32.xlu0 %v1944, 16
    %v2111 = vpop.permute.xlu0 %2110
    %2112 = vrot.lane.b32.xlu0 %v1949, 16
    %v2113 = vpop.permute.xlu0 %2112
    %2114 = vrot.lane.b32.xlu0 %v1954, 16
    %v2115 = vpop.permute.xlu0 %2114
    %2116 = vrot.lane.b32.xlu0 %v1959, 16
    %v2117 = vpop.permute.xlu0 %2116
    %2118 = vrot.lane.b32.xlu0 %v1964, 16
    %v2119 = vpop.permute.xlu0 %2118
    %2120 = vrot.lane.b32.xlu0 %v1969, 16
    %v2121 = vpop.permute.xlu0 %2120
    %2122 = vrot.lane.b32.xlu0 %v1974, 16
    %v2123 = vpop.permute.xlu0 %2122
    %2124 = vrot.lane.b32.xlu0 %v1979, 16
    %v2125 = vpop.permute.xlu0 %2124
    %2126 = vrot.lane.b32.xlu0 %v1984, 16
    %v2127 = vpop.permute.xlu0 %2126
    %2128 = vrot.lane.b32.xlu0 %v1989, 16
    %v2129 = vpop.permute.xlu0 %2128
    %2130 = vrot.lane.b32.xlu0 %v1994, 16
    %v2131 = vpop.permute.xlu0 %2130
    %2132 = vrot.lane.b32.xlu0 %v1999, 16
    %v2133 = vpop.permute.xlu0 %2132
    %2134 = vrot.lane.b32.xlu0 %v2004, 16
    %v2135 = vpop.permute.xlu0 %2134
    %2136 = vrot.lane.b32.xlu0 %v2009, 16
    %v2137 = vpop.permute.xlu0 %2136
    %2138 = vrot.lane.b32.xlu0 %v2014, 16
    %v2139 = vpop.permute.xlu0 %2138
    %2140 = vrot.lane.b32.xlu0 %v2019, 16
    %v2141 = vpop.permute.xlu0 %2140
    %2142 = vrot.lane.b32.xlu0 %v2024, 16
    %v2143 = vpop.permute.xlu0 %2142
    %2144 = vrot.lane.b32.xlu0 %v2029, 16
    %v2145 = vpop.permute.xlu0 %2144
    %2146 = vrot.lane.b32.xlu0 %v2034, 16
    %v2147 = vpop.permute.xlu0 %2146
    %2148 = vrot.lane.b32.xlu0 %v2039, 16
    %v2149 = vpop.permute.xlu0 %2148
    %2150 = vrot.lane.b32.xlu0 %v2044, 16
    %v2151 = vpop.permute.xlu0 %2150
    %2152 = vrot.lane.b32.xlu0 %v2049, 16
    %v2153 = vpop.permute.xlu0 %2152
    %2154 = vrot.lane.b32.xlu0 %v2054, 16
    %v2155 = vpop.permute.xlu0 %2154
    %2156 = vrot.lane.b32.xlu0 %v2059, 16
    %v2157 = vpop.permute.xlu0 %2156
    %v2190 = vadd.f32 %v1183, %v2095
    %v2191 = vadd.f32 %v1186, %v2097
    %v2192 = vadd.f32 %v1191, %v2099
    %v2193 = vadd.f32 %v1194, %v2101
    %v2194 = vadd.f32 %v1199, %v2103
    %v2195 = vadd.f32 %v1202, %v2105
    %v2196 = vadd.f32 %v1207, %v2107
    %v2197 = vadd.f32 %v1210, %v2109
    %v2198 = vadd.f32 %v1215, %v2111
    %v2199 = vadd.f32 %v1218, %v2113
    %v2200 = vadd.f32 %v1223, %v2115
    %v2201 = vadd.f32 %v1226, %v2117
    %v2202 = vadd.f32 %v1231, %v2119
    %v2203 = vadd.f32 %v1234, %v2121
    %v2204 = vadd.f32 %v1239, %v2123
    %v2205 = vadd.f32 %v1242, %v2125
    %v2206 = vadd.f32 %v1247, %v2127
    %v2207 = vadd.f32 %v1250, %v2129
    %v2208 = vadd.f32 %v1255, %v2131
    %v2209 = vadd.f32 %v1258, %v2133
    %v2210 = vadd.f32 %v1263, %v2135
    %v2211 = vadd.f32 %v1266, %v2137
    %v2212 = vadd.f32 %v1271, %v2139
    %v2213 = vadd.f32 %v1274, %v2141
    %v2214 = vadd.f32 %v1279, %v2143
    %v2215 = vadd.f32 %v1282, %v2145
    %v2216 = vadd.f32 %v1287, %v2147
    %v2217 = vadd.f32 %v1290, %v2149
    %v2218 = vadd.f32 %v1295, %v2151
    %v2219 = vadd.f32 %v1298, %v2153
    %v2220 = vadd.f32 %v1303, %v2155
    %v2221 = vadd.f32 %v1306, %v2157
    %v2222 = vadd.f32 %v1183, %v1904
    %v2223 = vadd.f32 %v1186, %v1909
    %v2224 = vadd.f32 %v1191, %v1914
    %v2225 = vadd.f32 %v1194, %v1919
    %v2226 = vadd.f32 %v1199, %v1924
    %v2227 = vadd.f32 %v1202, %v1929
    %v2228 = vadd.f32 %v1207, %v1934
    %v2229 = vadd.f32 %v1210, %v1939
    %v2230 = vadd.f32 %v1215, %v1944
    %v2231 = vadd.f32 %v1218, %v1949
    %v2232 = vadd.f32 %v1223, %v1954
    %v2233 = vadd.f32 %v1226, %v1959
    %v2234 = vadd.f32 %v1231, %v1964
    %v2235 = vadd.f32 %v1234, %v1969
    %v2236 = vadd.f32 %v1239, %v1974
    %v2237 = vadd.f32 %v1242, %v1979
    %v2238 = vadd.f32 %v1247, %v1984
    %v2239 = vadd.f32 %v1250, %v1989
    %v2240 = vadd.f32 %v1255, %v1994
    %v2241 = vadd.f32 %v1258, %v1999
    %v2242 = vadd.f32 %v1263, %v2004
    %v2243 = vadd.f32 %v1266, %v2009
    %v2244 = vadd.f32 %v1271, %v2014
    %v2245 = vadd.f32 %v1274, %v2019
    %v2246 = vadd.f32 %v1279, %v2024
    %v2247 = vadd.f32 %v1282, %v2029
    %v2248 = vadd.f32 %v1287, %v2034
    %v2249 = vadd.f32 %v1290, %v2039
    %v2250 = vadd.f32 %v1295, %v2044
    %v2251 = vadd.f32 %v1298, %v2049
    %v2252 = vadd.f32 %v1303, %v2054
    %v2253 = vadd.f32 %v1306, %v2059
    %v2254 = vlaneseq
    %v2255 = vshrl.u32 %v2254, 7
    %v2256 = vsub.s32 0, %v2255
    %v2257 = vrot.slane %v38, %v2256
    %v2258 = vmul.f32 %v2222, %v2257
    %v2259 = vmul.f32 %v2223, %v2257
    %v2260 = vmul.f32 %v2224, %v2257
    %v2261 = vmul.f32 %v2225, %v2257
    %v2262 = vmul.f32 %v2226, %v2257
    %v2263 = vmul.f32 %v2227, %v2257
    %v2264 = vmul.f32 %v2228, %v2257
    %v2265 = vmul.f32 %v2229, %v2257
    %v2266 = vmul.f32 %v2230, %v2257
    %v2267 = vmul.f32 %v2231, %v2257
    %v2268 = vmul.f32 %v2232, %v2257
    %v2269 = vmul.f32 %v2233, %v2257
    %v2270 = vmul.f32 %v2234, %v2257
    %v2271 = vmul.f32 %v2235, %v2257
    %v2272 = vmul.f32 %v2236, %v2257
    %v2273 = vmul.f32 %v2237, %v2257
    %v2274 = vmul.f32 %v2238, %v2257
    %v2275 = vmul.f32 %v2239, %v2257
    %v2276 = vmul.f32 %v2240, %v2257
    %v2277 = vmul.f32 %v2241, %v2257
    %v2278 = vmul.f32 %v2242, %v2257
    %v2279 = vmul.f32 %v2243, %v2257
    %v2280 = vmul.f32 %v2244, %v2257
    %v2281 = vmul.f32 %v2245, %v2257
    %v2282 = vmul.f32 %v2246, %v2257
    %v2283 = vmul.f32 %v2247, %v2257
    %v2284 = vmul.f32 %v2248, %v2257
    %v2285 = vmul.f32 %v2249, %v2257
    %v2286 = vmul.f32 %v2250, %v2257
    %v2287 = vmul.f32 %v2251, %v2257
    %v2288 = vmul.f32 %v2252, %v2257
    %v2289 = vmul.f32 %v2253, %v2257
    %v2290 = vlaneseq
    %v2291 = vshrl.u32 %v2290, 7
    %v2292 = vsub.s32 0, %v2291
    %v2293 = vrot.slane %v39, %v2292
    %v2294 = vadd.f32 %v2258, %v2293
    %v2295 = vadd.f32 %v2259, %v2293
    %v2296 = vadd.f32 %v2260, %v2293
    %v2297 = vadd.f32 %v2261, %v2293
    %v2298 = vadd.f32 %v2262, %v2293
    %v2299 = vadd.f32 %v2263, %v2293
    %v2300 = vadd.f32 %v2264, %v2293
    %v2301 = vadd.f32 %v2265, %v2293
    %v2302 = vadd.f32 %v2266, %v2293
    %v2303 = vadd.f32 %v2267, %v2293
    %v2304 = vadd.f32 %v2268, %v2293
    %v2305 = vadd.f32 %v2269, %v2293
    %v2306 = vadd.f32 %v2270, %v2293
    %v2307 = vadd.f32 %v2271, %v2293
    %v2308 = vadd.f32 %v2272, %v2293
    %v2309 = vadd.f32 %v2273, %v2293
    %v2310 = vadd.f32 %v2274, %v2293
    %v2311 = vadd.f32 %v2275, %v2293
    %v2312 = vadd.f32 %v2276, %v2293
    %v2313 = vadd.f32 %v2277, %v2293
    %v2314 = vadd.f32 %v2278, %v2293
    %v2315 = vadd.f32 %v2279, %v2293
    %v2316 = vadd.f32 %v2280, %v2293
    %v2317 = vadd.f32 %v2281, %v2293
    %v2318 = vadd.f32 %v2282, %v2293
    %v2319 = vadd.f32 %v2283, %v2293
    %v2320 = vadd.f32 %v2284, %v2293
    %v2321 = vadd.f32 %v2285, %v2293
    %v2322 = vadd.f32 %v2286, %v2293
    %v2323 = vadd.f32 %v2287, %v2293
    %v2324 = vadd.f32 %v2288, %v2293
    %v2325 = vadd.f32 %v2289, %v2293
    %v2326 = vmax.f32 %v2294, 0.0
    %v2327 = vmax.f32 %v2295, 0.0
    %v2328 = vmax.f32 %v2296, 0.0
    %v2329 = vmax.f32 %v2297, 0.0
    %v2330 = vmax.f32 %v2298, 0.0
    %v2331 = vmax.f32 %v2299, 0.0
    %v2332 = vmax.f32 %v2300, 0.0
    %v2333 = vmax.f32 %v2301, 0.0
    %v2334 = vmax.f32 %v2302, 0.0
    %v2335 = vmax.f32 %v2303, 0.0
    %v2336 = vmax.f32 %v2304, 0.0
    %v2337 = vmax.f32 %v2305, 0.0
    %v2338 = vmax.f32 %v2306, 0.0
    %v2339 = vmax.f32 %v2307, 0.0
    %v2340 = vmax.f32 %v2308, 0.0
    %v2341 = vmax.f32 %v2309, 0.0
    %v2342 = vmax.f32 %v2310, 0.0
    %v2343 = vmax.f32 %v2311, 0.0
    %v2344 = vmax.f32 %v2312, 0.0
    %v2345 = vmax.f32 %v2313, 0.0
    %v2346 = vmax.f32 %v2314, 0.0
    %v2347 = vmax.f32 %v2315, 0.0
    %v2348 = vmax.f32 %v2316, 0.0
    %v2349 = vmax.f32 %v2317, 0.0
    %v2350 = vmax.f32 %v2318, 0.0
    %v2351 = vmax.f32 %v2319, 0.0
    %v2352 = vmax.f32 %v2320, 0.0
    %v2353 = vmax.f32 %v2321, 0.0
    %v2354 = vmax.f32 %v2322, 0.0
    %v2355 = vmax.f32 %v2323, 0.0
    %v2356 = vmax.f32 %v2324, 0.0
    %v2357 = vmax.f32 %v2325, 0.0
    %v2358 = vlaneseq
    %v2359 = vshrl.u32 %v2358, 7
    %v2360 = vsub.s32 0, %v2359
    %v2361 = vrot.slane %v40, %v2360
    %2362 = vrot.lane.b32.xlu0 %v30, 48
    %v2363 = vpop.permute.xlu0 %2362
    %2364 = vrot.lane.b32.xlu0 %v31, 48
    %v2365 = vpop.permute.xlu0 %2364
    %v2369 = vsel %vm57, %v2326, 0
    %v2372 = vsel %vm57, %v2327, 0
    %v2375 = vsel %vm57, %v2328, 0
    %v2378 = vsel %vm57, %v2329, 0
    %v2381 = vsel %vm57, %v2330, 0
    %v2384 = vsel %vm57, %v2331, 0
    %v2387 = vsel %vm57, %v2332, 0
    %v2390 = vsel %vm57, %v2333, 0
    %v2393 = vsel %vm57, %v2334, 0
    %v2396 = vsel %vm57, %v2335, 0
    %v2399 = vsel %vm57, %v2336, 0
    %v2402 = vsel %vm57, %v2337, 0
    %v2405 = vsel %vm57, %v2338, 0
    %v2408 = vsel %vm57, %v2339, 0
    %v2411 = vsel %vm57, %v2340, 0
    %v2414 = vsel %vm57, %v2341, 0
    %v2417 = vsel %vm57, %v2342, 0
    %v2420 = vsel %vm57, %v2343, 0
    %v2423 = vsel %vm57, %v2344, 0
    %v2426 = vsel %vm57, %v2345, 0
    %v2429 = vsel %vm57, %v2346, 0
    %v2432 = vsel %vm57, %v2347, 0
    %v2435 = vsel %vm57, %v2348, 0
    %v2438 = vsel %vm57, %v2349, 0
    %v2441 = vsel %vm57, %v2350, 0
    %v2444 = vsel %vm57, %v2351, 0
    %v2447 = vsel %vm57, %v2352, 0
    %v2450 = vsel %vm57, %v2353, 0
    %v2453 = vsel %vm57, %v2354, 0
    %v2456 = vsel %vm57, %v2355, 0
    %v2459 = vsel %vm57, %v2356, 0
    %v2462 = vsel %vm57, %v2357, 0
    %2464 = vmatprep.subr.mxu0 0.0
    %2465 = vmatpush1.msra.mxu0 %v2363
    %2466 = vmatprep.subr.mxu0 0.0
    %2467 = vmatpush1.msra.mxu0 %v2365
    %2468 = vmatprep.subr.mxu0 0.0
    %2469 = vmatpush1.msra.mxu0 0.0
    %2470 = vmatprep.subr.mxu0 0.0
    %2471 = vmatpush1.msra.mxu0 0.0
    %2472 = vmatprep.subr.mxu0 0.0
    %2473 = vmatpush1.msra.mxu0 0.0
    %2474 = vmatprep.subr.mxu0 0.0
    %2475 = vmatpush1.msra.mxu0 0.0
    %2476 = vmatprep.subr.mxu0 0.0
    %2477 = vmatpush1.msra.mxu0 0.0
    %2478 = vmatprep.subr.mxu0 0.0
    %2479 = vmatpush1.msra.mxu0 0.0
    %2480 = vmatprep.subr.mxu0 0.0
    %2481 = vmatpush1.msra.mxu0 0.0
    %2482 = vmatprep.subr.mxu0 0.0
    %2483 = vmatpush1.msra.mxu0 0.0
    %2484 = vmatprep.subr.mxu0 0.0
    %2485 = vmatpush1.msra.mxu0 0.0
    %2486 = vmatprep.subr.mxu0 0.0
    %2487 = vmatpush1.msra.mxu0 0.0
    %2488 = vmatprep.subr.mxu0 0.0
    %2489 = vmatpush1.msra.mxu0 0.0
    %2490 = vmatprep.subr.mxu0 0.0
    %2491 = vmatpush1.msra.mxu0 0.0
    %2492 = vmatprep.subr.mxu0 0.0
    %2493 = vmatpush1.msra.mxu0 0.0
    %2494 = vmatprep.subr.mxu0 0.0
    %2495 = vmatpush1.msra.mxu0 0.0
    %2496 = vmatprep.subr.mxu0 0.0
    %2497 = vmatpush1.msra.mxu0 0.0
    %2498 = vmatprep.subr.mxu0 0.0
    %2499 = vmatpush1.msra.mxu0 0.0
    %2500 = vmatprep.subr.mxu0 0.0
    %2501 = vmatpush1.msra.mxu0 0.0
    %2502 = vmatprep.subr.mxu0 0.0
    %2503 = vmatpush1.msra.mxu0 0.0
    %2504 = vmatprep.subr.mxu0 0.0
    %2505 = vmatpush1.msra.mxu0 0.0
    %2506 = vmatprep.subr.mxu0 0.0
    %2507 = vmatpush1.msra.mxu0 0.0
    %2508 = vmatprep.subr.mxu0 0.0
    %2509 = vmatpush1.msra.mxu0 0.0
    %2510 = vmatprep.subr.mxu0 0.0
    %2511 = vmatpush1.msra.mxu0 0.0
    %2512 = vmatprep.subr.mxu0 0.0
    %2513 = vmatpush1.msra.mxu0 0.0
    %2514 = vmatprep.subr.mxu0 0.0
    %2515 = vmatpush1.msra.mxu0 0.0
    %2516 = vmatprep.subr.mxu0 0.0
    %2517 = vmatpush1.msra.mxu0 0.0
    %2518 = vmatprep.subr.mxu0 0.0
    %2519 = vmatpush1.msra.mxu0 0.0
    %2520 = vmatprep.subr.mxu0 0.0
    %2521 = vmatpush1.msra.mxu0 0.0
    %2522 = vmatprep.subr.mxu0 0.0
    %2523 = vmatpush1.msra.mxu0 0.0
    %2524 = vmatprep.subr.mxu0 0.0
    %2525 = vmatpush1.msra.mxu0 0.0
    %2526 = vmatprep.subr.mxu0 0.0
    %2527 = vmatpush1.msra.mxu0 0.0
    %2528 = vmatprep.mubr.f32.mxu0 0.0
    %2529 = vmatmul.mubr.f32.gmra.mrb[0].mxu0 %v2369
    %v2530 = vpop.f32.mrb[0].mxu0
    %v2531 = vadd.f32 %v2361, %v2530
    %v2532 = vpop.f32.mrb[0].mxu0
    %2533 = vmatprep.mubr.f32.mxu0 0.0
    %2534 = vmatmul.mubr.f32.gmra.mrb[0].mxu0 %v2372
    %v2535 = vpop.f32.mrb[0].mxu0
    %v2536 = vadd.f32 %v2361, %v2535
    %v2537 = vpop.f32.mrb[0].mxu0
    %2538 = vmatprep.mubr.f32.mxu0 0.0
    %2539 = vmatmul.mubr.f32.gmra.mrb[0].mxu0 %v2375
    %v2540 = vpop.f32.mrb[0].mxu0
    %v2541 = vadd.f32 %v2361, %v2540
    %v2542 = vpop.f32.mrb[0].mxu0
    %2543 = vmatprep.mubr.f32.mxu0 0.0
    %2544 = vmatmul.mubr.f32.gmra.mrb[0].mxu0 %v2378
    %v2545 = vpop.f32.mrb[0].mxu0
    %v2546 = vadd.f32 %v2361, %v2545
    %v2547 = vpop.f32.mrb[0].mxu0
    %2548 = vmatprep.mubr.f32.mxu0 0.0
    %2549 = vmatmul.mubr.f32.gmra.mrb[0].mxu0 %v2381
    %v2550 = vpop.f32.mrb[0].mxu0
    %v2551 = vadd.f32 %v2361, %v2550
    %v2552 = vpop.f32.mrb[0].mxu0
    %2553 = vmatprep.mubr.f32.mxu0 0.0
    %2554 = vmatmul.mubr.f32.gmra.mrb[0].mxu0 %v2384
    %v2555 = vpop.f32.mrb[0].mxu0
    %v2556 = vadd.f32 %v2361, %v2555
    %v2557 = vpop.f32.mrb[0].mxu0
    %2558 = vmatprep.mubr.f32.mxu0 0.0
    %2559 = vmatmul.mubr.f32.gmra.mrb[0].mxu0 %v2387
    %v2560 = vpop.f32.mrb[0].mxu0
    %v2561 = vadd.f32 %v2361, %v2560
    %v2562 = vpop.f32.mrb[0].mxu0
    %2563 = vmatprep.mubr.f32.mxu0 0.0
    %2564 = vmatmul.mubr.f32.gmra.mrb[0].mxu0 %v2390
    %v2565 = vpop.f32.mrb[0].mxu0
    %v2566 = vadd.f32 %v2361, %v2565
    %v2567 = vpop.f32.mrb[0].mxu0
    %2568 = vmatprep.mubr.f32.mxu0 0.0
    %2569 = vmatmul.mubr.f32.gmra.mrb[0].mxu0 %v2393
    %v2570 = vpop.f32.mrb[0].mxu0
    %v2571 = vadd.f32 %v2361, %v2570
    %v2572 = vpop.f32.mrb[0].mxu0
    %2573 = vmatprep.mubr.f32.mxu0 0.0
    %2574 = vmatmul.mubr.f32.gmra.mrb[0].mxu0 %v2396
    %v2575 = vpop.f32.mrb[0].mxu0
    %v2576 = vadd.f32 %v2361, %v2575
    %v2577 = vpop.f32.mrb[0].mxu0
    %2578 = vmatprep.mubr.f32.mxu0 0.0
    %2579 = vmatmul.mubr.f32.gmra.mrb[0].mxu0 %v2399
    %v2580 = vpop.f32.mrb[0].mxu0
    %v2581 = vadd.f32 %v2361, %v2580
    %v2582 = vpop.f32.mrb[0].mxu0
    %2583 = vmatprep.mubr.f32.mxu0 0.0
    %2584 = vmatmul.mubr.f32.gmra.mrb[0].mxu0 %v2402
    %v2585 = vpop.f32.mrb[0].mxu0
    %v2586 = vadd.f32 %v2361, %v2585
    %v2587 = vpop.f32.mrb[0].mxu0
    %2588 = vmatprep.mubr.f32.mxu0 0.0
    %2589 = vmatmul.mubr.f32.gmra.mrb[0].mxu0 %v2405
    %v2590 = vpop.f32.mrb[0].mxu0
    %v2591 = vadd.f32 %v2361, %v2590
    %v2592 = vpop.f32.mrb[0].mxu0
    %2593 = vmatprep.mubr.f32.mxu0 0.0
    %2594 = vmatmul.mubr.f32.gmra.mrb[0].mxu0 %v2408
    %v2595 = vpop.f32.mrb[0].mxu0
    %v2596 = vadd.f32 %v2361, %v2595
    %v2597 = vpop.f32.mrb[0].mxu0
    %2598 = vmatprep.mubr.f32.mxu0 0.0
    %2599 = vmatmul.mubr.f32.gmra.mrb[0].mxu0 %v2411
    %v2600 = vpop.f32.mrb[0].mxu0
    %v2601 = vadd.f32 %v2361, %v2600
    %v2602 = vpop.f32.mrb[0].mxu0
    %2603 = vmatprep.mubr.f32.mxu0 0.0
    %2604 = vmatmul.mubr.f32.gmra.mrb[0].mxu0 %v2414
    %v2605 = vpop.f32.mrb[0].mxu0
    %v2606 = vadd.f32 %v2361, %v2605
    %v2607 = vpop.f32.mrb[0].mxu0
    %2608 = vmatprep.mubr.f32.mxu0 0.0
    %2609 = vmatmul.mubr.f32.gmra.mrb[0].mxu0 %v2417
    %v2610 = vpop.f32.mrb[0].mxu0
    %v2611 = vadd.f32 %v2361, %v2610
    %v2612 = vpop.f32.mrb[0].mxu0
    %2613 = vmatprep.mubr.f32.mxu0 0.0
    %2614 = vmatmul.mubr.f32.gmra.mrb[0].mxu0 %v2420
    %v2615 = vpop.f32.mrb[0].mxu0
    %v2616 = vadd.f32 %v2361, %v2615
    %v2617 = vpop.f32.mrb[0].mxu0
    %2618 = vmatprep.mubr.f32.mxu0 0.0
    %2619 = vmatmul.mubr.f32.gmra.mrb[0].mxu0 %v2423
    %v2620 = vpop.f32.mrb[0].mxu0
    %v2621 = vadd.f32 %v2361, %v2620
    %v2622 = vpop.f32.mrb[0].mxu0
    %2623 = vmatprep.mubr.f32.mxu0 0.0
    %2624 = vmatmul.mubr.f32.gmra.mrb[0].mxu0 %v2426
    %v2625 = vpop.f32.mrb[0].mxu0
    %v2626 = vadd.f32 %v2361, %v2625
    %v2627 = vpop.f32.mrb[0].mxu0
    %2628 = vmatprep.mubr.f32.mxu0 0.0
    %2629 = vmatmul.mubr.f32.gmra.mrb[0].mxu0 %v2429
    %v2630 = vpop.f32.mrb[0].mxu0
    %v2631 = vadd.f32 %v2361, %v2630
    %v2632 = vpop.f32.mrb[0].mxu0
    %2633 = vmatprep.mubr.f32.mxu0 0.0
    %2634 = vmatmul.mubr.f32.gmra.mrb[0].mxu0 %v2432
    %v2635 = vpop.f32.mrb[0].mxu0
    %v2636 = vadd.f32 %v2361, %v2635
    %v2637 = vpop.f32.mrb[0].mxu0
    %2638 = vmatprep.mubr.f32.mxu0 0.0
    %2639 = vmatmul.mubr.f32.gmra.mrb[0].mxu0 %v2435
    %v2640 = vpop.f32.mrb[0].mxu0
    %v2641 = vadd.f32 %v2361, %v2640
    %v2642 = vpop.f32.mrb[0].mxu0
    %2643 = vmatprep.mubr.f32.mxu0 0.0
    %2644 = vmatmul.mubr.f32.gmra.mrb[0].mxu0 %v2438
    %v2645 = vpop.f32.mrb[0].mxu0
    %v2646 = vadd.f32 %v2361, %v2645
    %v2647 = vpop.f32.mrb[0].mxu0
    %2648 = vmatprep.mubr.f32.mxu0 0.0
    %2649 = vmatmul.mubr.f32.gmra.mrb[0].mxu0 %v2441
    %v2650 = vpop.f32.mrb[0].mxu0
    %v2651 = vadd.f32 %v2361, %v2650
    %v2652 = vpop.f32.mrb[0].mxu0
    %2653 = vmatprep.mubr.f32.mxu0 0.0
    %2654 = vmatmul.mubr.f32.gmra.mrb[0].mxu0 %v2444
    %v2655 = vpop.f32.mrb[0].mxu0
    %v2656 = vadd.f32 %v2361, %v2655
    %v2657 = vpop.f32.mrb[0].mxu0
    %2658 = vmatprep.mubr.f32.mxu0 0.0
    %2659 = vmatmul.mubr.f32.gmra.mrb[0].mxu0 %v2447
    %v2660 = vpop.f32.mrb[0].mxu0
    %v2661 = vadd.f32 %v2361, %v2660
    %v2662 = vpop.f32.mrb[0].mxu0
    %2663 = vmatprep.mubr.f32.mxu0 0.0
    %2664 = vmatmul.mubr.f32.gmra.mrb[0].mxu0 %v2450
    %v2665 = vpop.f32.mrb[0].mxu0
    %v2666 = vadd.f32 %v2361, %v2665
    %v2667 = vpop.f32.mrb[0].mxu0
    %2668 = vmatprep.mubr.f32.mxu0 0.0
    %2669 = vmatmul.mubr.f32.gmra.mrb[0].mxu0 %v2453
    %v2670 = vpop.f32.mrb[0].mxu0
    %v2671 = vadd.f32 %v2361, %v2670
    %v2672 = vpop.f32.mrb[0].mxu0
    %2673 = vmatprep.mubr.f32.mxu0 0.0
    %2674 = vmatmul.mubr.f32.gmra.mrb[0].mxu0 %v2456
    %v2675 = vpop.f32.mrb[0].mxu0
    %v2676 = vadd.f32 %v2361, %v2675
    %v2677 = vpop.f32.mrb[0].mxu0
    %2678 = vmatprep.mubr.f32.mxu0 0.0
    %2679 = vmatmul.mubr.f32.gmra.mrb[0].mxu0 %v2459
    %v2680 = vpop.f32.mrb[0].mxu0
    %v2681 = vadd.f32 %v2361, %v2680
    %v2682 = vpop.f32.mrb[0].mxu0
    %2683 = vmatprep.mubr.f32.mxu0 0.0
    %2684 = vmatmul.mubr.f32.gmra.mrb[0].mxu0 %v2462
    %v2685 = vpop.f32.mrb[0].mxu0
    %v2686 = vadd.f32 %v2361, %v2685
    %v2687 = vpop.f32.mrb[0].mxu0
    %2688 = vdwg.mxu0
    %v2689 = vmax.f32 %v2531, 0.0
    %v2690 = vmax.f32 %v2536, 0.0
    %v2691 = vmax.f32 %v2541, 0.0
    %v2692 = vmax.f32 %v2546, 0.0
    %v2693 = vmax.f32 %v2551, 0.0
    %v2694 = vmax.f32 %v2556, 0.0
    %v2695 = vmax.f32 %v2561, 0.0
    %v2696 = vmax.f32 %v2566, 0.0
    %v2697 = vmax.f32 %v2571, 0.0
    %v2698 = vmax.f32 %v2576, 0.0
    %v2699 = vmax.f32 %v2581, 0.0
    %v2700 = vmax.f32 %v2586, 0.0
    %v2701 = vmax.f32 %v2591, 0.0
    %v2702 = vmax.f32 %v2596, 0.0
    %v2703 = vmax.f32 %v2601, 0.0
    %v2704 = vmax.f32 %v2606, 0.0
    %v2705 = vmax.f32 %v2611, 0.0
    %v2706 = vmax.f32 %v2616, 0.0
    %v2707 = vmax.f32 %v2621, 0.0
    %v2708 = vmax.f32 %v2626, 0.0
    %v2709 = vmax.f32 %v2631, 0.0
    %v2710 = vmax.f32 %v2636, 0.0
    %v2711 = vmax.f32 %v2641, 0.0
    %v2712 = vmax.f32 %v2646, 0.0
    %v2713 = vmax.f32 %v2651, 0.0
    %v2714 = vmax.f32 %v2656, 0.0
    %v2715 = vmax.f32 %v2661, 0.0
    %v2716 = vmax.f32 %v2666, 0.0
    %v2717 = vmax.f32 %v2671, 0.0
    %v2718 = vmax.f32 %v2676, 0.0
    %v2719 = vmax.f32 %v2681, 0.0
    %v2720 = vmax.f32 %v2686, 0.0
    %v2721 = vlaneseq
    %v2722 = vshrl.u32 %v2721, 7
    %v2723 = vsub.s32 0, %v2722
    %v2724 = vrot.slane %v41, %v2723
    %2726 = vrot.lane.b32.xlu0 %v33, 109
    %v2727 = vpop.permute.xlu0 %2726
    %vm2728 = vcmask 15360
    %v2730 = vsel %vm2728, %v2689, 0
    %v2733 = vsel %vm2728, %v2690, 0
    %v2736 = vsel %vm2728, %v2691, 0
    %v2739 = vsel %vm2728, %v2692, 0
    %v2742 = vsel %vm2728, %v2693, 0
    %v2745 = vsel %vm2728, %v2694, 0
    %v2748 = vsel %vm2728, %v2695, 0
    %v2751 = vsel %vm2728, %v2696, 0
    %v2754 = vsel %vm2728, %v2697, 0
    %v2757 = vsel %vm2728, %v2698, 0
    %v2760 = vsel %vm2728, %v2699, 0
    %v2763 = vsel %vm2728, %v2700, 0
    %v2766 = vsel %vm2728, %v2701, 0
    %v2769 = vsel %vm2728, %v2702, 0
    %v2772 = vsel %vm2728, %v2703, 0
    %v2775 = vsel %vm2728, %v2704, 0
    %v2778 = vsel %vm2728, %v2705, 0
    %v2781 = vsel %vm2728, %v2706, 0
    %v2784 = vsel %vm2728, %v2707, 0
    %v2787 = vsel %vm2728, %v2708, 0
    %v2790 = vsel %vm2728, %v2709, 0
    %v2793 = vsel %vm2728, %v2710, 0
    %v2796 = vsel %vm2728, %v2711, 0
    %v2799 = vsel %vm2728, %v2712, 0
    %v2802 = vsel %vm2728, %v2713, 0
    %v2805 = vsel %vm2728, %v2714, 0
    %v2808 = vsel %vm2728, %v2715, 0
    %v2811 = vsel %vm2728, %v2716, 0
    %v2814 = vsel %vm2728, %v2717, 0
    %v2817 = vsel %vm2728, %v2718, 0
    %v2820 = vsel %vm2728, %v2719, 0
    %v2823 = vsel %vm2728, %v2720, 0
    %vm2825 = vcmask 1041408
    %v2826 = vsel %vm2825, %v2727, 0
    %2828 = vmatprep.subr.mxu0 0.0
    %2829 = vmatpush1.msra.mxu0 %v2826
    %2830 = vmatprep.subr.mxu0 0.0
    %2831 = vmatpush1.msra.mxu0 0.0
    %2832 = vmatprep.subr.mxu0 0.0
    %2833 = vmatpush1.msra.mxu0 0.0
    %2834 = vmatprep.subr.mxu0 0.0
    %2835 = vmatpush1.msra.mxu0 0.0
    %2836 = vmatprep.subr.mxu0 0.0
    %2837 = vmatpush1.msra.mxu0 0.0
    %2838 = vmatprep.subr.mxu0 0.0
    %2839 = vmatpush1.msra.mxu0 0.0
    %2840 = vmatprep.subr.mxu0 0.0
    %2841 = vmatpush1.msra.mxu0 0.0
    %2842 = vmatprep.subr.mxu0 0.0
    %2843 = vmatpush1.msra.mxu0 0.0
    %2844 = vmatprep.subr.mxu0 0.0
    %2845 = vmatpush1.msra.mxu0 0.0
    %2846 = vmatprep.subr.mxu0 0.0
    %2847 = vmatpush1.msra.mxu0 0.0
    %2848 = vmatprep.subr.mxu0 0.0
    %2849 = vmatpush1.msra.mxu0 0.0
    %2850 = vmatprep.subr.mxu0 0.0
    %2851 = vmatpush1.msra.mxu0 0.0
    %2852 = vmatprep.subr.mxu0 0.0
    %2853 = vmatpush1.msra.mxu0 0.0
    %2854 = vmatprep.subr.mxu0 0.0
    %2855 = vmatpush1.msra.mxu0 0.0
    %2856 = vmatprep.subr.mxu0 0.0
    %2857 = vmatpush1.msra.mxu0 0.0
    %2858 = vmatprep.subr.mxu0 0.0
    %2859 = vmatpush1.msra.mxu0 0.0
    %2860 = vmatprep.subr.mxu0 0.0
    %2861 = vmatpush1.msra.mxu0 0.0
    %2862 = vmatprep.subr.mxu0 0.0
    %2863 = vmatpush1.msra.mxu0 0.0
    %2864 = vmatprep.subr.mxu0 0.0
    %2865 = vmatpush1.msra.mxu0 0.0
    %2866 = vmatprep.subr.mxu0 0.0
    %2867 = vmatpush1.msra.mxu0 0.0
    %2868 = vmatprep.subr.mxu0 0.0
    %2869 = vmatpush1.msra.mxu0 0.0
    %2870 = vmatprep.subr.mxu0 0.0
    %2871 = vmatpush1.msra.mxu0 0.0
    %2872 = vmatprep.subr.mxu0 0.0
    %2873 = vmatpush1.msra.mxu0 0.0
    %2874 = vmatprep.subr.mxu0 0.0
    %2875 = vmatpush1.msra.mxu0 0.0
    %2876 = vmatprep.subr.mxu0 0.0
    %2877 = vmatpush1.msra.mxu0 0.0
    %2878 = vmatprep.subr.mxu0 0.0
    %2879 = vmatpush1.msra.mxu0 0.0
    %2880 = vmatprep.subr.mxu0 0.0
    %2881 = vmatpush1.msra.mxu0 0.0
    %2882 = vmatprep.subr.mxu0 0.0
    %2883 = vmatpush1.msra.mxu0 0.0
    %2884 = vmatprep.subr.mxu0 0.0
    %2885 = vmatpush1.msra.mxu0 0.0
    %2886 = vmatprep.subr.mxu0 0.0
    %2887 = vmatpush1.msra.mxu0 0.0
    %2888 = vmatprep.subr.mxu0 0.0
    %2889 = vmatpush1.msra.mxu0 0.0
    %2890 = vmatprep.subr.mxu0 0.0
    %2891 = vmatpush1.msra.mxu0 0.0
    %2892 = vmatprep.mubr.f32.mxu0 0.0
    %2893 = vmatmul.mubr.f32.gmra.mrb[0].mxu0 %v2730
    %v2894 = vpop.f32.mrb[0].mxu0
    %v2895 = vadd.f32 %v2724, %v2894
    %v2896 = vpop.f32.mrb[0].mxu0
    %2897 = vmatprep.mubr.f32.mxu0 0.0
    %2898 = vmatmul.mubr.f32.gmra.mrb[0].mxu0 %v2733
    %v2899 = vpop.f32.mrb[0].mxu0
    %v2900 = vadd.f32 %v2724, %v2899
    %v2901 = vpop.f32.mrb[0].mxu0
    %2902 = vmatprep.mubr.f32.mxu0 0.0
    %2903 = vmatmul.mubr.f32.gmra.mrb[0].mxu0 %v2736
    %v2904 = vpop.f32.mrb[0].mxu0
    %v2905 = vadd.f32 %v2724, %v2904
    %v2906 = vpop.f32.mrb[0].mxu0
    %2907 = vmatprep.mubr.f32.mxu0 0.0
    %2908 = vmatmul.mubr.f32.gmra.mrb[0].mxu0 %v2739
    %v2909 = vpop.f32.mrb[0].mxu0
    %v2910 = vadd.f32 %v2724, %v2909
    %v2911 = vpop.f32.mrb[0].mxu0
    %2912 = vmatprep.mubr.f32.mxu0 0.0
    %2913 = vmatmul.mubr.f32.gmra.mrb[0].mxu0 %v2742
    %v2914 = vpop.f32.mrb[0].mxu0
    %v2915 = vadd.f32 %v2724, %v2914
    %v2916 = vpop.f32.mrb[0].mxu0
    %2917 = vmatprep.mubr.f32.mxu0 0.0
    %2918 = vmatmul.mubr.f32.gmra.mrb[0].mxu0 %v2745
    %v2919 = vpop.f32.mrb[0].mxu0
    %v2920 = vadd.f32 %v2724, %v2919
    %v2921 = vpop.f32.mrb[0].mxu0
    %2922 = vmatprep.mubr.f32.mxu0 0.0
    %2923 = vmatmul.mubr.f32.gmra.mrb[0].mxu0 %v2748
    %v2924 = vpop.f32.mrb[0].mxu0
    %v2925 = vadd.f32 %v2724, %v2924
    %v2926 = vpop.f32.mrb[0].mxu0
    %2927 = vmatprep.mubr.f32.mxu0 0.0
    %2928 = vmatmul.mubr.f32.gmra.mrb[0].mxu0 %v2751
    %v2929 = vpop.f32.mrb[0].mxu0
    %v2930 = vadd.f32 %v2724, %v2929
    %v2931 = vpop.f32.mrb[0].mxu0
    %2932 = vmatprep.mubr.f32.mxu0 0.0
    %2933 = vmatmul.mubr.f32.gmra.mrb[0].mxu0 %v2754
    %v2934 = vpop.f32.mrb[0].mxu0
    %v2935 = vadd.f32 %v2724, %v2934
    %v2936 = vpop.f32.mrb[0].mxu0
    %2937 = vmatprep.mubr.f32.mxu0 0.0
    %2938 = vmatmul.mubr.f32.gmra.mrb[0].mxu0 %v2757
    %v2939 = vpop.f32.mrb[0].mxu0
    %v2940 = vadd.f32 %v2724, %v2939
    %v2941 = vpop.f32.mrb[0].mxu0
    %2942 = vmatprep.mubr.f32.mxu0 0.0
    %2943 = vmatmul.mubr.f32.gmra.mrb[0].mxu0 %v2760
    %v2944 = vpop.f32.mrb[0].mxu0
    %v2945 = vadd.f32 %v2724, %v2944
    %v2946 = vpop.f32.mrb[0].mxu0
    %2947 = vmatprep.mubr.f32.mxu0 0.0
    %2948 = vmatmul.mubr.f32.gmra.mrb[0].mxu0 %v2763
    %v2949 = vpop.f32.mrb[0].mxu0
    %v2950 = vadd.f32 %v2724, %v2949
    %v2951 = vpop.f32.mrb[0].mxu0
    %2952 = vmatprep.mubr.f32.mxu0 0.0
    %2953 = vmatmul.mubr.f32.gmra.mrb[0].mxu0 %v2766
    %v2954 = vpop.f32.mrb[0].mxu0
    %v2955 = vadd.f32 %v2724, %v2954
    %v2956 = vpop.f32.mrb[0].mxu0
    %2957 = vmatprep.mubr.f32.mxu0 0.0
    %2958 = vmatmul.mubr.f32.gmra.mrb[0].mxu0 %v2769
    %v2959 = vpop.f32.mrb[0].mxu0
    %v2960 = vadd.f32 %v2724, %v2959
    %v2961 = vpop.f32.mrb[0].mxu0
    %2962 = vmatprep.mubr.f32.mxu0 0.0
    %2963 = vmatmul.mubr.f32.gmra.mrb[0].mxu0 %v2772
    %v2964 = vpop.f32.mrb[0].mxu0
    %v2965 = vadd.f32 %v2724, %v2964
    %v2966 = vpop.f32.mrb[0].mxu0
    %2967 = vmatprep.mubr.f32.mxu0 0.0
    %2968 = vmatmul.mubr.f32.gmra.mrb[0].mxu0 %v2775
    %v2969 = vpop.f32.mrb[0].mxu0
    %v2970 = vadd.f32 %v2724, %v2969
    %v2971 = vpop.f32.mrb[0].mxu0
    %2972 = vmatprep.mubr.f32.mxu0 0.0
    %2973 = vmatmul.mubr.f32.gmra.mrb[0].mxu0 %v2778
    %v2974 = vpop.f32.mrb[0].mxu0
    %v2975 = vadd.f32 %v2724, %v2974
    %v2976 = vpop.f32.mrb[0].mxu0
    %2977 = vmatprep.mubr.f32.mxu0 0.0
    %2978 = vmatmul.mubr.f32.gmra.mrb[0].mxu0 %v2781
    %v2979 = vpop.f32.mrb[0].mxu0
    %v2980 = vadd.f32 %v2724, %v2979
    %v2981 = vpop.f32.mrb[0].mxu0
    %2982 = vmatprep.mubr.f32.mxu0 0.0
    %2983 = vmatmul.mubr.f32.gmra.mrb[0].mxu0 %v2784
    %v2984 = vpop.f32.mrb[0].mxu0
    %v2985 = vadd.f32 %v2724, %v2984
    %v2986 = vpop.f32.mrb[0].mxu0
    %2987 = vmatprep.mubr.f32.mxu0 0.0
    %2988 = vmatmul.mubr.f32.gmra.mrb[0].mxu0 %v2787
    %v2989 = vpop.f32.mrb[0].mxu0
    %v2990 = vadd.f32 %v2724, %v2989
    %v2991 = vpop.f32.mrb[0].mxu0
    %2992 = vmatprep.mubr.f32.mxu0 0.0
    %2993 = vmatmul.mubr.f32.gmra.mrb[0].mxu0 %v2790
    %v2994 = vpop.f32.mrb[0].mxu0
    %v2995 = vadd.f32 %v2724, %v2994
    %v2996 = vpop.f32.mrb[0].mxu0
    %2997 = vmatprep.mubr.f32.mxu0 0.0
    %2998 = vmatmul.mubr.f32.gmra.mrb[0].mxu0 %v2793
    %v2999 = vpop.f32.mrb[0].mxu0
    %v3000 = vadd.f32 %v2724, %v2999
    %v3001 = vpop.f32.mrb[0].mxu0
    %3002 = vmatprep.mubr.f32.mxu0 0.0
    %3003 = vmatmul.mubr.f32.gmra.mrb[0].mxu0 %v2796
    %v3004 = vpop.f32.mrb[0].mxu0
    %v3005 = vadd.f32 %v2724, %v3004
    %v3006 = vpop.f32.mrb[0].mxu0
    %3007 = vmatprep.mubr.f32.mxu0 0.0
    %3008 = vmatmul.mubr.f32.gmra.mrb[0].mxu0 %v2799
    %v3009 = vpop.f32.mrb[0].mxu0
    %v3010 = vadd.f32 %v2724, %v3009
    %v3011 = vpop.f32.mrb[0].mxu0
    %3012 = vmatprep.mubr.f32.mxu0 0.0
    %3013 = vmatmul.mubr.f32.gmra.mrb[0].mxu0 %v2802
    %v3014 = vpop.f32.mrb[0].mxu0
    %v3015 = vadd.f32 %v2724, %v3014
    %v3016 = vpop.f32.mrb[0].mxu0
    %3017 = vmatprep.mubr.f32.mxu0 0.0
    %3018 = vmatmul.mubr.f32.gmra.mrb[0].mxu0 %v2805
    %v3019 = vpop.f32.mrb[0].mxu0
    %v3020 = vadd.f32 %v2724, %v3019
    %v3021 = vpop.f32.mrb[0].mxu0
    %3022 = vmatprep.mubr.f32.mxu0 0.0
    %3023 = vmatmul.mubr.f32.gmra.mrb[0].mxu0 %v2808
    %v3024 = vpop.f32.mrb[0].mxu0
    %v3025 = vadd.f32 %v2724, %v3024
    %v3026 = vpop.f32.mrb[0].mxu0
    %3027 = vmatprep.mubr.f32.mxu0 0.0
    %3028 = vmatmul.mubr.f32.gmra.mrb[0].mxu0 %v2811
    %v3029 = vpop.f32.mrb[0].mxu0
    %v3030 = vadd.f32 %v2724, %v3029
    %v3031 = vpop.f32.mrb[0].mxu0
    %3032 = vmatprep.mubr.f32.mxu0 0.0
    %3033 = vmatmul.mubr.f32.gmra.mrb[0].mxu0 %v2814
    %v3034 = vpop.f32.mrb[0].mxu0
    %v3035 = vadd.f32 %v2724, %v3034
    %v3036 = vpop.f32.mrb[0].mxu0
    %3037 = vmatprep.mubr.f32.mxu0 0.0
    %3038 = vmatmul.mubr.f32.gmra.mrb[0].mxu0 %v2817
    %v3039 = vpop.f32.mrb[0].mxu0
    %v3040 = vadd.f32 %v2724, %v3039
    %v3041 = vpop.f32.mrb[0].mxu0
    %3042 = vmatprep.mubr.f32.mxu0 0.0
    %3043 = vmatmul.mubr.f32.gmra.mrb[0].mxu0 %v2820
    %v3044 = vpop.f32.mrb[0].mxu0
    %v3045 = vadd.f32 %v2724, %v3044
    %v3046 = vpop.f32.mrb[0].mxu0
    %3047 = vmatprep.mubr.f32.mxu0 0.0
    %3048 = vmatmul.mubr.f32.gmra.mrb[0].mxu0 %v2823
    %v3049 = vpop.f32.mrb[0].mxu0
    %v3050 = vadd.f32 %v2724, %v3049
    %v3051 = vpop.f32.mrb[0].mxu0
    %3052 = vdwg.mxu0
    %v3053 = vmax.f32 %v2895, %v2915
    %v3054 = vmax.f32 %v2900, %v2920
    %v3055 = vmax.f32 %v2905, %v2925
    %v3056 = vmax.f32 %v2910, %v2930
    %v3057 = vmax.f32 %v2935, %v2955
    %v3058 = vmax.f32 %v2940, %v2960
    %v3059 = vmax.f32 %v2945, %v2965
    %v3060 = vmax.f32 %v2950, %v2970
    %v3061 = vmax.f32 %v2975, %v2995
    %v3062 = vmax.f32 %v2980, %v3000
    %v3063 = vmax.f32 %v2985, %v3005
    %v3064 = vmax.f32 %v2990, %v3010
    %v3065 = vmax.f32 %v3015, %v3035
    %v3066 = vmax.f32 %v3020, %v3040
    %v3067 = vmax.f32 %v3025, %v3045
    %v3068 = vmax.f32 %v3030, %v3050
    %v3069 = vmax.f32 %v3053, %v3057
    %v3070 = vmax.f32 %v3054, %v3058
    %v3071 = vmax.f32 %v3055, %v3059
    %v3072 = vmax.f32 %v3056, %v3060
    %v3073 = vmax.f32 %v3061, %v3065
    %v3074 = vmax.f32 %v3062, %v3066
    %v3075 = vmax.f32 %v3063, %v3067
    %v3076 = vmax.f32 %v3064, %v3068
    %v3077 = vmax.f32 %v3069, %v3073
    %v3078 = vmax.f32 %v3070, %v3074
    %v3079 = vmax.f32 %v3071, %v3075
    %v3080 = vmax.f32 %v3072, %v3076
    %v3081 = vsub.f32 %v2895, %v3077
    %v3082 = vsub.f32 %v2900, %v3078
    %v3083 = vsub.f32 %v2905, %v3079
    %v3084 = vsub.f32 %v2910, %v3080
    %v3085 = vmul.f32 %v3081, 1.442695
    %v3086 = vpow.pop %v3085
    %v3087 = vmul.f32 %v3082, 1.442695
    %v3088 = vpow.pop %v3087
    %v3089 = vmul.f32 %v3083, 1.442695
    %v3090 = vpow.pop %v3089
    %v3091 = vmul.f32 %v3084, 1.442695
    %v3092 = vpow.pop %v3091
    %v3093 = vsub.f32 %v2915, %v3077
    %v3094 = vsub.f32 %v2920, %v3078
    %v3095 = vsub.f32 %v2925, %v3079
    %v3096 = vsub.f32 %v2930, %v3080
    %v3097 = vmul.f32 %v3093, 1.442695
    %v3098 = vpow.pop %v3097
    %v3099 = vmul.f32 %v3094, 1.442695
    %v3100 = vpow.pop %v3099
    %v3101 = vmul.f32 %v3095, 1.442695
    %v3102 = vpow.pop %v3101
    %v3103 = vmul.f32 %v3096, 1.442695
    %v3104 = vpow.pop %v3103
    %v3105 = vsub.f32 %v2935, %v3077
    %v3106 = vsub.f32 %v2940, %v3078
    %v3107 = vsub.f32 %v2945, %v3079
    %v3108 = vsub.f32 %v2950, %v3080
    %v3109 = vmul.f32 %v3105, 1.442695
    %v3110 = vpow.pop %v3109
    %v3111 = vmul.f32 %v3106, 1.442695
    %v3112 = vpow.pop %v3111
    %v3113 = vmul.f32 %v3107, 1.442695
    %v3114 = vpow.pop %v3113
    %v3115 = vmul.f32 %v3108, 1.442695
    %v3116 = vpow.pop %v3115
    %v3117 = vsub.f32 %v2955, %v3077
    %v3118 = vsub.f32 %v2960, %v3078
    %v3119 = vsub.f32 %v2965, %v3079
    %v3120 = vsub.f32 %v2970, %v3080
    %v3121 = vmul.f32 %v3117, 1.442695
    %v3122 = vpow.pop %v3121
    %v3123 = vmul.f32 %v3118, 1.442695
    %v3124 = vpow.pop %v3123
    %v3125 = vmul.f32 %v3119, 1.442695
    %v3126 = vpow.pop %v3125
    %v3127 = vmul.f32 %v3120, 1.442695
    %v3128 = vpow.pop %v3127
    %v3129 = vsub.f32 %v2975, %v3077
    %v3130 = vsub.f32 %v2980, %v3078
    %v3131 = vsub.f32 %v2985, %v3079
    %v3132 = vsub.f32 %v2990, %v3080
    %v3133 = vmul.f32 %v3129, 1.442695
    %v3134 = vpow.pop %v3133
    %v3135 = vmul.f32 %v3130, 1.442695
    %v3136 = vpow.pop %v3135
    %v3137 = vmul.f32 %v3131, 1.442695
    %v3138 = vpow.pop %v3137
    %v3139 = vmul.f32 %v3132, 1.442695
    %v3140 = vpow.pop %v3139
    %v3141 = vsub.f32 %v2995, %v3077
    %v3142 = vsub.f32 %v3000, %v3078
    %v3143 = vsub.f32 %v3005, %v3079
    %v3144 = vsub.f32 %v3010, %v3080
    %v3145 = vmul.f32 %v3141, 1.442695
    %v3146 = vpow.pop %v3145
    %v3147 = vmul.f32 %v3142, 1.442695
    %v3148 = vpow.pop %v3147
    %v3149 = vmul.f32 %v3143, 1.442695
    %v3150 = vpow.pop %v3149
    %v3151 = vmul.f32 %v3144, 1.442695
    %v3152 = vpow.pop %v3151
    %v3153 = vsub.f32 %v3015, %v3077
    %v3154 = vsub.f32 %v3020, %v3078
    %v3155 = vsub.f32 %v3025, %v3079
    %v3156 = vsub.f32 %v3030, %v3080
    %v3157 = vmul.f32 %v3153, 1.442695
    %v3158 = vpow.pop %v3157
    %v3159 = vmul.f32 %v3154, 1.442695
    %v3160 = vpow.pop %v3159
    %v3161 = vmul.f32 %v3155, 1.442695
    %v3162 = vpow.pop %v3161
    %v3163 = vmul.f32 %v3156, 1.442695
    %v3164 = vpow.pop %v3163
    %v3165 = vsub.f32 %v3035, %v3077
    %v3166 = vsub.f32 %v3040, %v3078
    %v3167 = vsub.f32 %v3045, %v3079
    %v3168 = vsub.f32 %v3050, %v3080
    %v3169 = vmul.f32 %v3165, 1.442695
    %v3170 = vpow.pop %v3169
    %v3171 = vmul.f32 %v3166, 1.442695
    %v3172 = vpow.pop %v3171
    %v3173 = vmul.f32 %v3167, 1.442695
    %v3174 = vpow.pop %v3173
    %v3175 = vmul.f32 %v3168, 1.442695
    %v3176 = vpow.pop %v3175
    %v3177 = vadd.f32 %v3086, %v3098
    %v3178 = vadd.f32 %v3088, %v3100
    %v3179 = vadd.f32 %v3090, %v3102
    %v3180 = vadd.f32 %v3092, %v3104
    %v3181 = vadd.f32 %v3110, %v3122
    %v3182 = vadd.f32 %v3112, %v3124
    %v3183 = vadd.f32 %v3114, %v3126
    %v3184 = vadd.f32 %v3116, %v3128
    %v3185 = vadd.f32 %v3134, %v3146
    %v3186 = vadd.f32 %v3136, %v3148
    %v3187 = vadd.f32 %v3138, %v3150
    %v3188 = vadd.f32 %v3140, %v3152
    %v3189 = vadd.f32 %v3158, %v3170
    %v3190 = vadd.f32 %v3160, %v3172
    %v3191 = vadd.f32 %v3162, %v3174
    %v3192 = vadd.f32 %v3164, %v3176
    %v3193 = vadd.f32 %v3177, %v3181
    %v3194 = vadd.f32 %v3178, %v3182
    %v3195 = vadd.f32 %v3179, %v3183
    %v3196 = vadd.f32 %v3180, %v3184
    %v3197 = vadd.f32 %v3185, %v3189
    %v3198 = vadd.f32 %v3186, %v3190
    %v3199 = vadd.f32 %v3187, %v3191
    %v3200 = vadd.f32 %v3188, %v3192
    %v3201 = vadd.f32 %v3193, %v3197
    %v3202 = vadd.f32 %v3194, %v3198
    %v3203 = vadd.f32 %v3195, %v3199
    %v3204 = vadd.f32 %v3196, %v3200
    %v3205 = vrcp.pop %v3201
    %v3206 = vrcp.pop %v3202
    %v3207 = vrcp.pop %v3203
    %v3208 = vrcp.pop %v3204
    %v3209 = vand.u32 %v456, 1
    %vm3210 = vcmp.eq.s32.totalorder %v3209, %v695
    %v3211 = vsel %vm3210, 1, 0
    %v3212 = vcvt.s32.f32 %v3211
    %v3213 = vpack.c.bf16 %v3212, %v3212
    %v3214 = vmul.f32 %v3086, %v3205
    %v3215 = vmul.f32 %v3088, %v3206
    %v3216 = vmul.f32 %v3090, %v3207
    %v3217 = vmul.f32 %v3092, %v3208
    %v3218 = vpack.c.bf16 %v3215, %v3214
    %v3219 = vpack.c.bf16 %v3217, %v3216
    %v3221 = vsel %vm2728, %v3218, 0
    %v3224 = vsel %vm2728, %v3219, 0
    %vm3226 = vcmask 1040384
    %v3228 = vsel %vm3226, %v3213, 0
    %3230 = vmatprep.subr.bf16.mxu0 0
    %3231 = vmatpush1.bf16.msra.mxu0 %v3228
    %3232 = vmatprep.subr.bf16.mxu0 0
    %3233 = vmatpush1.bf16.msra.mxu0 0
    %3234 = vmatprep.subr.bf16.mxu0 0
    %3235 = vmatpush1.bf16.msra.mxu0 0
    %3236 = vmatprep.subr.bf16.mxu0 0
    %3237 = vmatpush1.bf16.msra.mxu0 0
    %3238 = vmatprep.subr.bf16.mxu0 0
    %3239 = vmatpush1.bf16.msra.mxu0 0
    %3240 = vmatprep.subr.bf16.mxu0 0
    %3241 = vmatpush1.bf16.msra.mxu0 0
    %3242 = vmatprep.subr.bf16.mxu0 0
    %3243 = vmatpush1.bf16.msra.mxu0 0
    %3244 = vmatprep.subr.bf16.mxu0 0
    %3245 = vmatpush1.bf16.msra.mxu0 0
    %3246 = vmatprep.subr.bf16.mxu0 0
    %3247 = vmatpush1.bf16.msra.mxu0 0
    %3248 = vmatprep.subr.bf16.mxu0 0
    %3249 = vmatpush1.bf16.msra.mxu0 0
    %3250 = vmatprep.subr.bf16.mxu0 0
    %3251 = vmatpush1.bf16.msra.mxu0 0
    %3252 = vmatprep.subr.bf16.mxu0 0
    %3253 = vmatpush1.bf16.msra.mxu0 0
    %3254 = vmatprep.subr.bf16.mxu0 0
    %3255 = vmatpush1.bf16.msra.mxu0 0
    %3256 = vmatprep.subr.bf16.mxu0 0
    %3257 = vmatpush1.bf16.msra.mxu0 0
    %3258 = vmatprep.subr.bf16.mxu0 0
    %3259 = vmatpush1.bf16.msra.mxu0 0
    %3260 = vmatprep.subr.bf16.mxu0 0
    %3261 = vmatpush1.bf16.msra.mxu0 0
    %3262 = vmatprep.mubr.bf16.mxu0 0
    %3263 = vmatmul.mubr.bf16.gmra.mrb[0].mxu0 %v3221
    %v3264 = vpop.f32.mrb[0].mxu0
    %v3265 = vadd.f32 0.0, %v3264
    %v3266 = vpop.f32.mrb[0].mxu0
    %v3267 = vpop.f32.mrb[0].mxu0
    %v3268 = vadd.f32 0.0, %v3267
    %v3269 = vpop.f32.mrb[0].mxu0
    %3270 = vmatprep.mubr.bf16.mxu0 0
    %3271 = vmatmul.mubr.bf16.gmra.mrb[0].mxu0 %v3224
    %v3272 = vpop.f32.mrb[0].mxu0
    %v3273 = vadd.f32 0.0, %v3272
    %v3274 = vpop.f32.mrb[0].mxu0
    %v3275 = vpop.f32.mrb[0].mxu0
    %v3276 = vadd.f32 0.0, %v3275
    %v3277 = vpop.f32.mrb[0].mxu0
    %3278 = vdwg.mxu0
    %3283 = vrot.lane.b32.xlu0 %v3265, 16
    %v3284 = vpop.permute.xlu0 %3283
    %3285 = vrot.lane.b32.xlu0 %v3268, 16
    %v3286 = vpop.permute.xlu0 %3285
    %3287 = vrot.lane.b32.xlu0 %v3273, 16
    %v3288 = vpop.permute.xlu0 %3287
    %3289 = vrot.lane.b32.xlu0 %v3276, 16
    %v3290 = vpop.permute.xlu0 %3289
    %v3295 = vmul.f32 %v2190, %v3284
    %v3296 = vmul.f32 %v2191, %v3286
    %v3297 = vmul.f32 %v2192, %v3288
    %v3298 = vmul.f32 %v2193, %v3290
    %v3299 = vmul.f32 %v3098, %v3205
    %v3300 = vmul.f32 %v3100, %v3206
    %v3301 = vmul.f32 %v3102, %v3207
    %v3302 = vmul.f32 %v3104, %v3208
    %v3303 = vpack.c.bf16 %v3300, %v3299
    %v3304 = vpack.c.bf16 %v3302, %v3301
    %v3306 = vsel %vm2728, %v3303, 0
    %v3309 = vsel %vm2728, %v3304, 0
    %3311 = vmatprep.subr.bf16.mxu0 0
    %3312 = vmatpush1.bf16.msra.mxu0 %v3228
    %3313 = vmatprep.subr.bf16.mxu0 0
    %3314 = vmatpush1.bf16.msra.mxu0 0
    %3315 = vmatprep.subr.bf16.mxu0 0
    %3316 = vmatpush1.bf16.msra.mxu0 0
    %3317 = vmatprep.subr.bf16.mxu0 0
    %3318 = vmatpush1.bf16.msra.mxu0 0
    %3319 = vmatprep.subr.bf16.mxu0 0
    %3320 = vmatpush1.bf16.msra.mxu0 0
    %3321 = vmatprep.subr.bf16.mxu0 0
    %3322 = vmatpush1.bf16.msra.mxu0 0
    %3323 = vmatprep.subr.bf16.mxu0 0
    %3324 = vmatpush1.bf16.msra.mxu0 0
    %3325 = vmatprep.subr.bf16.mxu0 0
    %3326 = vmatpush1.bf16.msra.mxu0 0
    %3327 = vmatprep.subr.bf16.mxu0 0
    %3328 = vmatpush1.bf16.msra.mxu0 0
    %3329 = vmatprep.subr.bf16.mxu0 0
    %3330 = vmatpush1.bf16.msra.mxu0 0
    %3331 = vmatprep.subr.bf16.mxu0 0
    %3332 = vmatpush1.bf16.msra.mxu0 0
    %3333 = vmatprep.subr.bf16.mxu0 0
    %3334 = vmatpush1.bf16.msra.mxu0 0
    %3335 = vmatprep.subr.bf16.mxu0 0
    %3336 = vmatpush1.bf16.msra.mxu0 0
    %3337 = vmatprep.subr.bf16.mxu0 0
    %3338 = vmatpush1.bf16.msra.mxu0 0
    %3339 = vmatprep.subr.bf16.mxu0 0
    %3340 = vmatpush1.bf16.msra.mxu0 0
    %3341 = vmatprep.subr.bf16.mxu0 0
    %3342 = vmatpush1.bf16.msra.mxu0 0
    %3343 = vmatprep.mubr.bf16.mxu0 0
    %3344 = vmatmul.mubr.bf16.gmra.mrb[0].mxu0 %v3306
    %v3345 = vpop.f32.mrb[0].mxu0
    %v3346 = vadd.f32 0.0, %v3345
    %v3347 = vpop.f32.mrb[0].mxu0
    %v3348 = vpop.f32.mrb[0].mxu0
    %v3349 = vadd.f32 0.0, %v3348
    %v3350 = vpop.f32.mrb[0].mxu0
    %3351 = vmatprep.mubr.bf16.mxu0 0
    %3352 = vmatmul.mubr.bf16.gmra.mrb[0].mxu0 %v3309
    %v3353 = vpop.f32.mrb[0].mxu0
    %v3354 = vadd.f32 0.0, %v3353
    %v3355 = vpop.f32.mrb[0].mxu0
    %v3356 = vpop.f32.mrb[0].mxu0
    %v3357 = vadd.f32 0.0, %v3356
    %v3358 = vpop.f32.mrb[0].mxu0
    %3359 = vdwg.mxu0
    %3364 = vrot.lane.b32.xlu0 %v3346, 16
    %v3365 = vpop.permute.xlu0 %3364
    %3366 = vrot.lane.b32.xlu0 %v3349, 16
    %v3367 = vpop.permute.xlu0 %3366
    %3368 = vrot.lane.b32.xlu0 %v3354, 16
    %v3369 = vpop.permute.xlu0 %3368
    %3370 = vrot.lane.b32.xlu0 %v3357, 16
    %v3371 = vpop.permute.xlu0 %3370
    %v3376 = vmul.f32 %v2194, %v3365
    %v3377 = vmul.f32 %v2195, %v3367
    %v3378 = vmul.f32 %v2196, %v3369
    %v3379 = vmul.f32 %v2197, %v3371
    %v3380 = vmul.f32 %v3110, %v3205
    %v3381 = vmul.f32 %v3112, %v3206
    %v3382 = vmul.f32 %v3114, %v3207
    %v3383 = vmul.f32 %v3116, %v3208
    %v3384 = vpack.c.bf16 %v3381, %v3380
    %v3385 = vpack.c.bf16 %v3383, %v3382
    %v3387 = vsel %vm2728, %v3384, 0
    %v3390 = vsel %vm2728, %v3385, 0
    %3392 = vmatprep.subr.bf16.mxu0 0
    %3393 = vmatpush1.bf16.msra.mxu0 %v3228
    %3394 = vmatprep.subr.bf16.mxu0 0
    %3395 = vmatpush1.bf16.msra.mxu0 0
    %3396 = vmatprep.subr.bf16.mxu0 0
    %3397 = vmatpush1.bf16.msra.mxu0 0
    %3398 = vmatprep.subr.bf16.mxu0 0
    %3399 = vmatpush1.bf16.msra.mxu0 0
    %3400 = vmatprep.subr.bf16.mxu0 0
    %3401 = vmatpush1.bf16.msra.mxu0 0
    %3402 = vmatprep.subr.bf16.mxu0 0
    %3403 = vmatpush1.bf16.msra.mxu0 0
    %3404 = vmatprep.subr.bf16.mxu0 0
    %3405 = vmatpush1.bf16.msra.mxu0 0
    %3406 = vmatprep.subr.bf16.mxu0 0
    %3407 = vmatpush1.bf16.msra.mxu0 0
    %3408 = vmatprep.subr.bf16.mxu0 0
    %3409 = vmatpush1.bf16.msra.mxu0 0
    %3410 = vmatprep.subr.bf16.mxu0 0
    %3411 = vmatpush1.bf16.msra.mxu0 0
    %3412 = vmatprep.subr.bf16.mxu0 0
    %3413 = vmatpush1.bf16.msra.mxu0 0
    %3414 = vmatprep.subr.bf16.mxu0 0
    %3415 = vmatpush1.bf16.msra.mxu0 0
    %3416 = vmatprep.subr.bf16.mxu0 0
    %3417 = vmatpush1.bf16.msra.mxu0 0
    %3418 = vmatprep.subr.bf16.mxu0 0
    %3419 = vmatpush1.bf16.msra.mxu0 0
    %3420 = vmatprep.subr.bf16.mxu0 0
    %3421 = vmatpush1.bf16.msra.mxu0 0
    %3422 = vmatprep.subr.bf16.mxu0 0
    %3423 = vmatpush1.bf16.msra.mxu0 0
    %3424 = vmatprep.mubr.bf16.mxu0 0
    %3425 = vmatmul.mubr.bf16.gmra.mrb[0].mxu0 %v3387
    %v3426 = vpop.f32.mrb[0].mxu0
    %v3427 = vadd.f32 0.0, %v3426
    %v3428 = vpop.f32.mrb[0].mxu0
    %v3429 = vpop.f32.mrb[0].mxu0
    %v3430 = vadd.f32 0.0, %v3429
    %v3431 = vpop.f32.mrb[0].mxu0
    %3432 = vmatprep.mubr.bf16.mxu0 0
    %3433 = vmatmul.mubr.bf16.gmra.mrb[0].mxu0 %v3390
    %v3434 = vpop.f32.mrb[0].mxu0
    %v3435 = vadd.f32 0.0, %v3434
    %v3436 = vpop.f32.mrb[0].mxu0
    %v3437 = vpop.f32.mrb[0].mxu0
    %v3438 = vadd.f32 0.0, %v3437
    %v3439 = vpop.f32.mrb[0].mxu0
    %3440 = vdwg.mxu0
    %3445 = vrot.lane.b32.xlu0 %v3427, 16
    %v3446 = vpop.permute.xlu0 %3445
    %3447 = vrot.lane.b32.xlu0 %v3430, 16
    %v3448 = vpop.permute.xlu0 %3447
    %3449 = vrot.lane.b32.xlu0 %v3435, 16
    %v3450 = vpop.permute.xlu0 %3449
    %3451 = vrot.lane.b32.xlu0 %v3438, 16
    %v3452 = vpop.permute.xlu0 %3451
    %v3457 = vmul.f32 %v2198, %v3446
    %v3458 = vmul.f32 %v2199, %v3448
    %v3459 = vmul.f32 %v2200, %v3450
    %v3460 = vmul.f32 %v2201, %v3452
    %v3461 = vmul.f32 %v3122, %v3205
    %v3462 = vmul.f32 %v3124, %v3206
    %v3463 = vmul.f32 %v3126, %v3207
    %v3464 = vmul.f32 %v3128, %v3208
    %v3465 = vpack.c.bf16 %v3462, %v3461
    %v3466 = vpack.c.bf16 %v3464, %v3463
    %v3468 = vsel %vm2728, %v3465, 0
    %v3471 = vsel %vm2728, %v3466, 0
    %3473 = vmatprep.subr.bf16.mxu0 0
    %3474 = vmatpush1.bf16.msra.mxu0 %v3228
    %3475 = vmatprep.subr.bf16.mxu0 0
    %3476 = vmatpush1.bf16.msra.mxu0 0
    %3477 = vmatprep.subr.bf16.mxu0 0
    %3478 = vmatpush1.bf16.msra.mxu0 0
    %3479 = vmatprep.subr.bf16.mxu0 0
    %3480 = vmatpush1.bf16.msra.mxu0 0
    %3481 = vmatprep.subr.bf16.mxu0 0
    %3482 = vmatpush1.bf16.msra.mxu0 0
    %3483 = vmatprep.subr.bf16.mxu0 0
    %3484 = vmatpush1.bf16.msra.mxu0 0
    %3485 = vmatprep.subr.bf16.mxu0 0
    %3486 = vmatpush1.bf16.msra.mxu0 0
    %3487 = vmatprep.subr.bf16.mxu0 0
    %3488 = vmatpush1.bf16.msra.mxu0 0
    %3489 = vmatprep.subr.bf16.mxu0 0
    %3490 = vmatpush1.bf16.msra.mxu0 0
    %3491 = vmatprep.subr.bf16.mxu0 0
    %3492 = vmatpush1.bf16.msra.mxu0 0
    %3493 = vmatprep.subr.bf16.mxu0 0
    %3494 = vmatpush1.bf16.msra.mxu0 0
    %3495 = vmatprep.subr.bf16.mxu0 0
    %3496 = vmatpush1.bf16.msra.mxu0 0
    %3497 = vmatprep.subr.bf16.mxu0 0
    %3498 = vmatpush1.bf16.msra.mxu0 0
    %3499 = vmatprep.subr.bf16.mxu0 0
    %3500 = vmatpush1.bf16.msra.mxu0 0
    %3501 = vmatprep.subr.bf16.mxu0 0
    %3502 = vmatpush1.bf16.msra.mxu0 0
    %3503 = vmatprep.subr.bf16.mxu0 0
    %3504 = vmatpush1.bf16.msra.mxu0 0
    %3505 = vmatprep.mubr.bf16.mxu0 0
    %3506 = vmatmul.mubr.bf16.gmra.mrb[0].mxu0 %v3468
    %v3507 = vpop.f32.mrb[0].mxu0
    %v3508 = vadd.f32 0.0, %v3507
    %v3509 = vpop.f32.mrb[0].mxu0
    %v3510 = vpop.f32.mrb[0].mxu0
    %v3511 = vadd.f32 0.0, %v3510
    %v3512 = vpop.f32.mrb[0].mxu0
    %3513 = vmatprep.mubr.bf16.mxu0 0
    %3514 = vmatmul.mubr.bf16.gmra.mrb[0].mxu0 %v3471
    %v3515 = vpop.f32.mrb[0].mxu0
    %v3516 = vadd.f32 0.0, %v3515
    %v3517 = vpop.f32.mrb[0].mxu0
    %v3518 = vpop.f32.mrb[0].mxu0
    %v3519 = vadd.f32 0.0, %v3518
    %v3520 = vpop.f32.mrb[0].mxu0
    %3521 = vdwg.mxu0
    %3526 = vrot.lane.b32.xlu0 %v3508, 16
    %v3527 = vpop.permute.xlu0 %3526
    %3528 = vrot.lane.b32.xlu0 %v3511, 16
    %v3529 = vpop.permute.xlu0 %3528
    %3530 = vrot.lane.b32.xlu0 %v3516, 16
    %v3531 = vpop.permute.xlu0 %3530
    %3532 = vrot.lane.b32.xlu0 %v3519, 16
    %v3533 = vpop.permute.xlu0 %3532
    %v3538 = vmul.f32 %v2202, %v3527
    %v3539 = vmul.f32 %v2203, %v3529
    %v3540 = vmul.f32 %v2204, %v3531
    %v3541 = vmul.f32 %v2205, %v3533
    %v3542 = vmul.f32 %v3134, %v3205
    %v3543 = vmul.f32 %v3136, %v3206
    %v3544 = vmul.f32 %v3138, %v3207
    %v3545 = vmul.f32 %v3140, %v3208
    %v3546 = vpack.c.bf16 %v3543, %v3542
    %v3547 = vpack.c.bf16 %v3545, %v3544
    %v3549 = vsel %vm2728, %v3546, 0
    %v3552 = vsel %vm2728, %v3547, 0
    %3554 = vmatprep.subr.bf16.mxu0 0
    %3555 = vmatpush1.bf16.msra.mxu0 %v3228
    %3556 = vmatprep.subr.bf16.mxu0 0
    %3557 = vmatpush1.bf16.msra.mxu0 0
    %3558 = vmatprep.subr.bf16.mxu0 0
    %3559 = vmatpush1.bf16.msra.mxu0 0
    %3560 = vmatprep.subr.bf16.mxu0 0
    %3561 = vmatpush1.bf16.msra.mxu0 0
    %3562 = vmatprep.subr.bf16.mxu0 0
    %3563 = vmatpush1.bf16.msra.mxu0 0
    %3564 = vmatprep.subr.bf16.mxu0 0
    %3565 = vmatpush1.bf16.msra.mxu0 0
    %3566 = vmatprep.subr.bf16.mxu0 0
    %3567 = vmatpush1.bf16.msra.mxu0 0
    %3568 = vmatprep.subr.bf16.mxu0 0
    %3569 = vmatpush1.bf16.msra.mxu0 0
    %3570 = vmatprep.subr.bf16.mxu0 0
    %3571 = vmatpush1.bf16.msra.mxu0 0
    %3572 = vmatprep.subr.bf16.mxu0 0
    %3573 = vmatpush1.bf16.msra.mxu0 0
    %3574 = vmatprep.subr.bf16.mxu0 0
    %3575 = vmatpush1.bf16.msra.mxu0 0
    %3576 = vmatprep.subr.bf16.mxu0 0
    %3577 = vmatpush1.bf16.msra.mxu0 0
    %3578 = vmatprep.subr.bf16.mxu0 0
    %3579 = vmatpush1.bf16.msra.mxu0 0
    %3580 = vmatprep.subr.bf16.mxu0 0
    %3581 = vmatpush1.bf16.msra.mxu0 0
    %3582 = vmatprep.subr.bf16.mxu0 0
    %3583 = vmatpush1.bf16.msra.mxu0 0
    %3584 = vmatprep.subr.bf16.mxu0 0
    %3585 = vmatpush1.bf16.msra.mxu0 0
    %3586 = vmatprep.mubr.bf16.mxu0 0
    %3587 = vmatmul.mubr.bf16.gmra.mrb[0].mxu0 %v3549
    %v3588 = vpop.f32.mrb[0].mxu0
    %v3589 = vadd.f32 0.0, %v3588
    %v3590 = vpop.f32.mrb[0].mxu0
    %v3591 = vpop.f32.mrb[0].mxu0
    %v3592 = vadd.f32 0.0, %v3591
    %v3593 = vpop.f32.mrb[0].mxu0
    %3594 = vmatprep.mubr.bf16.mxu0 0
    %3595 = vmatmul.mubr.bf16.gmra.mrb[0].mxu0 %v3552
    %v3596 = vpop.f32.mrb[0].mxu0
    %v3597 = vadd.f32 0.0, %v3596
    %v3598 = vpop.f32.mrb[0].mxu0
    %v3599 = vpop.f32.mrb[0].mxu0
    %v3600 = vadd.f32 0.0, %v3599
    %v3601 = vpop.f32.mrb[0].mxu0
    %3602 = vdwg.mxu0
    %3607 = vrot.lane.b32.xlu0 %v3589, 16
    %v3608 = vpop.permute.xlu0 %3607
    %3609 = vrot.lane.b32.xlu0 %v3592, 16
    %v3610 = vpop.permute.xlu0 %3609
    %3611 = vrot.lane.b32.xlu0 %v3597, 16
    %v3612 = vpop.permute.xlu0 %3611
    %3613 = vrot.lane.b32.xlu0 %v3600, 16
    %v3614 = vpop.permute.xlu0 %3613
    %v3619 = vmul.f32 %v2206, %v3608
    %v3620 = vmul.f32 %v2207, %v3610
    %v3621 = vmul.f32 %v2208, %v3612
    %v3622 = vmul.f32 %v2209, %v3614
    %v3623 = vmul.f32 %v3146, %v3205
    %v3624 = vmul.f32 %v3148, %v3206
    %v3625 = vmul.f32 %v3150, %v3207
    %v3626 = vmul.f32 %v3152, %v3208
    %v3627 = vpack.c.bf16 %v3624, %v3623
    %v3628 = vpack.c.bf16 %v3626, %v3625
    %v3630 = vsel %vm2728, %v3627, 0
    %v3633 = vsel %vm2728, %v3628, 0
    %3635 = vmatprep.subr.bf16.mxu0 0
    %3636 = vmatpush1.bf16.msra.mxu0 %v3228
    %3637 = vmatprep.subr.bf16.mxu0 0
    %3638 = vmatpush1.bf16.msra.mxu0 0
    %3639 = vmatprep.subr.bf16.mxu0 0
    %3640 = vmatpush1.bf16.msra.mxu0 0
    %3641 = vmatprep.subr.bf16.mxu0 0
    %3642 = vmatpush1.bf16.msra.mxu0 0
    %3643 = vmatprep.subr.bf16.mxu0 0
    %3644 = vmatpush1.bf16.msra.mxu0 0
    %3645 = vmatprep.subr.bf16.mxu0 0
    %3646 = vmatpush1.bf16.msra.mxu0 0
    %3647 = vmatprep.subr.bf16.mxu0 0
    %3648 = vmatpush1.bf16.msra.mxu0 0
    %3649 = vmatprep.subr.bf16.mxu0 0
    %3650 = vmatpush1.bf16.msra.mxu0 0
    %3651 = vmatprep.subr.bf16.mxu0 0
    %3652 = vmatpush1.bf16.msra.mxu0 0
    %3653 = vmatprep.subr.bf16.mxu0 0
    %3654 = vmatpush1.bf16.msra.mxu0 0
    %3655 = vmatprep.subr.bf16.mxu0 0
    %3656 = vmatpush1.bf16.msra.mxu0 0
    %3657 = vmatprep.subr.bf16.mxu0 0
    %3658 = vmatpush1.bf16.msra.mxu0 0
    %3659 = vmatprep.subr.bf16.mxu0 0
    %3660 = vmatpush1.bf16.msra.mxu0 0
    %3661 = vmatprep.subr.bf16.mxu0 0
    %3662 = vmatpush1.bf16.msra.mxu0 0
    %3663 = vmatprep.subr.bf16.mxu0 0
    %3664 = vmatpush1.bf16.msra.mxu0 0
    %3665 = vmatprep.subr.bf16.mxu0 0
    %3666 = vmatpush1.bf16.msra.mxu0 0
    %3667 = vmatprep.mubr.bf16.mxu0 0
    %3668 = vmatmul.mubr.bf16.gmra.mrb[0].mxu0 %v3630
    %v3669 = vpop.f32.mrb[0].mxu0
    %v3670 = vadd.f32 0.0, %v3669
    %v3671 = vpop.f32.mrb[0].mxu0
    %v3672 = vpop.f32.mrb[0].mxu0
    %v3673 = vadd.f32 0.0, %v3672
    %v3674 = vpop.f32.mrb[0].mxu0
    %3675 = vmatprep.mubr.bf16.mxu0 0
    %3676 = vmatmul.mubr.bf16.gmra.mrb[0].mxu0 %v3633
    %v3677 = vpop.f32.mrb[0].mxu0
    %v3678 = vadd.f32 0.0, %v3677
    %v3679 = vpop.f32.mrb[0].mxu0
    %v3680 = vpop.f32.mrb[0].mxu0
    %v3681 = vadd.f32 0.0, %v3680
    %v3682 = vpop.f32.mrb[0].mxu0
    %3683 = vdwg.mxu0
    %3688 = vrot.lane.b32.xlu0 %v3670, 16
    %v3689 = vpop.permute.xlu0 %3688
    %3690 = vrot.lane.b32.xlu0 %v3673, 16
    %v3691 = vpop.permute.xlu0 %3690
    %3692 = vrot.lane.b32.xlu0 %v3678, 16
    %v3693 = vpop.permute.xlu0 %3692
    %3694 = vrot.lane.b32.xlu0 %v3681, 16
    %v3695 = vpop.permute.xlu0 %3694
    %v3700 = vmul.f32 %v2210, %v3689
    %v3701 = vmul.f32 %v2211, %v3691
    %v3702 = vmul.f32 %v2212, %v3693
    %v3703 = vmul.f32 %v2213, %v3695
    %v3704 = vmul.f32 %v3158, %v3205
    %v3705 = vmul.f32 %v3160, %v3206
    %v3706 = vmul.f32 %v3162, %v3207
    %v3707 = vmul.f32 %v3164, %v3208
    %v3708 = vpack.c.bf16 %v3705, %v3704
    %v3709 = vpack.c.bf16 %v3707, %v3706
    %v3711 = vsel %vm2728, %v3708, 0
    %v3714 = vsel %vm2728, %v3709, 0
    %3716 = vmatprep.subr.bf16.mxu0 0
    %3717 = vmatpush1.bf16.msra.mxu0 %v3228
    %3718 = vmatprep.subr.bf16.mxu0 0
    %3719 = vmatpush1.bf16.msra.mxu0 0
    %3720 = vmatprep.subr.bf16.mxu0 0
    %3721 = vmatpush1.bf16.msra.mxu0 0
    %3722 = vmatprep.subr.bf16.mxu0 0
    %3723 = vmatpush1.bf16.msra.mxu0 0
    %3724 = vmatprep.subr.bf16.mxu0 0
    %3725 = vmatpush1.bf16.msra.mxu0 0
    %3726 = vmatprep.subr.bf16.mxu0 0
    %3727 = vmatpush1.bf16.msra.mxu0 0
    %3728 = vmatprep.subr.bf16.mxu0 0
    %3729 = vmatpush1.bf16.msra.mxu0 0
    %3730 = vmatprep.subr.bf16.mxu0 0
    %3731 = vmatpush1.bf16.msra.mxu0 0
    %3732 = vmatprep.subr.bf16.mxu0 0
    %3733 = vmatpush1.bf16.msra.mxu0 0
    %3734 = vmatprep.subr.bf16.mxu0 0
    %3735 = vmatpush1.bf16.msra.mxu0 0
    %3736 = vmatprep.subr.bf16.mxu0 0
    %3737 = vmatpush1.bf16.msra.mxu0 0
    %3738 = vmatprep.subr.bf16.mxu0 0
    %3739 = vmatpush1.bf16.msra.mxu0 0
    %3740 = vmatprep.subr.bf16.mxu0 0
    %3741 = vmatpush1.bf16.msra.mxu0 0
    %3742 = vmatprep.subr.bf16.mxu0 0
    %3743 = vmatpush1.bf16.msra.mxu0 0
    %3744 = vmatprep.subr.bf16.mxu0 0
    %3745 = vmatpush1.bf16.msra.mxu0 0
    %3746 = vmatprep.subr.bf16.mxu0 0
    %3747 = vmatpush1.bf16.msra.mxu0 0
    %3748 = vmatprep.mubr.bf16.mxu0 0
    %3749 = vmatmul.mubr.bf16.gmra.mrb[0].mxu0 %v3711
    %v3750 = vpop.f32.mrb[0].mxu0
    %v3751 = vadd.f32 0.0, %v3750
    %v3752 = vpop.f32.mrb[0].mxu0
    %v3753 = vpop.f32.mrb[0].mxu0
    %v3754 = vadd.f32 0.0, %v3753
    %v3755 = vpop.f32.mrb[0].mxu0
    %3756 = vmatprep.mubr.bf16.mxu0 0
    %3757 = vmatmul.mubr.bf16.gmra.mrb[0].mxu0 %v3714
    %v3758 = vpop.f32.mrb[0].mxu0
    %v3759 = vadd.f32 0.0, %v3758
    %v3760 = vpop.f32.mrb[0].mxu0
    %v3761 = vpop.f32.mrb[0].mxu0
    %v3762 = vadd.f32 0.0, %v3761
    %v3763 = vpop.f32.mrb[0].mxu0
    %3764 = vdwg.mxu0
    %3769 = vrot.lane.b32.xlu0 %v3751, 16
    %v3770 = vpop.permute.xlu0 %3769
    %3771 = vrot.lane.b32.xlu0 %v3754, 16
    %v3772 = vpop.permute.xlu0 %3771
    %3773 = vrot.lane.b32.xlu0 %v3759, 16
    %v3774 = vpop.permute.xlu0 %3773
    %3775 = vrot.lane.b32.xlu0 %v3762, 16
    %v3776 = vpop.permute.xlu0 %3775
    %v3781 = vmul.f32 %v2214, %v3770
    %v3782 = vmul.f32 %v2215, %v3772
    %v3783 = vmul.f32 %v2216, %v3774
    %v3784 = vmul.f32 %v2217, %v3776
    %v3785 = vmul.f32 %v3170, %v3205
    %v3786 = vmul.f32 %v3172, %v3206
    %v3787 = vmul.f32 %v3174, %v3207
    %v3788 = vmul.f32 %v3176, %v3208
    %v3789 = vpack.c.bf16 %v3786, %v3785
    %v3790 = vpack.c.bf16 %v3788, %v3787
    %v3792 = vsel %vm2728, %v3789, 0
    %v3795 = vsel %vm2728, %v3790, 0
    %3797 = vmatprep.subr.bf16.mxu0 0
    %3798 = vmatpush1.bf16.msra.mxu0 %v3228
    %3799 = vmatprep.subr.bf16.mxu0 0
    %3800 = vmatpush1.bf16.msra.mxu0 0
    %3801 = vmatprep.subr.bf16.mxu0 0
    %3802 = vmatpush1.bf16.msra.mxu0 0
    %3803 = vmatprep.subr.bf16.mxu0 0
    %3804 = vmatpush1.bf16.msra.mxu0 0
    %3805 = vmatprep.subr.bf16.mxu0 0
    %3806 = vmatpush1.bf16.msra.mxu0 0
    %3807 = vmatprep.subr.bf16.mxu0 0
    %3808 = vmatpush1.bf16.msra.mxu0 0
    %3809 = vmatprep.subr.bf16.mxu0 0
    %3810 = vmatpush1.bf16.msra.mxu0 0
    %3811 = vmatprep.subr.bf16.mxu0 0
    %3812 = vmatpush1.bf16.msra.mxu0 0
    %3813 = vmatprep.subr.bf16.mxu0 0
    %3814 = vmatpush1.bf16.msra.mxu0 0
    %3815 = vmatprep.subr.bf16.mxu0 0
    %3816 = vmatpush1.bf16.msra.mxu0 0
    %3817 = vmatprep.subr.bf16.mxu0 0
    %3818 = vmatpush1.bf16.msra.mxu0 0
    %3819 = vmatprep.subr.bf16.mxu0 0
    %3820 = vmatpush1.bf16.msra.mxu0 0
    %3821 = vmatprep.subr.bf16.mxu0 0
    %3822 = vmatpush1.bf16.msra.mxu0 0
    %3823 = vmatprep.subr.bf16.mxu0 0
    %3824 = vmatpush1.bf16.msra.mxu0 0
    %3825 = vmatprep.subr.bf16.mxu0 0
    %3826 = vmatpush1.bf16.msra.mxu0 0
    %3827 = vmatprep.subr.bf16.mxu0 0
    %3828 = vmatpush1.bf16.msra.mxu0 0
    %3829 = vmatprep.mubr.bf16.mxu0 0
    %3830 = vmatmul.mubr.bf16.gmra.mrb[0].mxu0 %v3792
    %v3831 = vpop.f32.mrb[0].mxu0
    %v3832 = vadd.f32 0.0, %v3831
    %v3833 = vpop.f32.mrb[0].mxu0
    %v3834 = vpop.f32.mrb[0].mxu0
    %v3835 = vadd.f32 0.0, %v3834
    %v3836 = vpop.f32.mrb[0].mxu0
    %3837 = vmatprep.mubr.bf16.mxu0 0
    %3838 = vmatmul.mubr.bf16.gmra.mrb[0].mxu0 %v3795
    %v3839 = vpop.f32.mrb[0].mxu0
    %v3840 = vadd.f32 0.0, %v3839
    %v3841 = vpop.f32.mrb[0].mxu0
    %v3842 = vpop.f32.mrb[0].mxu0
    %v3843 = vadd.f32 0.0, %v3842
    %v3844 = vpop.f32.mrb[0].mxu0
    %3845 = vdwg.mxu0
    %3850 = vrot.lane.b32.xlu0 %v3832, 16
    %v3851 = vpop.permute.xlu0 %3850
    %3852 = vrot.lane.b32.xlu0 %v3835, 16
    %v3853 = vpop.permute.xlu0 %3852
    %3854 = vrot.lane.b32.xlu0 %v3840, 16
    %v3855 = vpop.permute.xlu0 %3854
    %3856 = vrot.lane.b32.xlu0 %v3843, 16
    %v3857 = vpop.permute.xlu0 %3856
    %v3862 = vmul.f32 %v2218, %v3851
    %v3863 = vmul.f32 %v2219, %v3853
    %v3864 = vmul.f32 %v2220, %v3855
    %v3865 = vmul.f32 %v2221, %v3857
    %v3866 = vadd.f32 %v3295, %v3376
    %v3867 = vadd.f32 %v3296, %v3377
    %v3868 = vadd.f32 %v3297, %v3378
    %v3869 = vadd.f32 %v3298, %v3379
    %v3870 = vadd.f32 %v3457, %v3538
    %v3871 = vadd.f32 %v3458, %v3539
    %v3872 = vadd.f32 %v3459, %v3540
    %v3873 = vadd.f32 %v3460, %v3541
    %v3874 = vadd.f32 %v3619, %v3700
    %v3875 = vadd.f32 %v3620, %v3701
    %v3876 = vadd.f32 %v3621, %v3702
    %v3877 = vadd.f32 %v3622, %v3703
    %v3878 = vadd.f32 %v3781, %v3862
    %v3879 = vadd.f32 %v3782, %v3863
    %v3880 = vadd.f32 %v3783, %v3864
    %v3881 = vadd.f32 %v3784, %v3865
    %v3882 = vadd.f32 %v3866, %v3870
    %v3883 = vadd.f32 %v3867, %v3871
    %v3884 = vadd.f32 %v3868, %v3872
    %v3885 = vadd.f32 %v3869, %v3873
    %v3886 = vadd.f32 %v3874, %v3878
    %v3887 = vadd.f32 %v3875, %v3879
    %v3888 = vadd.f32 %v3876, %v3880
    %v3889 = vadd.f32 %v3877, %v3881
    %v3890 = vadd.f32 %v3882, %v3886
    %v3891 = vadd.f32 %v3883, %v3887
    %v3892 = vadd.f32 %v3884, %v3888
    %v3893 = vadd.f32 %v3885, %v3889
    %v3894 = vlaneseq
    %v3895 = vshrl.u32 %v3894, 7
    %v3896 = vsub.s32 0, %v3895
    %v3897 = vrot.slane %v42, %v3896
    %3899 = vrot.lane.b32.xlu0 %v3897, 16
    %v3900 = vpop.permute.xlu0 %3899
    %v3902 = vmul.f32 %v3890, %v3900
    %v3903 = vmul.f32 %v3891, %v3900
    %v3904 = vmul.f32 %v3892, %v3900
    %v3905 = vmul.f32 %v3893, %v3900
    %v3906 = vlaneseq
    %v3907 = vshrl.u32 %v3906, 7
    %v3908 = vsub.s32 0, %v3907
    %v3909 = vrot.slane %v43, %v3908
    %3911 = vrot.lane.b32.xlu0 %v3909, 16
    %v3912 = vpop.permute.xlu0 %3911
    %v3914 = vadd.f32 %v3902, %v3912
    %v3915 = vadd.f32 %v3903, %v3912
    %v3916 = vadd.f32 %v3904, %v3912
    %v3917 = vadd.f32 %v3905, %v3912
    %v3918 = vmax.f32 %v3914, 0.0
    %v3919 = vmax.f32 %v3915, 0.0
    %v3920 = vmax.f32 %v3916, 0.0
    %v3921 = vmax.f32 %v3917, 0.0
    %v3922 = vlaneseq
    %v3923 = vshrl.u32 %v3922, 7
    %v3924 = vsub.s32 0, %v3923
    %v3925 = vrot.slane %v44, %v3924
    %3930 = vrot.lane.b32.xlu0 %v3918, 112
    %v3931 = vpop.permute.xlu0 %3930
    %3932 = vrot.lane.b32.xlu0 %v3919, 112
    %v3933 = vpop.permute.xlu0 %3932
    %3934 = vrot.lane.b32.xlu0 %v3920, 112
    %v3935 = vpop.permute.xlu0 %3934
    %3936 = vrot.lane.b32.xlu0 %v3921, 112
    %v3937 = vpop.permute.xlu0 %3936
    %3938 = vrot.lane.b32.xlu0 %v30, 64
    %v3939 = vpop.permute.xlu0 %3938
    %3940 = vrot.lane.b32.xlu0 %v31, 64
    %v3941 = vpop.permute.xlu0 %3940
    %v3944 = vsel %vm57, %v3931, 0
    %v3946 = vsel %vm57, %v3933, 0
    %v3948 = vsel %vm57, %v3935, 0
    %v3950 = vsel %vm57, %v3937, 0
    %3952 = vmatprep.subr.mxu0 0.0
    %3953 = vmatpush1.msra.mxu0 %v3939
    %3954 = vmatprep.subr.mxu0 0.0
    %3955 = vmatpush1.msra.mxu0 %v3941
    %3956 = vmatprep.subr.mxu0 0.0
    %3957 = vmatpush1.msra.mxu0 0.0
    %3958 = vmatprep.subr.mxu0 0.0
    %3959 = vmatpush1.msra.mxu0 0.0
    %3960 = vmatprep.subr.mxu0 0.0
    %3961 = vmatpush1.msra.mxu0 0.0
    %3962 = vmatprep.subr.mxu0 0.0
    %3963 = vmatpush1.msra.mxu0 0.0
    %3964 = vmatprep.subr.mxu0 0.0
    %3965 = vmatpush1.msra.mxu0 0.0
    %3966 = vmatprep.subr.mxu0 0.0
    %3967 = vmatpush1.msra.mxu0 0.0
    %3968 = vmatprep.subr.mxu0 0.0
    %3969 = vmatpush1.msra.mxu0 0.0
    %3970 = vmatprep.subr.mxu0 0.0
    %3971 = vmatpush1.msra.mxu0 0.0
    %3972 = vmatprep.subr.mxu0 0.0
    %3973 = vmatpush1.msra.mxu0 0.0
    %3974 = vmatprep.subr.mxu0 0.0
    %3975 = vmatpush1.msra.mxu0 0.0
    %3976 = vmatprep.subr.mxu0 0.0
    %3977 = vmatpush1.msra.mxu0 0.0
    %3978 = vmatprep.subr.mxu0 0.0
    %3979 = vmatpush1.msra.mxu0 0.0
    %3980 = vmatprep.subr.mxu0 0.0
    %3981 = vmatpush1.msra.mxu0 0.0
    %3982 = vmatprep.subr.mxu0 0.0
    %3983 = vmatpush1.msra.mxu0 0.0
    %3984 = vmatprep.subr.mxu0 0.0
    %3985 = vmatpush1.msra.mxu0 0.0
    %3986 = vmatprep.subr.mxu0 0.0
    %3987 = vmatpush1.msra.mxu0 0.0
    %3988 = vmatprep.subr.mxu0 0.0
    %3989 = vmatpush1.msra.mxu0 0.0
    %3990 = vmatprep.subr.mxu0 0.0
    %3991 = vmatpush1.msra.mxu0 0.0
    %3992 = vmatprep.subr.mxu0 0.0
    %3993 = vmatpush1.msra.mxu0 0.0
    %3994 = vmatprep.subr.mxu0 0.0
    %3995 = vmatpush1.msra.mxu0 0.0
    %3996 = vmatprep.subr.mxu0 0.0
    %3997 = vmatpush1.msra.mxu0 0.0
    %3998 = vmatprep.subr.mxu0 0.0
    %3999 = vmatpush1.msra.mxu0 0.0
    %4000 = vmatprep.subr.mxu0 0.0
    %4001 = vmatpush1.msra.mxu0 0.0
    %4002 = vmatprep.subr.mxu0 0.0
    %4003 = vmatpush1.msra.mxu0 0.0
    %4004 = vmatprep.subr.mxu0 0.0
    %4005 = vmatpush1.msra.mxu0 0.0
    %4006 = vmatprep.subr.mxu0 0.0
    %4007 = vmatpush1.msra.mxu0 0.0
    %4008 = vmatprep.subr.mxu0 0.0
    %4009 = vmatpush1.msra.mxu0 0.0
    %4010 = vmatprep.subr.mxu0 0.0
    %4011 = vmatpush1.msra.mxu0 0.0
    %4012 = vmatprep.subr.mxu0 0.0
    %4013 = vmatpush1.msra.mxu0 0.0
    %4014 = vmatprep.subr.mxu0 0.0
    %4015 = vmatpush1.msra.mxu0 0.0
    %4016 = vmatprep.mubr.f32.mxu0 0.0
    %4017 = vmatmul.mubr.f32.gmra.mrb[0].mxu0 %v3944
    %v4018 = vpop.f32.mrb[0].mxu0
    %v4019 = vadd.f32 %v3925, %v4018
    %v4020 = vpop.f32.mrb[0].mxu0
    %4021 = vmatprep.mubr.f32.mxu0 0.0
    %4022 = vmatmul.mubr.f32.gmra.mrb[0].mxu0 %v3946
    %v4023 = vpop.f32.mrb[0].mxu0
    %v4024 = vadd.f32 %v3925, %v4023
    %v4025 = vpop.f32.mrb[0].mxu0
    %4026 = vmatprep.mubr.f32.mxu0 0.0
    %4027 = vmatmul.mubr.f32.gmra.mrb[0].mxu0 %v3948
    %v4028 = vpop.f32.mrb[0].mxu0
    %v4029 = vadd.f32 %v3925, %v4028
    %v4030 = vpop.f32.mrb[0].mxu0
    %4031 = vmatprep.mubr.f32.mxu0 0.0
    %4032 = vmatmul.mubr.f32.gmra.mrb[0].mxu0 %v3950
    %v4033 = vpop.f32.mrb[0].mxu0
    %v4034 = vadd.f32 %v3925, %v4033
    %v4035 = vpop.f32.mrb[0].mxu0
    %4036 = vdwg.mxu0
    %v4037 = vadd.f32 %v4019, %v24
    %v4038 = vadd.f32 %v4024, %v25
    %v4039 = vadd.f32 %v4029, %v26
    %v4040 = vadd.f32 %v4034, %v27
    %v4041 = vmax.f32 %v4037, 0.0
    %v4042 = vmax.f32 %v4038, 0.0
    %v4043 = vmax.f32 %v4039, 0.0
    %v4044 = vmax.f32 %v4040, 0.0
    %v4046 = vrot.slane %v4041, 1
    %4047 = vrot.lane.b32.xlu0 %v4046, 16
    %v4048 = vpop.permute.xlu0 %4047
    %v4050 = vrot.slane %v4041, 2
    %4051 = vrot.lane.b32.xlu0 %v4050, 32
    %v4052 = vpop.permute.xlu0 %4051
    %v4054 = vrot.slane %v4041, 3
    %4055 = vrot.lane.b32.xlu0 %v4054, 48
    %v4056 = vpop.permute.xlu0 %4055
    %v4058 = vrot.slane %v4041, 4
    %4059 = vrot.lane.b32.xlu0 %v4058, 64
    %v4060 = vpop.permute.xlu0 %4059
    %v4062 = vrot.slane %v4041, 5
    %4063 = vrot.lane.b32.xlu0 %v4062, 80
    %v4064 = vpop.permute.xlu0 %4063
    %v4066 = vrot.slane %v4041, 6
    %4067 = vrot.lane.b32.xlu0 %v4066, 96
    %v4068 = vpop.permute.xlu0 %4067
    %v4070 = vrot.slane %v4041, 7
    %4071 = vrot.lane.b32.xlu0 %v4070, 112
    %v4072 = vpop.permute.xlu0 %4071
    %v4074 = vsel %vm57, %v4041, %v4048
    %v4075 = vsel %vm473, %v4074, %v4052
    %vm4076 = vcmask 392192
    %v4077 = vsel %vm4076, %v4075, %v4056
    %v4078 = vsel %vm1099, %v4077, %v4060
    %vm4079 = vcmask 654336
    %v4080 = vsel %vm4079, %v4078, %v4064
    %vm4081 = vcmask 785408
    %v4082 = vsel %vm4081, %v4080, %v4068
    %vm4083 = vcmask 916480
    %v4084 = vsel %vm4083, %v4082, %v4072
    %v4086 = vrot.slane %v4042, 1
    %4087 = vrot.lane.b32.xlu0 %v4086, 16
    %v4088 = vpop.permute.xlu0 %4087
    %v4090 = vrot.slane %v4042, 2
    %4091 = vrot.lane.b32.xlu0 %v4090, 32
    %v4092 = vpop.permute.xlu0 %4091
    %v4094 = vrot.slane %v4042, 3
    %4095 = vrot.lane.b32.xlu0 %v4094, 48
    %v4096 = vpop.permute.xlu0 %4095
    %v4098 = vrot.slane %v4042, 4
    %4099 = vrot.lane.b32.xlu0 %v4098, 64
    %v4100 = vpop.permute.xlu0 %4099
    %v4102 = vrot.slane %v4042, 5
    %4103 = vrot.lane.b32.xlu0 %v4102, 80
    %v4104 = vpop.permute.xlu0 %4103
    %v4106 = vrot.slane %v4042, 6
    %4107 = vrot.lane.b32.xlu0 %v4106, 96
    %v4108 = vpop.permute.xlu0 %4107
    %v4110 = vrot.slane %v4042, 7
    %4111 = vrot.lane.b32.xlu0 %v4110, 112
    %v4112 = vpop.permute.xlu0 %4111
    %v4114 = vsel %vm57, %v4042, %v4088
    %v4115 = vsel %vm473, %v4114, %v4092
    %v4116 = vsel %vm4076, %v4115, %v4096
    %v4117 = vsel %vm1099, %v4116, %v4100
    %v4118 = vsel %vm4079, %v4117, %v4104
    %v4119 = vsel %vm4081, %v4118, %v4108
    %v4120 = vsel %vm4083, %v4119, %v4112
    %v4122 = vrot.slane %v4043, 1
    %4123 = vrot.lane.b32.xlu0 %v4122, 16
    %v4124 = vpop.permute.xlu0 %4123
    %v4126 = vrot.slane %v4043, 2
    %4127 = vrot.lane.b32.xlu0 %v4126, 32
    %v4128 = vpop.permute.xlu0 %4127
    %v4130 = vrot.slane %v4043, 3
    %4131 = vrot.lane.b32.xlu0 %v4130, 48
    %v4132 = vpop.permute.xlu0 %4131
    %v4134 = vrot.slane %v4043, 4
    %4135 = vrot.lane.b32.xlu0 %v4134, 64
    %v4136 = vpop.permute.xlu0 %4135
    %v4138 = vrot.slane %v4043, 5
    %4139 = vrot.lane.b32.xlu0 %v4138, 80
    %v4140 = vpop.permute.xlu0 %4139
    %v4142 = vrot.slane %v4043, 6
    %4143 = vrot.lane.b32.xlu0 %v4142, 96
    %v4144 = vpop.permute.xlu0 %4143
    %v4146 = vrot.slane %v4043, 7
    %4147 = vrot.lane.b32.xlu0 %v4146, 112
    %v4148 = vpop.permute.xlu0 %4147
    %v4150 = vsel %vm57, %v4043, %v4124
    %v4151 = vsel %vm473, %v4150, %v4128
    %v4152 = vsel %vm4076, %v4151, %v4132
    %v4153 = vsel %vm1099, %v4152, %v4136
    %v4154 = vsel %vm4079, %v4153, %v4140
    %v4155 = vsel %vm4081, %v4154, %v4144
    %v4156 = vsel %vm4083, %v4155, %v4148
    %v4158 = vrot.slane %v4044, 1
    %4159 = vrot.lane.b32.xlu0 %v4158, 16
    %v4160 = vpop.permute.xlu0 %4159
    %v4162 = vrot.slane %v4044, 2
    %4163 = vrot.lane.b32.xlu0 %v4162, 32
    %v4164 = vpop.permute.xlu0 %4163
    %v4166 = vrot.slane %v4044, 3
    %4167 = vrot.lane.b32.xlu0 %v4166, 48
    %v4168 = vpop.permute.xlu0 %4167
    %v4170 = vrot.slane %v4044, 4
    %4171 = vrot.lane.b32.xlu0 %v4170, 64
    %v4172 = vpop.permute.xlu0 %4171
    %v4174 = vrot.slane %v4044, 5
    %4175 = vrot.lane.b32.xlu0 %v4174, 80
    %v4176 = vpop.permute.xlu0 %4175
    %v4178 = vrot.slane %v4044, 6
    %4179 = vrot.lane.b32.xlu0 %v4178, 96
    %v4180 = vpop.permute.xlu0 %4179
    %v4182 = vrot.slane %v4044, 7
    %4183 = vrot.lane.b32.xlu0 %v4182, 112
    %v4184 = vpop.permute.xlu0 %4183
    %v4186 = vsel %vm57, %v4044, %v4160
    %v4187 = vsel %vm473, %v4186, %v4164
    %v4188 = vsel %vm4076, %v4187, %v4168
    %v4189 = vsel %vm1099, %v4188, %v4172
    %v4190 = vsel %vm4079, %v4189, %v4176
    %v4191 = vsel %vm4081, %v4190, %v4180
    %v4192 = vsel %vm4083, %v4191, %v4184
    %v4194 = vrot.slane %v4120, 7
    %v4197 = vrot.slane %v4156, 6
    %v4200 = vrot.slane %v4192, 5
    %v4202 = vsel %vm3226, %v4084, %v4194
    %v4203 = vsel %vm2825, %v4202, %v4197
    %v4204 = vsel %vm318, %v4203, %v4200
    %4205 = vst [vmem:[#allocation5] sm:$0xf] %v4204
    // Predicated region
    $region10: #{tpu_custom_call.1} parent=1 // pred_check
      _
    $region11: #{tpu_custom_call.1} parent=1 // pred_check_branch
      %4207 = sbr.rel (0) target = $region13
    $region12: #{tpu_custom_call.1} parent=1 // pred_region
      %s4209 = ssub.s32 64, 64
      %4210 = vsyncadd [#allocation4], %s4209
      %s4212 = sshll.u32 [#allocation5], 4
      %s4213 = int_to_ptr.vmem [resolvable:$true] %s4212
      %4215 = dma.vmem_to_hbm [thread:$0]  %s4213, 64, %s1, [#allocation4]
    $region13: #{tpu_custom_call.1} parent=1 // pred_fallthru
      _
    // Predicated region
    $region14: #{tpu_custom_call.1} parent=1 // pred_check
      _
    $region15: #{tpu_custom_call.1} parent=1 // pred_check_branch
      %4217 = sbr.rel (0) target = $region17
    $region16: #{tpu_custom_call.1} parent=1 // pred_region
      %4218 = dma.done [#allocation4], 64
    $region17: #{tpu_custom_call.1} parent=1 // pred_fallthru
      _
    %4219 = vsyncpa [#allocation3], 1
    %4220 = vsyncpa [#allocation4], 1

</llo_original>
